<compile_context>
chip_gen: v6e
topology: v6e:2x2x1
jax: 0.10.0
libtpu: 0.0.40
codegen_flags: <defaults>
</compile_context>

<pallas_src>
import functools

import numpy as np
import jax
import jax.numpy as jnp
from jax.experimental import pallas as pl
from jax.experimental.pallas import tpu as pltpu


def _round_up(x, m):
    return (x + m - 1) // m * m


def _default_vmem_limit():
    """Per-generation scoped-VMEM limit: ~3/4 of physical VMEM (48 MiB on v7x,
    96 MiB on v5e/v6e), clamped to [32 MiB, 100 MiB]."""
    try:
        cap = int(pltpu.get_tpu_info().vmem_capacity_bytes)
    except Exception:
        cap = 0
    if cap <= 0:
        cap = 64 * 1024 * 1024
    return int(max(32 * 1024 * 1024, min(cap * 3 // 4, 100 * 1024 * 1024)))


# ----------------------------------------------------------------------------- kernel
def _disc_opt_block_kernel(x_ref, wA_ref, wB_ref, wC_ref, b1_ref, b02_ref,
                           out_ref, hpad_ref, zp_ref,
                           *, Bt, H, W, Cin, Cout, Wpad, use_im2col):
    Ho, Wo = H // 2, W // 2
    cdt = jnp.bfloat16
    taps9 = [(ky, kx) for ky in range(3) for kx in range(3)]

    # Zero only the 1-pixel border of the padded-h scratch (interior is fully
    # overwritten every step).  Done every step so it is megacore-safe.
    hpad_ref[:, 0:1, :, :] = jnp.zeros((Bt, 1, Wpad, Cout), cdt)
    hpad_ref[:, H + 1:H + 2, :, :] = jnp.zeros((Bt, 1, Wpad, Cout), cdt)
    hpad_ref[:, :, 0:1, :] = jnp.zeros((Bt, H + 2, 1, Cout), cdt)
    hpad_ref[:, :, W + 1:W + 2, :] = jnp.zeros((Bt, H + 2, 1, Cout), cdt)

    for b in range(Bt):
        # ---- conv2d1: 3x3, stride 1, pad 1, bias + ReLU --------------------------
        if use_im2col:
            # tiny-channel path: one big-K matmul (K = 9*Cin) so the MXU isn't starved
            taps = [x_ref[b, ky:ky + H, kx:kx + W, :].reshape(H * W, Cin)
                    for (ky, kx) in taps9]
            h = jnp.dot(jnp.concatenate(taps, axis=1), wA_ref[...],
                        preferred_element_type=jnp.float32)
        else:
            # per-tap path: 9 accumulating dots, no im2col slab, no 9x data duplication
            h = jnp.zeros((H * W, Cout), jnp.float32)
            for t, (ky, kx) in enumerate(taps9):
                win = x_ref[b, ky:ky + H, kx:kx + W, :].reshape(H * W, Cin)
                h = h + jnp.dot(win, wA_ref[t], preferred_element_type=jnp.float32)
        h = jnp.maximum(h + b1_ref[...], 0.0)                       # (H*W, Cout) f32

        # stash h (bf16) into the padded scratch for the second 3x3 conv
        hpad_ref[b, 1:1 + H, 1:1 + W, :] = h.reshape(H, W, Cout).astype(cdt)

        # ---- conv2d2 (3x3) + conv2d0 (1x1 shortcut), bias-free here ---------------
        xc = x_ref[b, 1:1 + H, 1:1 + W, :].reshape(H * W, Cin)
        z = jnp.dot(xc, wC_ref[...], preferred_element_type=jnp.float32)
        if use_im2col:
            taps = [hpad_ref[b, ky:ky + H, kx:kx + W, :].reshape(H * W, Cout)
                    for (ky, kx) in taps9]
            z = z + jnp.dot(jnp.concatenate(taps, axis=1), wB_ref[...],
                            preferred_element_type=jnp.float32)
        else:
            for t, (ky, kx) in enumerate(taps9):
                win = hpad_ref[b, ky:ky + H, kx:kx + W, :].reshape(H * W, Cout)
                z = z + jnp.dot(win, wB_ref[t], preferred_element_type=jnp.float32)

        # ---- fused 2x2 average pool (no pooling matrix, no full-size z scratch) ---
        # h-pairs on the value: rows h and h+1 are W apart -> contiguous sublane slices
        zh = z.reshape(Ho, 2 * W, Cout)
        zh = zh[:, :W, :] + zh[:, W:, :]                            # (Ho, W, Cout)
        # w-pairs via a half-size f32 scratch + strided sublane reads (proven pattern)
        zp_ref[b * Ho * W:(b + 1) * Ho * W, :] = zh.reshape(Ho * W, Cout)
        even = zp_ref[pl.ds(b * Ho * W, Ho * Wo, stride=2), :]      # w = 0, 2, 4, ...
        odd = zp_ref[pl.ds(b * Ho * W + 1, Ho * Wo, stride=2), :]   # w = 1, 3, 5, ...
        # bias (b2 + b0) added post-pool (avgpool of a constant is the constant)
        pooled = 0.25 * (even + odd) + b02_ref[...]                 # (Ho*Wo, Cout) f32
        # NOTE: for Cout >= 128 this store is already lane-dense; for tiny Cout the
        # output block is tiny, so lane-folding (Wo*Cout into lanes) was judged not
        # worth the in-kernel relayout it would require.
        out_ref[b] = pooled.reshape(Ho, Wo, Cout)


# ----------------------------------------------------------------------------- wrapper
def disc_opt_block(x, w0, b0, w1, b1, w2, b2, *, batch_block=None, conv_mode="auto",
                   channels_last_in=False, channels_last_out=False):
    """x: (B, Cin, H, W) f32 (or (B, H, W, Cin) if channels_last_in).
    Returns (B, Cout, H//2, W//2) f32 (or NHWC if channels_last_out)."""
    if not channels_last_in:
        x = jnp.transpose(x, (0, 2, 3, 1))              # NCHW -> NHWC
    B, H, W, Cin = x.shape
    Cout = w1.shape[0]
    Ho, Wo = H // 2, W // 2
    assert H % 2 == 0 and W % 16 == 0, "fused pooling path assumes even H, W % 16 == 0"

    if conv_mode == "auto":
        use_im2col = max(Cin, Cout) < 32                # slab only for tiny channels
    elif conv_mode == "im2col":
        use_im2col = True
    elif conv_mode == "per_tap":
        use_im2col = False
    else:
        raise ValueError(f"unknown conv_mode: {conv_mode}")

    Wpad = _round_up(W + 2, 8)                          # sublane-aligned row width

    if batch_block is None:
        # grow Bt for small images so each step has >= ~1024 matmul rows, but keep
        # >= 2 grid steps (megacore) and a bounded per-step footprint.
        batch_block = 1
        while (B % (batch_block * 2) == 0 and B // (batch_block * 2) >= 2
               and batch_block * H * W < 1024
               and 2 * batch_block * (H + 2) * Wpad * max(Cin, Cout) * 4 < (8 << 20)):
            batch_block *= 2
    Bt = batch_block
    assert B % Bt == 0

    # pad spatially by 1 (plus alignment slack on the right), cast to bf16 for the MXU
    xpad = jnp.pad(x.astype(jnp.bfloat16),
                   ((0, 0), (1, 1), (1, Wpad - (W + 1)), (0, 0)))

    # weights: PyTorch OIHW -> matmul form (row index = tap*C + c), bf16 for the MXU
    w1_t = jnp.transpose(w1, (2, 3, 1, 0))              # (3, 3, Cin, Cout)
    w2_t = jnp.transpose(w2, (2, 3, 1, 0))              # (3, 3, Cout, Cout)
    if use_im2col:
        wA = w1_t.reshape(9 * Cin, Cout).astype(jnp.bfloat16)
        wB = w2_t.reshape(9 * Cout, Cout).astype(jnp.bfloat16)
    else:
        wA = w1_t.reshape(9, Cin, Cout).astype(jnp.bfloat16)
        wB = w2_t.reshape(9, Cout, Cout).astype(jnp.bfloat16)
    wC = jnp.transpose(w0[:, :, 0, 0], (1, 0)).astype(jnp.bfloat16)   # (Cin, Cout)
    b1_m = b1.reshape(1, Cout).astype(jnp.float32)
    b02_m = (b2 + b0).reshape(1, Cout).astype(jnp.float32)

    def _full_spec(arr):
        if arr.ndim == 2:
            return pl.BlockSpec(arr.shape, lambda i: (0, 0))
        return pl.BlockSpec(arr.shape, lambda i: (0, 0, 0))

    kernel = functools.partial(_disc_opt_block_kernel, Bt=Bt, H=H, W=W, Cin=Cin,
                               Cout=Cout, Wpad=Wpad, use_im2col=use_im2col)

    grid_spec = pltpu.PrefetchScalarGridSpec(
        num_scalar_prefetch=0,
        grid=(B // Bt,),
        in_specs=[
            pl.BlockSpec((Bt, H + 2, Wpad, Cin), lambda i: (i, 0, 0, 0)),
            _full_spec(wA), _full_spec(wB), _full_spec(wC),
            _full_spec(b1_m), _full_spec(b02_m),
        ],
        out_specs=pl.BlockSpec((Bt, Ho, Wo, Cout), lambda i: (i, 0, 0, 0)),
        scratch_shapes=[
            pltpu.VMEM((Bt, H + 2, Wpad, Cout), jnp.bfloat16),   # padded h
            pltpu.VMEM((Bt * Ho * W, Cout), jnp.float32),        # h-pooled, pre w-pool
        ],
    )

    out_nhwc = pl.pallas_call(
        kernel,
        out_shape=jax.ShapeDtypeStruct((B, Ho, Wo, Cout), jnp.float32),
        grid_spec=grid_spec,
        compiler_params=pltpu.CompilerParams(
            dimension_semantics=("parallel",),
            vmem_limit_bytes=_default_vmem_limit(),
        ),
    )(xpad, wA, wB, wC, b1_m, b02_m)

    if channels_last_out:
        return out_nhwc
    return jnp.transpose(out_nhwc, (0, 3, 1, 2))        # NHWC -> NCHW


# ----------------------------------------------------------------------------- reference
def _conv_nchw(x, w, b, pad):
    y = jax.lax.conv_general_dilated(
        x, w, window_strides=(1, 1), padding=[(pad, pad), (pad, pad)],
        dimension_numbers=('NCHW', 'OIHW', 'NCHW'))
    return y + b[None, :, None, None]


def reference(x, w0, b0, w1, b1, w2, b2):
    h = jnp.maximum(_conv_nchw(x, w1, b1, 1), 0.0)
    y = _conv_nchw(h, w2, b2, 1)
    B, C, H, W = y.shape
    yp = y.reshape(B, C, H // 2, 2, W // 2, 2).mean(axis=(3, 5))
    Bx, Cx, Hx, Wx = x.shape
    x0p = x.reshape(Bx, Cx, Hx // 2, 2, Wx // 2, 2).mean(axis=(3, 5))
    return yp + _conv_nchw(x0p, w0, b0, 0)


def _spectral_normalize(w):
    wn = np.asarray(w)
    sigma = np.linalg.svd(wn.reshape(wn.shape[0], -1), compute_uv=False)[0]
    return jnp.asarray(wn / sigma)


# ----------------------------------------------------------------------------- main
if __name__ == "__main__":
    B, Cin, Cout, H, W = 2, 4, 8, 16, 16

    key = jax.random.PRNGKey(0)
    k0, k1, k2, k3, k4, k5, kx = jax.random.split(key, 7)

    # conv2d0: 1x1, conv2d1/conv2d2: 3x3  (PyTorch OIHW weight layout)
    w0 = _spectral_normalize(0.1 * jax.random.normal(k0, (Cout, Cin, 1, 1), jnp.float32))
    b0 = 0.1 * jax.random.normal(k1, (Cout,), jnp.float32)
    w1 = _spectral_normalize(0.1 * jax.random.normal(k2, (Cout, Cin, 3, 3), jnp.float32))
    b1 = 0.1 * jax.random.normal(k3, (Cout,), jnp.float32)
    w2 = _spectral_normalize(0.1 * jax.random.normal(k4, (Cout, Cout, 3, 3), jnp.float32))
    b2 = 0.1 * jax.random.normal(k5, (Cout,), jnp.float32)

    x = jax.random.normal(kx, (B, Cin, H, W), jnp.float32)
    ref = reference(x, w0, b0, w1, b1, w2, b2)

    # Exercise both conv paths (tiny-C im2col default and the large-C per-tap path)
    # and the Bt>1 batched-block path.  bf16 MXU operands / bf16 h -> loose tolerance.
    configs = ({}, {"conv_mode": "per_tap"}, {"conv_mode": "per_tap", "batch_block": 2})
    for kwargs in configs:
        out = disc_opt_block(x, w0, b0, w1, b1, w2, b2, **kwargs)
        out = jax.block_until_ready(out)
        np.testing.assert_allclose(np.asarray(out), np.asarray(ref),
                                   rtol=2e-2, atol=2e-2)
        assert out.shape == (B, Cout, H // 2, W // 2)

    print("KERNEL_OK")
</pallas_src>

<mosaic_0001>
module attributes {stable_mosaic.version = 11 : i64} {
  func.func @_disc_opt_block_kernel(%arg0: i32, %arg1: memref<1x18x24x4xbf16, #tpu.memory_space<vmem>>, %arg2: memref<36x8xbf16, #tpu.memory_space<vmem>>, %arg3: memref<72x8xbf16, #tpu.memory_space<vmem>>, %arg4: memref<4x8xbf16, #tpu.memory_space<vmem>>, %arg5: memref<1x8xf32, #tpu.memory_space<vmem>>, %arg6: memref<1x8xf32, #tpu.memory_space<vmem>>, %arg7: memref<1x8x8x8xf32, #tpu.memory_space<vmem>>, %arg8: memref<1x18x24x8xbf16, #tpu.memory_space<vmem>>, %arg9: memref<128x8xf32, #tpu.memory_space<vmem>>) attributes {dimension_semantics = [#tpu.dimension_semantics<parallel>], iteration_bounds = array<i64: 2>, scalar_prefetch = 0 : i64, scratch_operands = 2 : i64, tpu.core_type = #tpu.core_type<tc>, window_params = [{transform_indices = @transform_0, window_bounds = array<i64: 1, 18, 24, 4>}, {pipeline_mode = #tpu.pipeline_mode<synchronous>, transform_indices = @transform_1, window_bounds = array<i64: 36, 8>}, {pipeline_mode = #tpu.pipeline_mode<synchronous>, transform_indices = @transform_2, window_bounds = array<i64: 72, 8>}, {pipeline_mode = #tpu.pipeline_mode<synchronous>, transform_indices = @transform_3, window_bounds = array<i64: 4, 8>}, {pipeline_mode = #tpu.pipeline_mode<synchronous>, transform_indices = @transform_4, window_bounds = array<i64: 1, 8>}, {pipeline_mode = #tpu.pipeline_mode<synchronous>, transform_indices = @transform_5, window_bounds = array<i64: 1, 8>}, {transform_indices = @transform_6, window_bounds = array<i64: 1, 8, 8, 8>}]} {
    %cst = arith.constant 0.000000e+00 : bf16
    %0 = vector.broadcast %cst : bf16 to vector<1x1x24x8xbf16>
    %c0 = arith.constant 0 : index
    %c0_0 = arith.constant 0 : index
    %c0_1 = arith.constant 0 : index
    %c0_2 = arith.constant 0 : index
    %1 = vector.load %arg8[%c0, %c0_0, %c0_1, %c0_2] : memref<1x18x24x8xbf16, #tpu.memory_space<vmem>>, vector<1x1x24x8xbf16>
    tpu.vector_store %arg8[%c0, %c0_0, %c0_1, %c0_2], %0 {strides = array<i32>} : memref<1x18x24x8xbf16, #tpu.memory_space<vmem>>, vector<1x1x24x8xbf16>,
    %cst_3 = arith.constant 0.000000e+00 : bf16
    %2 = vector.broadcast %cst_3 : bf16 to vector<1x1x24x8xbf16>
    %c0_4 = arith.constant 0 : index
    %c17 = arith.constant 17 : index
    %c0_5 = arith.constant 0 : index
    %c0_6 = arith.constant 0 : index
    %3 = vector.load %arg8[%c0_4, %c17, %c0_5, %c0_6] : memref<1x18x24x8xbf16, #tpu.memory_space<vmem>>, vector<1x1x24x8xbf16>
    tpu.vector_store %arg8[%c0_4, %c17, %c0_5, %c0_6], %2 {strides = array<i32>} : memref<1x18x24x8xbf16, #tpu.memory_space<vmem>>, vector<1x1x24x8xbf16>,
    %cst_7 = arith.constant 0.000000e+00 : bf16
    %4 = vector.broadcast %cst_7 : bf16 to vector<1x18x1x8xbf16>
    %c0_8 = arith.constant 0 : index
    %c0_9 = arith.constant 0 : index
    %c0_10 = arith.constant 0 : index
    %c0_11 = arith.constant 0 : index
    %5 = vector.load %arg8[%c0_8, %c0_9, %c0_10, %c0_11] : memref<1x18x24x8xbf16, #tpu.memory_space<vmem>>, vector<1x18x1x8xbf16>
    tpu.vector_store %arg8[%c0_8, %c0_9, %c0_10, %c0_11], %4 {strides = array<i32>} : memref<1x18x24x8xbf16, #tpu.memory_space<vmem>>, vector<1x18x1x8xbf16>,
    %cst_12 = arith.constant 0.000000e+00 : bf16
    %6 = vector.broadcast %cst_12 : bf16 to vector<1x18x1x8xbf16>
    %c0_13 = arith.constant 0 : index
    %c0_14 = arith.constant 0 : index
    %c17_15 = arith.constant 17 : index
    %c0_16 = arith.constant 0 : index
    %7 = vector.load %arg8[%c0_13, %c0_14, %c17_15, %c0_16] : memref<1x18x24x8xbf16, #tpu.memory_space<vmem>>, vector<1x18x1x8xbf16>
    tpu.vector_store %arg8[%c0_13, %c0_14, %c17_15, %c0_16], %6 {strides = array<i32>} : memref<1x18x24x8xbf16, #tpu.memory_space<vmem>>, vector<1x18x1x8xbf16>,
    %c0_17 = arith.constant 0 : index
    %c0_18 = arith.constant 0 : index
    %c0_19 = arith.constant 0 : index
    %c0_20 = arith.constant 0 : index
    %8 = vector.load %arg1[%c0_17, %c0_18, %c0_19, %c0_20] : memref<1x18x24x4xbf16, #tpu.memory_space<vmem>>, vector<1x16x16x4xbf16>
    %9 = vector.shape_cast %8 : vector<1x16x16x4xbf16> to vector<16x16x4xbf16>
    %10 = vector.shape_cast %9 : vector<16x16x4xbf16> to vector<256x4xbf16>
    %c0_21 = arith.constant 0 : index
    %c0_22 = arith.constant 0 : index
    %c1 = arith.constant 1 : index
    %c0_23 = arith.constant 0 : index
    %11 = vector.load %arg1[%c0_21, %c0_22, %c1, %c0_23] : memref<1x18x24x4xbf16, #tpu.memory_space<vmem>>, vector<1x16x16x4xbf16>
    %12 = vector.shape_cast %11 : vector<1x16x16x4xbf16> to vector<16x16x4xbf16>
    %13 = vector.shape_cast %12 : vector<16x16x4xbf16> to vector<256x4xbf16>
    %c0_24 = arith.constant 0 : index
    %c0_25 = arith.constant 0 : index
    %c2 = arith.constant 2 : index
    %c0_26 = arith.constant 0 : index
    %14 = vector.load %arg1[%c0_24, %c0_25, %c2, %c0_26] : memref<1x18x24x4xbf16, #tpu.memory_space<vmem>>, vector<1x16x16x4xbf16>
    %15 = vector.shape_cast %14 : vector<1x16x16x4xbf16> to vector<16x16x4xbf16>
    %16 = vector.shape_cast %15 : vector<16x16x4xbf16> to vector<256x4xbf16>
    %c0_27 = arith.constant 0 : index
    %c1_28 = arith.constant 1 : index
    %c0_29 = arith.constant 0 : index
    %c0_30 = arith.constant 0 : index
    %17 = vector.load %arg1[%c0_27, %c1_28, %c0_29, %c0_30] : memref<1x18x24x4xbf16, #tpu.memory_space<vmem>>, vector<1x16x16x4xbf16>
    %18 = vector.shape_cast %17 : vector<1x16x16x4xbf16> to vector<16x16x4xbf16>
    %19 = vector.shape_cast %18 : vector<16x16x4xbf16> to vector<256x4xbf16>
    %c0_31 = arith.constant 0 : index
    %c1_32 = arith.constant 1 : index
    %c1_33 = arith.constant 1 : index
    %c0_34 = arith.constant 0 : index
    %20 = vector.load %arg1[%c0_31, %c1_32, %c1_33, %c0_34] : memref<1x18x24x4xbf16, #tpu.memory_space<vmem>>, vector<1x16x16x4xbf16>
    %21 = vector.shape_cast %20 : vector<1x16x16x4xbf16> to vector<16x16x4xbf16>
    %22 = vector.shape_cast %21 : vector<16x16x4xbf16> to vector<256x4xbf16>
    %c0_35 = arith.constant 0 : index
    %c1_36 = arith.constant 1 : index
    %c2_37 = arith.constant 2 : index
    %c0_38 = arith.constant 0 : index
    %23 = vector.load %arg1[%c0_35, %c1_36, %c2_37, %c0_38] : memref<1x18x24x4xbf16, #tpu.memory_space<vmem>>, vector<1x16x16x4xbf16>
    %24 = vector.shape_cast %23 : vector<1x16x16x4xbf16> to vector<16x16x4xbf16>
    %25 = vector.shape_cast %24 : vector<16x16x4xbf16> to vector<256x4xbf16>
    %c0_39 = arith.constant 0 : index
    %c2_40 = arith.constant 2 : index
    %c0_41 = arith.constant 0 : index
    %c0_42 = arith.constant 0 : index
    %26 = vector.load %arg1[%c0_39, %c2_40, %c0_41, %c0_42] : memref<1x18x24x4xbf16, #tpu.memory_space<vmem>>, vector<1x16x16x4xbf16>
    %27 = vector.shape_cast %26 : vector<1x16x16x4xbf16> to vector<16x16x4xbf16>
    %28 = vector.shape_cast %27 : vector<16x16x4xbf16> to vector<256x4xbf16>
    %c0_43 = arith.constant 0 : index
    %c2_44 = arith.constant 2 : index
    %c1_45 = arith.constant 1 : index
    %c0_46 = arith.constant 0 : index
    %29 = vector.load %arg1[%c0_43, %c2_44, %c1_45, %c0_46] : memref<1x18x24x4xbf16, #tpu.memory_space<vmem>>, vector<1x16x16x4xbf16>
    %30 = vector.shape_cast %29 : vector<1x16x16x4xbf16> to vector<16x16x4xbf16>
    %31 = vector.shape_cast %30 : vector<16x16x4xbf16> to vector<256x4xbf16>
    %c0_47 = arith.constant 0 : index
    %c2_48 = arith.constant 2 : index
    %c2_49 = arith.constant 2 : index
    %c0_50 = arith.constant 0 : index
    %32 = vector.load %arg1[%c0_47, %c2_48, %c2_49, %c0_50] : memref<1x18x24x4xbf16, #tpu.memory_space<vmem>>, vector<1x16x16x4xbf16>
    %33 = vector.shape_cast %32 : vector<1x16x16x4xbf16> to vector<16x16x4xbf16>
    %34 = vector.shape_cast %33 : vector<16x16x4xbf16> to vector<256x4xbf16>
    %35 = tpu.concatenate %10, %13, %16, %19, %22, %25, %28, %31, %34 in 1 : vector<256x4xbf16>, vector<256x4xbf16>, vector<256x4xbf16>, vector<256x4xbf16>, vector<256x4xbf16>, vector<256x4xbf16>, vector<256x4xbf16>, vector<256x4xbf16>, vector<256x4xbf16> -> vector<256x36xbf16>
    %c0_51 = arith.constant 0 : index
    %c0_52 = arith.constant 0 : index
    %36 = vector.load %arg2[%c0_51, %c0_52] : memref<36x8xbf16, #tpu.memory_space<vmem>>, vector<36x8xbf16>
    %cst_53 = arith.constant dense<0.000000e+00> : vector<256x8xf32>
    %37 = tpu.matmul %35, %36, %cst_53 {dimension_numbers = #tpu.dot_dimension_numbers<[1], [0], [0], [1], [0, 0, 1, 1], [], []>} : vector<256x36xbf16>, vector<36x8xbf16>, vector<256x8xf32> -> vector<256x8xf32>
    %c0_54 = arith.constant 0 : index
    %c0_55 = arith.constant 0 : index
    %38 = vector.load %arg5[%c0_54, %c0_55] : memref<1x8xf32, #tpu.memory_space<vmem>>, vector<1x8xf32>
    %39 = vector.broadcast %38 : vector<1x8xf32> to vector<256x8xf32>
    %40 = arith.addf %37, %39 : vector<256x8xf32>
    %cst_56 = arith.constant 0.000000e+00 : f32
    %41 = vector.broadcast %cst_56 : f32 to vector<256x8xf32>
    %42 = arith.maximumf %40, %41 : vector<256x8xf32>
    %43 = vector.shape_cast %42 : vector<256x8xf32> to vector<16x16x8xf32>
    %44 = arith.truncf %43 : vector<16x16x8xf32> to vector<16x16x8xbf16>
    %c0_57 = arith.constant 0 : index
    %c1_58 = arith.constant 1 : index
    %c1_59 = arith.constant 1 : index
    %c0_60 = arith.constant 0 : index
    %45 = vector.load %arg8[%c0_57, %c1_58, %c1_59, %c0_60] : memref<1x18x24x8xbf16, #tpu.memory_space<vmem>>, vector<1x16x16x8xbf16>
    %46 = vector.shape_cast %45 : vector<1x16x16x8xbf16> to vector<16x16x8xbf16>
    %47 = vector.shape_cast %44 : vector<16x16x8xbf16> to vector<1x16x16x8xbf16>
    tpu.vector_store %arg8[%c0_57, %c1_58, %c1_59, %c0_60], %47 {strides = array<i32>} : memref<1x18x24x8xbf16, #tpu.memory_space<vmem>>, vector<1x16x16x8xbf16>,
    %c0_61 = arith.constant 0 : index
    %c1_62 = arith.constant 1 : index
    %c1_63 = arith.constant 1 : index
    %c0_64 = arith.constant 0 : index
    %48 = vector.load %arg1[%c0_61, %c1_62, %c1_63, %c0_64] : memref<1x18x24x4xbf16, #tpu.memory_space<vmem>>, vector<1x16x16x4xbf16>
    %49 = vector.shape_cast %48 : vector<1x16x16x4xbf16> to vector<16x16x4xbf16>
    %50 = vector.shape_cast %49 : vector<16x16x4xbf16> to vector<256x4xbf16>
    %c0_65 = arith.constant 0 : index
    %c0_66 = arith.constant 0 : index
    %51 = vector.load %arg4[%c0_65, %c0_66] : memref<4x8xbf16, #tpu.memory_space<vmem>>, vector<4x8xbf16>
    %cst_67 = arith.constant dense<0.000000e+00> : vector<256x8xf32>
    %52 = tpu.matmul %50, %51, %cst_67 {dimension_numbers = #tpu.dot_dimension_numbers<[1], [0], [0], [1], [0, 0, 1, 1], [], []>} : vector<256x4xbf16>, vector<4x8xbf16>, vector<256x8xf32> -> vector<256x8xf32>
    %c0_68 = arith.constant 0 : index
    %c0_69 = arith.constant 0 : index
    %c0_70 = arith.constant 0 : index
    %c0_71 = arith.constant 0 : index
    %53 = vector.load %arg8[%c0_68, %c0_69, %c0_70, %c0_71] : memref<1x18x24x8xbf16, #tpu.memory_space<vmem>>, vector<1x16x16x8xbf16>
    %54 = vector.shape_cast %53 : vector<1x16x16x8xbf16> to vector<16x16x8xbf16>
    %55 = vector.shape_cast %54 : vector<16x16x8xbf16> to vector<256x8xbf16>
    %c0_72 = arith.constant 0 : index
    %c0_73 = arith.constant 0 : index
    %c1_74 = arith.constant 1 : index
    %c0_75 = arith.constant 0 : index
    %56 = vector.load %arg8[%c0_72, %c0_73, %c1_74, %c0_75] : memref<1x18x24x8xbf16, #tpu.memory_space<vmem>>, vector<1x16x16x8xbf16>
    %57 = vector.shape_cast %56 : vector<1x16x16x8xbf16> to vector<16x16x8xbf16>
    %58 = vector.shape_cast %57 : vector<16x16x8xbf16> to vector<256x8xbf16>
    %c0_76 = arith.constant 0 : index
    %c0_77 = arith.constant 0 : index
    %c2_78 = arith.constant 2 : index
    %c0_79 = arith.constant 0 : index
    %59 = vector.load %arg8[%c0_76, %c0_77, %c2_78, %c0_79] : memref<1x18x24x8xbf16, #tpu.memory_space<vmem>>, vector<1x16x16x8xbf16>
    %60 = vector.shape_cast %59 : vector<1x16x16x8xbf16> to vector<16x16x8xbf16>
    %61 = vector.shape_cast %60 : vector<16x16x8xbf16> to vector<256x8xbf16>
    %c0_80 = arith.constant 0 : index
    %c1_81 = arith.constant 1 : index
    %c0_82 = arith.constant 0 : index
    %c0_83 = arith.constant 0 : index
    %62 = vector.load %arg8[%c0_80, %c1_81, %c0_82, %c0_83] : memref<1x18x24x8xbf16, #tpu.memory_space<vmem>>, vector<1x16x16x8xbf16>
    %63 = vector.shape_cast %62 : vector<1x16x16x8xbf16> to vector<16x16x8xbf16>
    %64 = vector.shape_cast %63 : vector<16x16x8xbf16> to vector<256x8xbf16>
    %c0_84 = arith.constant 0 : index
    %c1_85 = arith.constant 1 : index
    %c1_86 = arith.constant 1 : index
    %c0_87 = arith.constant 0 : index
    %65 = vector.load %arg8[%c0_84, %c1_85, %c1_86, %c0_87] : memref<1x18x24x8xbf16, #tpu.memory_space<vmem>>, vector<1x16x16x8xbf16>
    %66 = vector.shape_cast %65 : vector<1x16x16x8xbf16> to vector<16x16x8xbf16>
    %67 = vector.shape_cast %66 : vector<16x16x8xbf16> to vector<256x8xbf16>
    %c0_88 = arith.constant 0 : index
    %c1_89 = arith.constant 1 : index
    %c2_90 = arith.constant 2 : index
    %c0_91 = arith.constant 0 : index
    %68 = vector.load %arg8[%c0_88, %c1_89, %c2_90, %c0_91] : memref<1x18x24x8xbf16, #tpu.memory_space<vmem>>, vector<1x16x16x8xbf16>
    %69 = vector.shape_cast %68 : vector<1x16x16x8xbf16> to vector<16x16x8xbf16>
    %70 = vector.shape_cast %69 : vector<16x16x8xbf16> to vector<256x8xbf16>
    %c0_92 = arith.constant 0 : index
    %c2_93 = arith.constant 2 : index
    %c0_94 = arith.constant 0 : index
    %c0_95 = arith.constant 0 : index
    %71 = vector.load %arg8[%c0_92, %c2_93, %c0_94, %c0_95] : memref<1x18x24x8xbf16, #tpu.memory_space<vmem>>, vector<1x16x16x8xbf16>
    %72 = vector.shape_cast %71 : vector<1x16x16x8xbf16> to vector<16x16x8xbf16>
    %73 = vector.shape_cast %72 : vector<16x16x8xbf16> to vector<256x8xbf16>
    %c0_96 = arith.constant 0 : index
    %c2_97 = arith.constant 2 : index
    %c1_98 = arith.constant 1 : index
    %c0_99 = arith.constant 0 : index
    %74 = vector.load %arg8[%c0_96, %c2_97, %c1_98, %c0_99] : memref<1x18x24x8xbf16, #tpu.memory_space<vmem>>, vector<1x16x16x8xbf16>
    %75 = vector.shape_cast %74 : vector<1x16x16x8xbf16> to vector<16x16x8xbf16>
    %76 = vector.shape_cast %75 : vector<16x16x8xbf16> to vector<256x8xbf16>
    %c0_100 = arith.constant 0 : index
    %c2_101 = arith.constant 2 : index
    %c2_102 = arith.constant 2 : index
    %c0_103 = arith.constant 0 : index
    %77 = vector.load %arg8[%c0_100, %c2_101, %c2_102, %c0_103] : memref<1x18x24x8xbf16, #tpu.memory_space<vmem>>, vector<1x16x16x8xbf16>
    %78 = vector.shape_cast %77 : vector<1x16x16x8xbf16> to vector<16x16x8xbf16>
    %79 = vector.shape_cast %78 : vector<16x16x8xbf16> to vector<256x8xbf16>
    %80 = tpu.concatenate %55, %58, %61, %64, %67, %70, %73, %76, %79 in 1 : vector<256x8xbf16>, vector<256x8xbf16>, vector<256x8xbf16>, vector<256x8xbf16>, vector<256x8xbf16>, vector<256x8xbf16>, vector<256x8xbf16>, vector<256x8xbf16>, vector<256x8xbf16> -> vector<256x72xbf16>
    %c0_104 = arith.constant 0 : index
    %c0_105 = arith.constant 0 : index
    %81 = vector.load %arg3[%c0_104, %c0_105] : memref<72x8xbf16, #tpu.memory_space<vmem>>, vector<72x8xbf16>
    %cst_106 = arith.constant dense<0.000000e+00> : vector<256x8xf32>
    %82 = tpu.matmul %80, %81, %cst_106 {dimension_numbers = #tpu.dot_dimension_numbers<[1], [0], [0], [1], [0, 0, 1, 1], [], []>} : vector<256x72xbf16>, vector<72x8xbf16>, vector<256x8xf32> -> vector<256x8xf32>
    %83 = arith.addf %52, %82 : vector<256x8xf32>
    %84 = vector.shape_cast %83 : vector<256x8xf32> to vector<8x32x8xf32>
    %85 = vector.extract_strided_slice %84 {offsets = [0, 0, 0], sizes = [8, 16, 8], strides = [1, 1, 1]} : vector<8x32x8xf32> to vector<8x16x8xf32>
    %86 = vector.extract_strided_slice %84 {offsets = [0, 16, 0], sizes = [8, 16, 8], strides = [1, 1, 1]} : vector<8x32x8xf32> to vector<8x16x8xf32>
    %87 = arith.addf %85, %86 : vector<8x16x8xf32>
    %88 = vector.shape_cast %87 : vector<8x16x8xf32> to vector<128x8xf32>
    %c0_107 = arith.constant 0 : index
    %c0_108 = arith.constant 0 : index
    %89 = vector.load %arg9[%c0_107, %c0_108] : memref<128x8xf32, #tpu.memory_space<vmem>>, vector<128x8xf32>
    tpu.vector_store %arg9[%c0_107, %c0_108], %88 {strides = array<i32>} : memref<128x8xf32, #tpu.memory_space<vmem>>, vector<128x8xf32>,
    %c0_109 = arith.constant 0 : index
    %c0_110 = arith.constant 0 : index
    %90 = tpu.strided_load %arg9[%c0_109, %c0_110] {strides = array<i32: 2, 1>} : memref<128x8xf32, #tpu.memory_space<vmem>>, vector<64x8xf32>
    %c1_111 = arith.constant 1 : index
    %c0_112 = arith.constant 0 : index
    %91 = tpu.strided_load %arg9[%c1_111, %c0_112] {strides = array<i32: 2, 1>} : memref<128x8xf32, #tpu.memory_space<vmem>>, vector<64x8xf32>
    %92 = arith.addf %90, %91 : vector<64x8xf32>
    %cst_113 = arith.constant 2.500000e-01 : f32
    %93 = vector.broadcast %cst_113 : f32 to vector<64x8xf32>
    %94 = arith.mulf %93, %92 : vector<64x8xf32>
    %c0_114 = arith.constant 0 : index
    %c0_115 = arith.constant 0 : index
    %95 = vector.load %arg6[%c0_114, %c0_115] : memref<1x8xf32, #tpu.memory_space<vmem>>, vector<1x8xf32>
    %96 = vector.broadcast %95 : vector<1x8xf32> to vector<64x8xf32>
    %97 = arith.addf %94, %96 : vector<64x8xf32>
    %98 = vector.shape_cast %97 : vector<64x8xf32> to vector<8x8x8xf32>
    %c0_116 = arith.constant 0 : index
    %c0_117 = arith.constant 0 : index
    %c0_118 = arith.constant 0 : index
    %c0_119 = arith.constant 0 : index
    %99 = vector.load %arg7[%c0_116, %c0_117, %c0_118, %c0_119] : memref<1x8x8x8xf32, #tpu.memory_space<vmem>>, vector<1x8x8x8xf32>
    %100 = vector.shape_cast %99 : vector<1x8x8x8xf32> to vector<8x8x8xf32>
    %101 = vector.shape_cast %98 : vector<8x8x8xf32> to vector<1x8x8x8xf32>
    tpu.vector_store %arg7[%c0_116, %c0_117, %c0_118, %c0_119], %101 {strides = array<i32>} : memref<1x8x8x8xf32, #tpu.memory_space<vmem>>, vector<1x8x8x8xf32>,
    return
  }
  func.func @transform_0(%arg0: i32) -> (i32, i32, i32, i32) {
    %c0_i32 = arith.constant 0 : i32
    %c0_i32_0 = arith.constant 0 : i32
    %c0_i32_1 = arith.constant 0 : i32
    %c0_i32_2 = arith.constant 0 : i32
    return %arg0, %c0_i32, %c0_i32_0, %c0_i32_1 : i32, i32, i32, i32
  }
  func.func @transform_1(%arg0: i32) -> (i32, i32) {
    %c0_i32 = arith.constant 0 : i32
    %c0_i32_0 = arith.constant 0 : i32
    %c0_i32_1 = arith.constant 0 : i32
    return %c0_i32, %c0_i32_0 : i32, i32
  }
  func.func @transform_2(%arg0: i32) -> (i32, i32) {
    %c0_i32 = arith.constant 0 : i32
    %c0_i32_0 = arith.constant 0 : i32
    %c0_i32_1 = arith.constant 0 : i32
    return %c0_i32, %c0_i32_0 : i32, i32
  }
  func.func @transform_3(%arg0: i32) -> (i32, i32) {
    %c0_i32 = arith.constant 0 : i32
    %c0_i32_0 = arith.constant 0 : i32
    %c0_i32_1 = arith.constant 0 : i32
    return %c0_i32, %c0_i32_0 : i32, i32
  }
  func.func @transform_4(%arg0: i32) -> (i32, i32) {
    %c0_i32 = arith.constant 0 : i32
    %c0_i32_0 = arith.constant 0 : i32
    %c0_i32_1 = arith.constant 0 : i32
    return %c0_i32, %c0_i32_0 : i32, i32
  }
  func.func @transform_5(%arg0: i32) -> (i32, i32) {
    %c0_i32 = arith.constant 0 : i32
    %c0_i32_0 = arith.constant 0 : i32
    %c0_i32_1 = arith.constant 0 : i32
    return %c0_i32, %c0_i32_0 : i32, i32
  }
  func.func @transform_6(%arg0: i32) -> (i32, i32, i32, i32) {
    %c0_i32 = arith.constant 0 : i32
    %c0_i32_0 = arith.constant 0 : i32
    %c0_i32_1 = arith.constant 0 : i32
    %c0_i32_2 = arith.constant 0 : i32
    return %arg0, %c0_i32, %c0_i32_0, %c0_i32_1 : i32, i32, i32, i32
  }
}

</mosaic_0001>

<llo_original>
// kernel: tpu_custom_call.1
$region0: #{tpu_custom_call.1}
  #allocation0 [shape = 'u32[]', space=smem, size = 0x4, offset = 0x4, fixed_abs, tag = 'smem constant byte address 0x4 - core index']
  #allocation1 [shape = 'u32[144,128]{1,0:T(1,128)}', space=vmem, size = 0x12000, scoped, tag = 'internal scratch']
  #allocation2 [shape = 'bf16[1,18,24,8]{3,2,1,0:T(8,128)(2,1)}', space=vmem, size = 0x1b000, scoped, tag = 'scratch operand']
  #allocation3 [shape = 'f32[128,8]{1,0:T(8,128)}', space=vmem, size = 0x10000, scoped, tag = 'scratch operand']
  %s0 = inlined_call_operand.vmem [shape: bf16[2,18,24,4], index: 0, kind: input, shape index: {}]
  %s1 = inlined_call_operand.vmem [shape: bf16[36,8], index: 1, kind: input, shape index: {}]
  %s2 = inlined_call_operand.vmem [shape: bf16[72,8], index: 2, kind: input, shape index: {}]
  %s3 = inlined_call_operand.vmem [shape: bf16[4,8], index: 3, kind: input, shape index: {}]
  %s4 = inlined_call_operand.vmem [shape: f32[1,8], index: 4, kind: input, shape index: {}]
  %s5 = inlined_call_operand.vmem [shape: f32[1,8], index: 5, kind: input, shape index: {}]
  %s6 = inlined_call_operand.hbm [shape: f32[2,8,8,8], index: 6, kind: output, shape index: {}]
  %s7 = sld [smem:[#allocation0]]
  $region57: #{tpu_custom_call.1} parent=0
    _
  %s9 = ssub.s32 1, %s7
  %s10 = scalar_select 0, %s9, %s7
  $region1: #{tpu_custom_call.1} parent=0
    #allocation4 [shape = 'u8[65536]{0}', space=vmem, size = 0x10000, scoped, tag = 'output window, operand 0']
    #allocation5 [shape = 's32[2]{0}', space=sflag, size = 0x8, scoped, tag = 'scoped memory for tpu_custom_call.1']
    %11 = vsyncpa [#allocation5], 0
    %s12 = scalar_lea.sflag [#allocation5], 1
    %13 = vsyncpa %s12, 0
    loop: start=0, step=1, limit=4
    $region2: #{tpu_custom_call.1} parent=1 // loop_pre_header
      _
    $region3: #{tpu_custom_call.1} parent=1 // loop_header
      %s15 = sphi 0, %s19
      %p16 = scmp.ge.s32.totalorder %s15, 4
      %s25 = sphi 0, %s27
      %s28 = sphi 0, %s25
      %s29 = sphi 0, %s28
      %s45 = sphi 0, %s29
      %s49 = sphi 0, %s49
      %s51 = sphi 0, %s49
      %s52 = sphi 0, %s51
      %s66 = sphi 0, %s52
      %s70 = sphi 0, %s70
      %s72 = sphi 0, %s70
      %s73 = sphi 0, %s72
      %s87 = sphi 0, %s73
      %s91 = sphi 0, %s91
      %s93 = sphi 0, %s91
      %s94 = sphi 0, %s93
      %s108 = sphi 0, %s94
      %s112 = sphi 0, %s112
      %s114 = sphi 0, %s112
      %s115 = sphi 0, %s114
      %s129 = sphi 0, %s115
      %s133 = sphi 0, %s133
      %s135 = sphi 0, %s133
      %s136 = sphi 0, %s135
      %s150 = sphi 0, %s136
      %s156 = sphi 0, %s158
      %s159 = sphi 0, %s156
      %s160 = sphi 0, %s159
      %s176 = sphi 0, %s160
    $region4: #{tpu_custom_call.1} parent=1 // loop_header_branch
      %18 = sbr.rel (%p16) target = $region8
    $region5: #{tpu_custom_call.1} parent=1 // loop_body
      %s20 = ssub.s32 %s15, 1
      %s21 = ssub.s32 %s15, 2
      %s22 = sadd.s32 %s15, 1
      %s23 = ssub.s32 %s15, %s22
      %p24 = scmp.eq.s32.totalorder %s23, 0
      %s26 = sadd.s32 %s25, 1
      %s27 = scalar_select %p24, %s25, %s26
      %p30 = pneg %p24
      %p31 = scmp.eq.s32.totalorder %s15, 1
      %p32 = por %p30, %p31
      %p33 = scmp.ne.s32.totalorder %s25, %s28
      %p34 = scmp.eq.s32.totalorder %s15, 0
      %p35 = por %p33, %p34
      %p36 = scmp.ne.s32.totalorder %s25, %s28
      %p37 = scmp.eq.s32.totalorder %s20, 1
      %p38 = por %p36, %p37
      %p39 = scmp.ne.s32.totalorder %s28, %s29
      %p40 = scmp.eq.s32.totalorder %s20, 0
      %p41 = por %p39, %p40
      %p42 = scmp.ne.s32.totalorder %s28, %s29
      %p43 = scmp.eq.s32.totalorder %s21, 1
      %p44 = por %p42, %p43
      %p46 = scmp.ne.s32.totalorder %s29, %s45
      %p47 = scmp.eq.s32.totalorder %s21, 0
      %p48 = por %p46, %p47
      %s50 = sadd.s32 %s49, 1
      %p53 = scmp.eq.s32.totalorder %s15, 1
      %p54 = scmp.ne.s32.totalorder %s49, %s51
      %p55 = scmp.eq.s32.totalorder %s15, 0
      %p56 = por %p54, %p55
      %p57 = scmp.ne.s32.totalorder %s49, %s51
      %p58 = scmp.eq.s32.totalorder %s20, 1
      %p59 = por %p57, %p58
      %p60 = scmp.ne.s32.totalorder %s51, %s52
      %p61 = scmp.eq.s32.totalorder %s20, 0
      %p62 = por %p60, %p61
      %p63 = scmp.ne.s32.totalorder %s51, %s52
      %p64 = scmp.eq.s32.totalorder %s21, 1
      %p65 = por %p63, %p64
      %p67 = scmp.ne.s32.totalorder %s52, %s66
      %p68 = scmp.eq.s32.totalorder %s21, 0
      %p69 = por %p67, %p68
      %s71 = sadd.s32 %s70, 1
      %p74 = scmp.eq.s32.totalorder %s15, 1
      %p75 = scmp.ne.s32.totalorder %s70, %s72
      %p76 = scmp.eq.s32.totalorder %s15, 0
      %p77 = por %p75, %p76
      %p78 = scmp.ne.s32.totalorder %s70, %s72
      %p79 = scmp.eq.s32.totalorder %s20, 1
      %p80 = por %p78, %p79
      %p81 = scmp.ne.s32.totalorder %s72, %s73
      %p82 = scmp.eq.s32.totalorder %s20, 0
      %p83 = por %p81, %p82
      %p84 = scmp.ne.s32.totalorder %s72, %s73
      %p85 = scmp.eq.s32.totalorder %s21, 1
      %p86 = por %p84, %p85
      %p88 = scmp.ne.s32.totalorder %s73, %s87
      %p89 = scmp.eq.s32.totalorder %s21, 0
      %p90 = por %p88, %p89
      %s92 = sadd.s32 %s91, 1
      %p95 = scmp.eq.s32.totalorder %s15, 1
      %p96 = scmp.ne.s32.totalorder %s91, %s93
      %p97 = scmp.eq.s32.totalorder %s15, 0
      %p98 = por %p96, %p97
      %p99 = scmp.ne.s32.totalorder %s91, %s93
      %p100 = scmp.eq.s32.totalorder %s20, 1
      %p101 = por %p99, %p100
      %p102 = scmp.ne.s32.totalorder %s93, %s94
      %p103 = scmp.eq.s32.totalorder %s20, 0
      %p104 = por %p102, %p103
      %p105 = scmp.ne.s32.totalorder %s93, %s94
      %p106 = scmp.eq.s32.totalorder %s21, 1
      %p107 = por %p105, %p106
      %p109 = scmp.ne.s32.totalorder %s94, %s108
      %p110 = scmp.eq.s32.totalorder %s21, 0
      %p111 = por %p109, %p110
      %s113 = sadd.s32 %s112, 1
      %p116 = scmp.eq.s32.totalorder %s15, 1
      %p117 = scmp.ne.s32.totalorder %s112, %s114
      %p118 = scmp.eq.s32.totalorder %s15, 0
      %p119 = por %p117, %p118
      %p120 = scmp.ne.s32.totalorder %s112, %s114
      %p121 = scmp.eq.s32.totalorder %s20, 1
      %p122 = por %p120, %p121
      %p123 = scmp.ne.s32.totalorder %s114, %s115
      %p124 = scmp.eq.s32.totalorder %s20, 0
      %p125 = por %p123, %p124
      %p126 = scmp.ne.s32.totalorder %s114, %s115
      %p127 = scmp.eq.s32.totalorder %s21, 1
      %p128 = por %p126, %p127
      %p130 = scmp.ne.s32.totalorder %s115, %s129
      %p131 = scmp.eq.s32.totalorder %s21, 0
      %p132 = por %p130, %p131
      %s134 = sadd.s32 %s133, 1
      %p137 = scmp.eq.s32.totalorder %s15, 1
      %p138 = scmp.ne.s32.totalorder %s133, %s135
      %p139 = scmp.eq.s32.totalorder %s15, 0
      %p140 = por %p138, %p139
      %p141 = scmp.ne.s32.totalorder %s133, %s135
      %p142 = scmp.eq.s32.totalorder %s20, 1
      %p143 = por %p141, %p142
      %p144 = scmp.ne.s32.totalorder %s135, %s136
      %p145 = scmp.eq.s32.totalorder %s20, 0
      %p146 = por %p144, %p145
      %p147 = scmp.ne.s32.totalorder %s135, %s136
      %p148 = scmp.eq.s32.totalorder %s21, 1
      %p149 = por %p147, %p148
      %p151 = scmp.ne.s32.totalorder %s136, %s150
      %p152 = scmp.eq.s32.totalorder %s21, 0
      %p153 = por %p151, %p152
      %s154 = ssub.s32 %s15, %s22
      %p155 = scmp.eq.s32.totalorder %s154, 0
      %s157 = sadd.s32 %s156, 1
      %s158 = scalar_select %p155, %s156, %s157
      %p161 = pneg %p155
      %p162 = scmp.eq.s32.totalorder %s15, 1
      %p163 = por %p161, %p162
      %p164 = scmp.ne.s32.totalorder %s156, %s159
      %p165 = scmp.eq.s32.totalorder %s15, 0
      %p166 = por %p164, %p165
      %p167 = scmp.ne.s32.totalorder %s156, %s159
      %p168 = scmp.eq.s32.totalorder %s20, 1
      %p169 = por %p167, %p168
      %p170 = scmp.ne.s32.totalorder %s159, %s160
      %p171 = scmp.eq.s32.totalorder %s20, 0
      %p172 = por %p170, %p171
      %p173 = scmp.ne.s32.totalorder %s159, %s160
      %p174 = scmp.eq.s32.totalorder %s21, 1
      %p175 = por %p173, %p174
      %p177 = scmp.ne.s32.totalorder %s160, %s176
      %p178 = scmp.eq.s32.totalorder %s21, 0
      %p179 = por %p177, %p178
      %p180 = scmp.le.s32.totalorder 1, %s15
      %p181 = scmp.lt.s32.totalorder %s15, 3
      %p182 = pnand %p180, %p181
      %p183 = pneg %p182
      // Predicated region
      $region9: #{tpu_custom_call.1} parent=5 // pred_check
        _
      $region10: #{tpu_custom_call.1} parent=5 // pred_check_branch
        %185 = sbr.rel (%p182) target = $region12
      $region11: #{tpu_custom_call.1} parent=5 // pred_region
        %s186 = ssub.s32 %s15, 1
        // Predicated region
        $region13: #{tpu_custom_call.1} parent=11 // pred_check
          %p187 = pneg %p62
        $region14: #{tpu_custom_call.1} parent=11 // pred_check_branch
          %189 = sbr.rel (%p187) target = $region16
        $region15: #{tpu_custom_call.1} parent=11 // pred_region
          _
        $region16: #{tpu_custom_call.1} parent=11 // pred_fallthru
          _
        // Predicated region
        $region17: #{tpu_custom_call.1} parent=11 // pred_check
          %p190 = pneg %p83
        $region18: #{tpu_custom_call.1} parent=11 // pred_check_branch
          %192 = sbr.rel (%p190) target = $region20
        $region19: #{tpu_custom_call.1} parent=11 // pred_region
          _
        $region20: #{tpu_custom_call.1} parent=11 // pred_fallthru
          _
        // Predicated region
        $region21: #{tpu_custom_call.1} parent=11 // pred_check
          %p193 = pneg %p104
        $region22: #{tpu_custom_call.1} parent=11 // pred_check_branch
          %195 = sbr.rel (%p193) target = $region24
        $region23: #{tpu_custom_call.1} parent=11 // pred_region
          _
        $region24: #{tpu_custom_call.1} parent=11 // pred_fallthru
          _
        // Predicated region
        $region25: #{tpu_custom_call.1} parent=11 // pred_check
          %p196 = pneg %p125
        $region26: #{tpu_custom_call.1} parent=11 // pred_check_branch
          %198 = sbr.rel (%p196) target = $region28
        $region27: #{tpu_custom_call.1} parent=11 // pred_region
          _
        $region28: #{tpu_custom_call.1} parent=11 // pred_fallthru
          _
        // Predicated region
        $region29: #{tpu_custom_call.1} parent=11 // pred_check
          %p199 = pneg %p146
        $region30: #{tpu_custom_call.1} parent=11 // pred_check_branch
          %201 = sbr.rel (%p199) target = $region32
        $region31: #{tpu_custom_call.1} parent=11 // pred_region
          _
        $region32: #{tpu_custom_call.1} parent=11 // pred_fallthru
          _
      $region12: #{tpu_custom_call.1} parent=5 // pred_fallthru
        _
      %p202 = scmp.lt.s32.totalorder %s15, 2
      // Predicated region
      $region33: #{tpu_custom_call.1} parent=5 // pred_check
        %p203 = pneg %p202
      $region34: #{tpu_custom_call.1} parent=5 // pred_check_branch
        %205 = sbr.rel (%p203) target = $region36
      $region35: #{tpu_custom_call.1} parent=5 // pred_region
        // Predicated region
        $region37: #{tpu_custom_call.1} parent=35 // pred_check
          %p206 = pneg %p35
        $region38: #{tpu_custom_call.1} parent=35 // pred_check_branch
          %208 = sbr.rel (%p206) target = $region40
        $region39: #{tpu_custom_call.1} parent=35 // pred_region
          %p209 = scmp.lt.s32.totalorder %s15, 1
          %s210 = scalar_select %p209, %s15, 1
          %s211 = smul.addr %s210, 54
          %s212 = smul.addr %s211, 4
          %s213 = scalar_lea.vmem %s0, %s212
        $region40: #{tpu_custom_call.1} parent=35 // pred_fallthru
          _
      $region36: #{tpu_custom_call.1} parent=5 // pred_fallthru
        _
      %p214 = scmp.le.s32.totalorder 1, %s15
      %p215 = scmp.lt.s32.totalorder %s15, 3
      %p216 = pnand %p214, %p215
      %p217 = pneg %p216
      // Predicated region
      $region41: #{tpu_custom_call.1} parent=5 // pred_check
        _
      $region42: #{tpu_custom_call.1} parent=5 // pred_check_branch
        %219 = sbr.rel (%p216) target = $region44
      $region43: #{tpu_custom_call.1} parent=5 // pred_region
        %s220 = ssub.s32 %s15, 1
        %p221 = scmp.lt.s32.totalorder %s20, 1
        %s222 = scalar_select %p221, %s20, 1
        %s223 = smul.addr %s222, 54
        %s224 = smul.addr %s223, 4
        %s225 = scalar_lea.vmem %s0, %s224
        %p226 = pneg %p41
        %p227 = pneg %p38
        %p228 = pneg %p62
        %p229 = pneg %p59
        %p230 = pneg %p83
        %p231 = pneg %p80
        %p232 = pneg %p104
        %p233 = pneg %p101
        %p234 = pneg %p125
        %p235 = pneg %p122
        %p236 = pneg %p146
        %p237 = pneg %p143
        %p238 = pneg %p172
        %p239 = pneg %p169
        %s240 = sand.u32 %s159, 1
        %s241 = scalar_lea.sflag [#allocation5], %s240
        %s242 = sand.u32 %s159, 1
        %s243 = smul.addr %s242, 64
        %s244 = scalar_lea.vmem [#allocation4], %s243
        %p245 = scmp.lt.s32.totalorder %s20, 1
        %s246 = scalar_select %p245, %s20, 1
        %s247 = smul.addr %s246, 54
        %s248 = smul.addr %s247, 4
        %s249 = scalar_lea.vmem %s0, %s248
        %vm251 = vcmask 60416
        %252 = vst.msk [vmem:[#allocation2] sm:$0xf] %vm251, 0
        %253 = vst.msk [vmem:[#allocation2 + $0x4] sm:$0xf] %vm251, 0
        %254 = vst.msk [vmem:[#allocation2 + $0x8] sm:$0xf] %vm251, 0
        %s255 = scalar_lea.vmem [#allocation2], 204
        %256 = vst.msk [vmem:[%s255] sm:$0xf] %vm251, 0
        %257 = vst.msk [vmem:[%s255 + $0x4] sm:$0xf] %vm251, 0
        %258 = vst.msk [vmem:[%s255 + $0x8] sm:$0xf] %vm251, 0
        %vm259 = vcmask 57344
        %vm260 = vsmask.f32 256
        %vm261 = vmand %vm259, %vm260
        %v262 = vld [vmem:[#allocation2] sm:$0x1]
        %v263 = vsel %vm261, 0, %v262
        %264 = vst [vmem:[#allocation2] sm:$0x1] %v263
        %v265 = vld [vmem:[#allocation2 + $0xc] sm:$0x1]
        %v266 = vsel %vm261, 0, %v265
        %267 = vst [vmem:[#allocation2 + $0xc] sm:$0x1] %v266
        %v268 = vld [vmem:[#allocation2 + $0x18] sm:$0x1]
        %v269 = vsel %vm261, 0, %v268
        %270 = vst [vmem:[#allocation2 + $0x18] sm:$0x1] %v269
        %v271 = vld [vmem:[#allocation2 + $0x24] sm:$0x1]
        %v272 = vsel %vm261, 0, %v271
        %273 = vst [vmem:[#allocation2 + $0x24] sm:$0x1] %v272
        %v274 = vld [vmem:[#allocation2 + $0x30] sm:$0x1]
        %v275 = vsel %vm261, 0, %v274
        %276 = vst [vmem:[#allocation2 + $0x30] sm:$0x1] %v275
        %v277 = vld [vmem:[#allocation2 + $0x3c] sm:$0x1]
        %v278 = vsel %vm261, 0, %v277
        %279 = vst [vmem:[#allocation2 + $0x3c] sm:$0x1] %v278
        %v280 = vld [vmem:[#allocation2 + $0x48] sm:$0x1]
        %v281 = vsel %vm261, 0, %v280
        %282 = vst [vmem:[#allocation2 + $0x48] sm:$0x1] %v281
        %v283 = vld [vmem:[#allocation2 + $0x54] sm:$0x1]
        %v284 = vsel %vm261, 0, %v283
        %285 = vst [vmem:[#allocation2 + $0x54] sm:$0x1] %v284
        %v286 = vld [vmem:[#allocation2 + $0x60] sm:$0x1]
        %v287 = vsel %vm261, 0, %v286
        %288 = vst [vmem:[#allocation2 + $0x60] sm:$0x1] %v287
        %v289 = vld [vmem:[#allocation2 + $0x6c] sm:$0x1]
        %v290 = vsel %vm261, 0, %v289
        %291 = vst [vmem:[#allocation2 + $0x6c] sm:$0x1] %v290
        %v292 = vld [vmem:[#allocation2 + $0x78] sm:$0x1]
        %v293 = vsel %vm261, 0, %v292
        %294 = vst [vmem:[#allocation2 + $0x78] sm:$0x1] %v293
        %v295 = vld [vmem:[#allocation2 + $0x84] sm:$0x1]
        %v296 = vsel %vm261, 0, %v295
        %297 = vst [vmem:[#allocation2 + $0x84] sm:$0x1] %v296
        %v298 = vld [vmem:[#allocation2 + $0x90] sm:$0x1]
        %v299 = vsel %vm261, 0, %v298
        %300 = vst [vmem:[#allocation2 + $0x90] sm:$0x1] %v299
        %v301 = vld [vmem:[#allocation2 + $0x9c] sm:$0x1]
        %v302 = vsel %vm261, 0, %v301
        %303 = vst [vmem:[#allocation2 + $0x9c] sm:$0x1] %v302
        %v304 = vld [vmem:[#allocation2 + $0xa8] sm:$0x1]
        %v305 = vsel %vm261, 0, %v304
        %306 = vst [vmem:[#allocation2 + $0xa8] sm:$0x1] %v305
        %v307 = vld [vmem:[#allocation2 + $0xb4] sm:$0x1]
        %v308 = vsel %vm261, 0, %v307
        %309 = vst [vmem:[#allocation2 + $0xb4] sm:$0x1] %v308
        %v310 = vld [vmem:[#allocation2 + $0xc0] sm:$0x1]
        %v311 = vsel %vm261, 0, %v310
        %312 = vst [vmem:[#allocation2 + $0xc0] sm:$0x1] %v311
        %v313 = vld [vmem:[#allocation2 + $0xcc] sm:$0x1]
        %v314 = vsel %vm261, 0, %v313
        %315 = vst [vmem:[#allocation2 + $0xcc] sm:$0x1] %v314
        %vm316 = vsmask.f32 7938
        %vm317 = vmand %vm259, %vm316
        %v318 = vld [vmem:[#allocation2 + $0x8] sm:$0x1]
        %v319 = vsel %vm317, 0, %v318
        %320 = vst [vmem:[#allocation2 + $0x8] sm:$0x1] %v319
        %v321 = vld [vmem:[#allocation2 + $0x14] sm:$0x1]
        %v322 = vsel %vm317, 0, %v321
        %323 = vst [vmem:[#allocation2 + $0x14] sm:$0x1] %v322
        %v324 = vld [vmem:[#allocation2 + $0x20] sm:$0x1]
        %v325 = vsel %vm317, 0, %v324
        %326 = vst [vmem:[#allocation2 + $0x20] sm:$0x1] %v325
        %v327 = vld [vmem:[#allocation2 + $0x2c] sm:$0x1]
        %v328 = vsel %vm317, 0, %v327
        %329 = vst [vmem:[#allocation2 + $0x2c] sm:$0x1] %v328
        %v330 = vld [vmem:[#allocation2 + $0x38] sm:$0x1]
        %v331 = vsel %vm317, 0, %v330
        %332 = vst [vmem:[#allocation2 + $0x38] sm:$0x1] %v331
        %v333 = vld [vmem:[#allocation2 + $0x44] sm:$0x1]
        %v334 = vsel %vm317, 0, %v333
        %335 = vst [vmem:[#allocation2 + $0x44] sm:$0x1] %v334
        %v336 = vld [vmem:[#allocation2 + $0x50] sm:$0x1]
        %v337 = vsel %vm317, 0, %v336
        %338 = vst [vmem:[#allocation2 + $0x50] sm:$0x1] %v337
        %v339 = vld [vmem:[#allocation2 + $0x5c] sm:$0x1]
        %v340 = vsel %vm317, 0, %v339
        %341 = vst [vmem:[#allocation2 + $0x5c] sm:$0x1] %v340
        %v342 = vld [vmem:[#allocation2 + $0x68] sm:$0x1]
        %v343 = vsel %vm317, 0, %v342
        %344 = vst [vmem:[#allocation2 + $0x68] sm:$0x1] %v343
        %v345 = vld [vmem:[#allocation2 + $0x74] sm:$0x1]
        %v346 = vsel %vm317, 0, %v345
        %347 = vst [vmem:[#allocation2 + $0x74] sm:$0x1] %v346
        %v348 = vld [vmem:[#allocation2 + $0x80] sm:$0x1]
        %v349 = vsel %vm317, 0, %v348
        %350 = vst [vmem:[#allocation2 + $0x80] sm:$0x1] %v349
        %v351 = vld [vmem:[#allocation2 + $0x8c] sm:$0x1]
        %v352 = vsel %vm317, 0, %v351
        %353 = vst [vmem:[#allocation2 + $0x8c] sm:$0x1] %v352
        %v354 = vld [vmem:[#allocation2 + $0x98] sm:$0x1]
        %v355 = vsel %vm317, 0, %v354
        %356 = vst [vmem:[#allocation2 + $0x98] sm:$0x1] %v355
        %v357 = vld [vmem:[#allocation2 + $0xa4] sm:$0x1]
        %v358 = vsel %vm317, 0, %v357
        %359 = vst [vmem:[#allocation2 + $0xa4] sm:$0x1] %v358
        %v360 = vld [vmem:[#allocation2 + $0xb0] sm:$0x1]
        %v361 = vsel %vm317, 0, %v360
        %362 = vst [vmem:[#allocation2 + $0xb0] sm:$0x1] %v361
        %v363 = vld [vmem:[#allocation2 + $0xbc] sm:$0x1]
        %v364 = vsel %vm317, 0, %v363
        %365 = vst [vmem:[#allocation2 + $0xbc] sm:$0x1] %v364
        %v366 = vld [vmem:[#allocation2 + $0xc8] sm:$0x1]
        %v367 = vsel %vm317, 0, %v366
        %368 = vst [vmem:[#allocation2 + $0xc8] sm:$0x1] %v367
        %v369 = vld [vmem:[#allocation2 + $0xd4] sm:$0x1]
        %v370 = vsel %vm317, 0, %v369
        %371 = vst [vmem:[#allocation2 + $0xd4] sm:$0x1] %v370
        %v372 = vld [vmem:[%s249] sm:$0xf]
        %v373 = vld [vmem:[%s249 + $0x4] sm:$0xf]
        %v374 = vld [vmem:[%s249 + $0xc] sm:$0xf]
        %v375 = vld [vmem:[%s249 + $0x10] sm:$0xf]
        %v376 = vld [vmem:[%s249 + $0x18] sm:$0xf]
        %v377 = vld [vmem:[%s249 + $0x1c] sm:$0xf]
        %v378 = vld [vmem:[%s249 + $0x24] sm:$0xf]
        %v379 = vld [vmem:[%s249 + $0x28] sm:$0xf]
        %v380 = vld [vmem:[%s249 + $0x30] sm:$0xf]
        %v381 = vld [vmem:[%s249 + $0x34] sm:$0xf]
        %v382 = vld [vmem:[%s249 + $0x3c] sm:$0xf]
        %v383 = vld [vmem:[%s249 + $0x40] sm:$0xf]
        %v384 = vld [vmem:[%s249 + $0x48] sm:$0xf]
        %v385 = vld [vmem:[%s249 + $0x4c] sm:$0xf]
        %v386 = vld [vmem:[%s249 + $0x54] sm:$0xf]
        %v387 = vld [vmem:[%s249 + $0x58] sm:$0xf]
        %v388 = vld [vmem:[%s249 + $0x60] sm:$0xf]
        %v389 = vld [vmem:[%s249 + $0x64] sm:$0xf]
        %v390 = vld [vmem:[%s249 + $0x6c] sm:$0xf]
        %v391 = vld [vmem:[%s249 + $0x70] sm:$0xf]
        %v392 = vld [vmem:[%s249 + $0x78] sm:$0xf]
        %v393 = vld [vmem:[%s249 + $0x7c] sm:$0xf]
        %v394 = vld [vmem:[%s249 + $0x84] sm:$0xf]
        %v395 = vld [vmem:[%s249 + $0x88] sm:$0xf]
        %v396 = vld [vmem:[%s249 + $0x90] sm:$0xf]
        %v397 = vld [vmem:[%s249 + $0x94] sm:$0xf]
        %v398 = vld [vmem:[%s249 + $0x9c] sm:$0xf]
        %v399 = vld [vmem:[%s249 + $0xa0] sm:$0xf]
        %v400 = vld [vmem:[%s249 + $0xa8] sm:$0xf]
        %v401 = vld [vmem:[%s249 + $0xac] sm:$0xf]
        %v402 = vld [vmem:[%s249 + $0xb4] sm:$0xf]
        %v403 = vld [vmem:[%s249 + $0xb8] sm:$0xf]
        %v404 = vld [vmem:[%s249 + $0x8] sm:$0x1]
        %v405 = vld [vmem:[%s249 + $0x14] sm:$0x1]
        %v406 = vld [vmem:[%s249 + $0x20] sm:$0x1]
        %v407 = vld [vmem:[%s249 + $0x2c] sm:$0x1]
        %v408 = vld [vmem:[%s249 + $0x38] sm:$0x1]
        %v409 = vld [vmem:[%s249 + $0x44] sm:$0x1]
        %v410 = vld [vmem:[%s249 + $0x50] sm:$0x1]
        %v411 = vld [vmem:[%s249 + $0x5c] sm:$0x1]
        %v412 = vld [vmem:[%s249 + $0x68] sm:$0x1]
        %v413 = vld [vmem:[%s249 + $0x74] sm:$0x1]
        %v414 = vld [vmem:[%s249 + $0x80] sm:$0x1]
        %v415 = vld [vmem:[%s249 + $0x8c] sm:$0x1]
        %v416 = vld [vmem:[%s249 + $0x98] sm:$0x1]
        %v417 = vld [vmem:[%s249 + $0xa4] sm:$0x1]
        %v418 = vld [vmem:[%s249 + $0xb0] sm:$0x1]
        %v419 = vld [vmem:[%s249 + $0xbc] sm:$0x1]
        %vm420 = vsmask.f32 3328
        %vm421 = vsmask.f32 7440
        %vm422 = vmor %vm420, %vm421
        %v424 = vshrl.u32 %v372, 16
        %v426 = vrot.slane %v424, 4
        %v427 = vshll.u32 %v372, 16
        %v429 = vrot.slane %v427, 5
        %v430 = vor.u32 %v426, %v429
        %v431 = vrot.slane %v430, 4
        %v433 = vshll.u32 %v373, 16
        %v435 = vrot.slane %v433, 5
        %v436 = vsel %vm422, %v431, %v435
        %v437 = vshrl.u32 %v373, 16
        %v439 = vrot.slane %v437, 4
        %v440 = vor.u32 %v439, %v435
        %v441 = vrot.slane %v440, 4
        %v443 = vshll.u32 %v404, 16
        %v445 = vrot.slane %v443, 5
        %v446 = vsel %vm422, %v441, %v445
        %v448 = vshrl.u32 %v374, 16
        %v450 = vrot.slane %v448, 4
        %v451 = vshll.u32 %v374, 16
        %v453 = vrot.slane %v451, 5
        %v454 = vor.u32 %v450, %v453
        %v455 = vrot.slane %v454, 4
        %v457 = vshll.u32 %v375, 16
        %v459 = vrot.slane %v457, 5
        %v460 = vsel %vm422, %v455, %v459
        %v461 = vshrl.u32 %v375, 16
        %v463 = vrot.slane %v461, 4
        %v464 = vor.u32 %v463, %v459
        %v465 = vrot.slane %v464, 4
        %v467 = vshll.u32 %v405, 16
        %v469 = vrot.slane %v467, 5
        %v470 = vsel %vm422, %v465, %v469
        %v472 = vshrl.u32 %v376, 16
        %v474 = vrot.slane %v472, 4
        %v475 = vshll.u32 %v376, 16
        %v477 = vrot.slane %v475, 5
        %v478 = vor.u32 %v474, %v477
        %v479 = vrot.slane %v478, 4
        %v481 = vshll.u32 %v377, 16
        %v483 = vrot.slane %v481, 5
        %v484 = vsel %vm422, %v479, %v483
        %v485 = vshrl.u32 %v377, 16
        %v487 = vrot.slane %v485, 4
        %v488 = vor.u32 %v487, %v483
        %v489 = vrot.slane %v488, 4
        %v491 = vshll.u32 %v406, 16
        %v493 = vrot.slane %v491, 5
        %v494 = vsel %vm422, %v489, %v493
        %v496 = vshrl.u32 %v378, 16
        %v498 = vrot.slane %v496, 4
        %v499 = vshll.u32 %v378, 16
        %v501 = vrot.slane %v499, 5
        %v502 = vor.u32 %v498, %v501
        %v503 = vrot.slane %v502, 4
        %v505 = vshll.u32 %v379, 16
        %v507 = vrot.slane %v505, 5
        %v508 = vsel %vm422, %v503, %v507
        %v509 = vshrl.u32 %v379, 16
        %v511 = vrot.slane %v509, 4
        %v512 = vor.u32 %v511, %v507
        %v513 = vrot.slane %v512, 4
        %v515 = vshll.u32 %v407, 16
        %v517 = vrot.slane %v515, 5
        %v518 = vsel %vm422, %v513, %v517
        %v520 = vshrl.u32 %v380, 16
        %v522 = vrot.slane %v520, 4
        %v523 = vshll.u32 %v380, 16
        %v525 = vrot.slane %v523, 5
        %v526 = vor.u32 %v522, %v525
        %v527 = vrot.slane %v526, 4
        %v529 = vshll.u32 %v381, 16
        %v531 = vrot.slane %v529, 5
        %v532 = vsel %vm422, %v527, %v531
        %v533 = vshrl.u32 %v381, 16
        %v535 = vrot.slane %v533, 4
        %v536 = vor.u32 %v535, %v531
        %v537 = vrot.slane %v536, 4
        %v539 = vshll.u32 %v408, 16
        %v541 = vrot.slane %v539, 5
        %v542 = vsel %vm422, %v537, %v541
        %v544 = vshrl.u32 %v382, 16
        %v546 = vrot.slane %v544, 4
        %v547 = vshll.u32 %v382, 16
        %v549 = vrot.slane %v547, 5
        %v550 = vor.u32 %v546, %v549
        %v551 = vrot.slane %v550, 4
        %v553 = vshll.u32 %v383, 16
        %v555 = vrot.slane %v553, 5
        %v556 = vsel %vm422, %v551, %v555
        %v557 = vshrl.u32 %v383, 16
        %v559 = vrot.slane %v557, 4
        %v560 = vor.u32 %v559, %v555
        %v561 = vrot.slane %v560, 4
        %v563 = vshll.u32 %v409, 16
        %v565 = vrot.slane %v563, 5
        %v566 = vsel %vm422, %v561, %v565
        %v568 = vshrl.u32 %v384, 16
        %v570 = vrot.slane %v568, 4
        %v571 = vshll.u32 %v384, 16
        %v573 = vrot.slane %v571, 5
        %v574 = vor.u32 %v570, %v573
        %v575 = vrot.slane %v574, 4
        %v577 = vshll.u32 %v385, 16
        %v579 = vrot.slane %v577, 5
        %v580 = vsel %vm422, %v575, %v579
        %v581 = vshrl.u32 %v385, 16
        %v583 = vrot.slane %v581, 4
        %v584 = vor.u32 %v583, %v579
        %v585 = vrot.slane %v584, 4
        %v587 = vshll.u32 %v410, 16
        %v589 = vrot.slane %v587, 5
        %v590 = vsel %vm422, %v585, %v589
        %v592 = vshrl.u32 %v386, 16
        %v594 = vrot.slane %v592, 4
        %v595 = vshll.u32 %v386, 16
        %v597 = vrot.slane %v595, 5
        %v598 = vor.u32 %v594, %v597
        %v599 = vrot.slane %v598, 4
        %v601 = vshll.u32 %v387, 16
        %v603 = vrot.slane %v601, 5
        %v604 = vsel %vm422, %v599, %v603
        %v605 = vshrl.u32 %v387, 16
        %v607 = vrot.slane %v605, 4
        %v608 = vor.u32 %v607, %v603
        %v609 = vrot.slane %v608, 4
        %v611 = vshll.u32 %v411, 16
        %v613 = vrot.slane %v611, 5
        %v614 = vsel %vm422, %v609, %v613
        %v616 = vshrl.u32 %v388, 16
        %v618 = vrot.slane %v616, 4
        %v619 = vshll.u32 %v388, 16
        %v621 = vrot.slane %v619, 5
        %v622 = vor.u32 %v618, %v621
        %v623 = vrot.slane %v622, 4
        %v625 = vshll.u32 %v389, 16
        %v627 = vrot.slane %v625, 5
        %v628 = vsel %vm422, %v623, %v627
        %v629 = vshrl.u32 %v389, 16
        %v631 = vrot.slane %v629, 4
        %v632 = vor.u32 %v631, %v627
        %v633 = vrot.slane %v632, 4
        %v635 = vshll.u32 %v412, 16
        %v637 = vrot.slane %v635, 5
        %v638 = vsel %vm422, %v633, %v637
        %v640 = vshrl.u32 %v390, 16
        %v642 = vrot.slane %v640, 4
        %v643 = vshll.u32 %v390, 16
        %v645 = vrot.slane %v643, 5
        %v646 = vor.u32 %v642, %v645
        %v647 = vrot.slane %v646, 4
        %v649 = vshll.u32 %v391, 16
        %v651 = vrot.slane %v649, 5
        %v652 = vsel %vm422, %v647, %v651
        %v653 = vshrl.u32 %v391, 16
        %v655 = vrot.slane %v653, 4
        %v656 = vor.u32 %v655, %v651
        %v657 = vrot.slane %v656, 4
        %v659 = vshll.u32 %v413, 16
        %v661 = vrot.slane %v659, 5
        %v662 = vsel %vm422, %v657, %v661
        %v664 = vshrl.u32 %v392, 16
        %v666 = vrot.slane %v664, 4
        %v667 = vshll.u32 %v392, 16
        %v669 = vrot.slane %v667, 5
        %v670 = vor.u32 %v666, %v669
        %v671 = vrot.slane %v670, 4
        %v673 = vshll.u32 %v393, 16
        %v675 = vrot.slane %v673, 5
        %v676 = vsel %vm422, %v671, %v675
        %v677 = vshrl.u32 %v393, 16
        %v679 = vrot.slane %v677, 4
        %v680 = vor.u32 %v679, %v675
        %v681 = vrot.slane %v680, 4
        %v683 = vshll.u32 %v414, 16
        %v685 = vrot.slane %v683, 5
        %v686 = vsel %vm422, %v681, %v685
        %v688 = vshrl.u32 %v394, 16
        %v690 = vrot.slane %v688, 4
        %v691 = vshll.u32 %v394, 16
        %v693 = vrot.slane %v691, 5
        %v694 = vor.u32 %v690, %v693
        %v695 = vrot.slane %v694, 4
        %v697 = vshll.u32 %v395, 16
        %v699 = vrot.slane %v697, 5
        %v700 = vsel %vm422, %v695, %v699
        %v701 = vshrl.u32 %v395, 16
        %v703 = vrot.slane %v701, 4
        %v704 = vor.u32 %v703, %v699
        %v705 = vrot.slane %v704, 4
        %v707 = vshll.u32 %v415, 16
        %v709 = vrot.slane %v707, 5
        %v710 = vsel %vm422, %v705, %v709
        %v712 = vshrl.u32 %v396, 16
        %v714 = vrot.slane %v712, 4
        %v715 = vshll.u32 %v396, 16
        %v717 = vrot.slane %v715, 5
        %v718 = vor.u32 %v714, %v717
        %v719 = vrot.slane %v718, 4
        %v721 = vshll.u32 %v397, 16
        %v723 = vrot.slane %v721, 5
        %v724 = vsel %vm422, %v719, %v723
        %v725 = vshrl.u32 %v397, 16
        %v727 = vrot.slane %v725, 4
        %v728 = vor.u32 %v727, %v723
        %v729 = vrot.slane %v728, 4
        %v731 = vshll.u32 %v416, 16
        %v733 = vrot.slane %v731, 5
        %v734 = vsel %vm422, %v729, %v733
        %v736 = vshrl.u32 %v398, 16
        %v738 = vrot.slane %v736, 4
        %v739 = vshll.u32 %v398, 16
        %v741 = vrot.slane %v739, 5
        %v742 = vor.u32 %v738, %v741
        %v743 = vrot.slane %v742, 4
        %v745 = vshll.u32 %v399, 16
        %v747 = vrot.slane %v745, 5
        %v748 = vsel %vm422, %v743, %v747
        %v749 = vshrl.u32 %v399, 16
        %v751 = vrot.slane %v749, 4
        %v752 = vor.u32 %v751, %v747
        %v753 = vrot.slane %v752, 4
        %v755 = vshll.u32 %v417, 16
        %v757 = vrot.slane %v755, 5
        %v758 = vsel %vm422, %v753, %v757
        %v760 = vshrl.u32 %v400, 16
        %v762 = vrot.slane %v760, 4
        %v763 = vshll.u32 %v400, 16
        %v765 = vrot.slane %v763, 5
        %v766 = vor.u32 %v762, %v765
        %v767 = vrot.slane %v766, 4
        %v769 = vshll.u32 %v401, 16
        %v771 = vrot.slane %v769, 5
        %v772 = vsel %vm422, %v767, %v771
        %v773 = vshrl.u32 %v401, 16
        %v775 = vrot.slane %v773, 4
        %v776 = vor.u32 %v775, %v771
        %v777 = vrot.slane %v776, 4
        %v779 = vshll.u32 %v418, 16
        %v781 = vrot.slane %v779, 5
        %v782 = vsel %vm422, %v777, %v781
        %v784 = vshrl.u32 %v402, 16
        %v786 = vrot.slane %v784, 4
        %v787 = vshll.u32 %v402, 16
        %v789 = vrot.slane %v787, 5
        %v790 = vor.u32 %v786, %v789
        %v791 = vrot.slane %v790, 4
        %v793 = vshll.u32 %v403, 16
        %v795 = vrot.slane %v793, 5
        %v796 = vsel %vm422, %v791, %v795
        %v797 = vshrl.u32 %v403, 16
        %v799 = vrot.slane %v797, 4
        %v800 = vor.u32 %v799, %v795
        %v801 = vrot.slane %v800, 4
        %v803 = vshll.u32 %v419, 16
        %v805 = vrot.slane %v803, 5
        %v806 = vsel %vm422, %v801, %v805
        %v807 = vld [vmem:[%s249] sm:$0xe]
        %v808 = vld [vmem:[%s249 + $0xc] sm:$0xe]
        %v809 = vld [vmem:[%s249 + $0x18] sm:$0xe]
        %v810 = vld [vmem:[%s249 + $0x24] sm:$0xe]
        %v811 = vld [vmem:[%s249 + $0x30] sm:$0xe]
        %v812 = vld [vmem:[%s249 + $0x3c] sm:$0xe]
        %v813 = vld [vmem:[%s249 + $0x48] sm:$0xe]
        %v814 = vld [vmem:[%s249 + $0x54] sm:$0xe]
        %v815 = vld [vmem:[%s249 + $0x60] sm:$0xe]
        %v816 = vld [vmem:[%s249 + $0x6c] sm:$0xe]
        %v817 = vld [vmem:[%s249 + $0x78] sm:$0xe]
        %v818 = vld [vmem:[%s249 + $0x84] sm:$0xe]
        %v819 = vld [vmem:[%s249 + $0x90] sm:$0xe]
        %v820 = vld [vmem:[%s249 + $0x9c] sm:$0xe]
        %v821 = vld [vmem:[%s249 + $0xa8] sm:$0xe]
        %v822 = vld [vmem:[%s249 + $0xb4] sm:$0xe]
        %vm871 = vcmask 1042432
        %vm872 = vcmask 1046532
        %vm873 = vmor %vm871, %vm872
        %v874 = vrot.slane %v807, 5
        %v875 = vrot.slane %v874, 4
        %v876 = vrot.slane %v373, 5
        %v877 = vsel %vm873, %v875, %v876
        %v878 = vrot.slane %v876, 4
        %v879 = vrot.slane %v404, 5
        %v880 = vsel %vm873, %v878, %v879
        %v881 = vrot.slane %v808, 5
        %v882 = vrot.slane %v881, 4
        %v883 = vrot.slane %v375, 5
        %v884 = vsel %vm873, %v882, %v883
        %v885 = vrot.slane %v883, 4
        %v886 = vrot.slane %v405, 5
        %v887 = vsel %vm873, %v885, %v886
        %v888 = vrot.slane %v809, 5
        %v889 = vrot.slane %v888, 4
        %v890 = vrot.slane %v377, 5
        %v891 = vsel %vm873, %v889, %v890
        %v892 = vrot.slane %v890, 4
        %v893 = vrot.slane %v406, 5
        %v894 = vsel %vm873, %v892, %v893
        %v895 = vrot.slane %v810, 5
        %v896 = vrot.slane %v895, 4
        %v897 = vrot.slane %v379, 5
        %v898 = vsel %vm873, %v896, %v897
        %v899 = vrot.slane %v897, 4
        %v900 = vrot.slane %v407, 5
        %v901 = vsel %vm873, %v899, %v900
        %v902 = vrot.slane %v811, 5
        %v903 = vrot.slane %v902, 4
        %v904 = vrot.slane %v381, 5
        %v905 = vsel %vm873, %v903, %v904
        %v906 = vrot.slane %v904, 4
        %v907 = vrot.slane %v408, 5
        %v908 = vsel %vm873, %v906, %v907
        %v909 = vrot.slane %v812, 5
        %v910 = vrot.slane %v909, 4
        %v911 = vrot.slane %v383, 5
        %v912 = vsel %vm873, %v910, %v911
        %v913 = vrot.slane %v911, 4
        %v914 = vrot.slane %v409, 5
        %v915 = vsel %vm873, %v913, %v914
        %v916 = vrot.slane %v813, 5
        %v917 = vrot.slane %v916, 4
        %v918 = vrot.slane %v385, 5
        %v919 = vsel %vm873, %v917, %v918
        %v920 = vrot.slane %v918, 4
        %v921 = vrot.slane %v410, 5
        %v922 = vsel %vm873, %v920, %v921
        %v923 = vrot.slane %v814, 5
        %v924 = vrot.slane %v923, 4
        %v925 = vrot.slane %v387, 5
        %v926 = vsel %vm873, %v924, %v925
        %v927 = vrot.slane %v925, 4
        %v928 = vrot.slane %v411, 5
        %v929 = vsel %vm873, %v927, %v928
        %v930 = vrot.slane %v815, 5
        %v931 = vrot.slane %v930, 4
        %v932 = vrot.slane %v389, 5
        %v933 = vsel %vm873, %v931, %v932
        %v934 = vrot.slane %v932, 4
        %v935 = vrot.slane %v412, 5
        %v936 = vsel %vm873, %v934, %v935
        %v937 = vrot.slane %v816, 5
        %v938 = vrot.slane %v937, 4
        %v939 = vrot.slane %v391, 5
        %v940 = vsel %vm873, %v938, %v939
        %v941 = vrot.slane %v939, 4
        %v942 = vrot.slane %v413, 5
        %v943 = vsel %vm873, %v941, %v942
        %v944 = vrot.slane %v817, 5
        %v945 = vrot.slane %v944, 4
        %v946 = vrot.slane %v393, 5
        %v947 = vsel %vm873, %v945, %v946
        %v948 = vrot.slane %v946, 4
        %v949 = vrot.slane %v414, 5
        %v950 = vsel %vm873, %v948, %v949
        %v951 = vrot.slane %v818, 5
        %v952 = vrot.slane %v951, 4
        %v953 = vrot.slane %v395, 5
        %v954 = vsel %vm873, %v952, %v953
        %v955 = vrot.slane %v953, 4
        %v956 = vrot.slane %v415, 5
        %v957 = vsel %vm873, %v955, %v956
        %v958 = vrot.slane %v819, 5
        %v959 = vrot.slane %v958, 4
        %v960 = vrot.slane %v397, 5
        %v961 = vsel %vm873, %v959, %v960
        %v962 = vrot.slane %v960, 4
        %v963 = vrot.slane %v416, 5
        %v964 = vsel %vm873, %v962, %v963
        %v965 = vrot.slane %v820, 5
        %v966 = vrot.slane %v965, 4
        %v967 = vrot.slane %v399, 5
        %v968 = vsel %vm873, %v966, %v967
        %v969 = vrot.slane %v967, 4
        %v970 = vrot.slane %v417, 5
        %v971 = vsel %vm873, %v969, %v970
        %v972 = vrot.slane %v821, 5
        %v973 = vrot.slane %v972, 4
        %v974 = vrot.slane %v401, 5
        %v975 = vsel %vm873, %v973, %v974
        %v976 = vrot.slane %v974, 4
        %v977 = vrot.slane %v418, 5
        %v978 = vsel %vm873, %v976, %v977
        %v979 = vrot.slane %v822, 5
        %v980 = vrot.slane %v979, 4
        %v981 = vrot.slane %v403, 5
        %v982 = vsel %vm873, %v980, %v981
        %v983 = vrot.slane %v981, 4
        %v984 = vrot.slane %v419, 5
        %v985 = vsel %vm873, %v983, %v984
        %s986 = scalar_lea.vmem %s249, 12
        %v987 = vld [vmem:[%s986] sm:$0xf]
        %v988 = vld [vmem:[%s986 + $0x4] sm:$0xf]
        %v989 = vld [vmem:[%s986 + $0xc] sm:$0xf]
        %v990 = vld [vmem:[%s986 + $0x10] sm:$0xf]
        %v991 = vld [vmem:[%s986 + $0x18] sm:$0xf]
        %v992 = vld [vmem:[%s986 + $0x1c] sm:$0xf]
        %v993 = vld [vmem:[%s986 + $0x24] sm:$0xf]
        %v994 = vld [vmem:[%s986 + $0x28] sm:$0xf]
        %v995 = vld [vmem:[%s986 + $0x30] sm:$0xf]
        %v996 = vld [vmem:[%s986 + $0x34] sm:$0xf]
        %v997 = vld [vmem:[%s986 + $0x3c] sm:$0xf]
        %v998 = vld [vmem:[%s986 + $0x40] sm:$0xf]
        %v999 = vld [vmem:[%s986 + $0x48] sm:$0xf]
        %v1000 = vld [vmem:[%s986 + $0x4c] sm:$0xf]
        %v1001 = vld [vmem:[%s986 + $0x54] sm:$0xf]
        %v1002 = vld [vmem:[%s986 + $0x58] sm:$0xf]
        %v1003 = vld [vmem:[%s986 + $0x60] sm:$0xf]
        %v1004 = vld [vmem:[%s986 + $0x64] sm:$0xf]
        %v1005 = vld [vmem:[%s986 + $0x6c] sm:$0xf]
        %v1006 = vld [vmem:[%s986 + $0x70] sm:$0xf]
        %v1007 = vld [vmem:[%s986 + $0x78] sm:$0xf]
        %v1008 = vld [vmem:[%s986 + $0x7c] sm:$0xf]
        %v1009 = vld [vmem:[%s986 + $0x84] sm:$0xf]
        %v1010 = vld [vmem:[%s986 + $0x88] sm:$0xf]
        %v1011 = vld [vmem:[%s986 + $0x90] sm:$0xf]
        %v1012 = vld [vmem:[%s986 + $0x94] sm:$0xf]
        %v1013 = vld [vmem:[%s986 + $0x9c] sm:$0xf]
        %v1014 = vld [vmem:[%s986 + $0xa0] sm:$0xf]
        %v1015 = vld [vmem:[%s986 + $0xa8] sm:$0xf]
        %v1016 = vld [vmem:[%s986 + $0xac] sm:$0xf]
        %v1017 = vld [vmem:[%s986 + $0xb4] sm:$0xf]
        %v1018 = vld [vmem:[%s986 + $0xb8] sm:$0xf]
        %v1019 = vld [vmem:[%s986 + $0x8] sm:$0x1]
        %v1020 = vld [vmem:[%s986 + $0x14] sm:$0x1]
        %v1021 = vld [vmem:[%s986 + $0x20] sm:$0x1]
        %v1022 = vld [vmem:[%s986 + $0x2c] sm:$0x1]
        %v1023 = vld [vmem:[%s986 + $0x38] sm:$0x1]
        %v1024 = vld [vmem:[%s986 + $0x44] sm:$0x1]
        %v1025 = vld [vmem:[%s986 + $0x50] sm:$0x1]
        %v1026 = vld [vmem:[%s986 + $0x5c] sm:$0x1]
        %v1027 = vld [vmem:[%s986 + $0x68] sm:$0x1]
        %v1028 = vld [vmem:[%s986 + $0x74] sm:$0x1]
        %v1029 = vld [vmem:[%s986 + $0x80] sm:$0x1]
        %v1030 = vld [vmem:[%s986 + $0x8c] sm:$0x1]
        %v1031 = vld [vmem:[%s986 + $0x98] sm:$0x1]
        %v1032 = vld [vmem:[%s986 + $0xa4] sm:$0x1]
        %v1033 = vld [vmem:[%s986 + $0xb0] sm:$0x1]
        %v1034 = vld [vmem:[%s986 + $0xbc] sm:$0x1]
        %v1036 = vshrl.u32 %v987, 16
        %v1038 = vrot.slane %v1036, 4
        %v1039 = vshll.u32 %v987, 16
        %v1041 = vrot.slane %v1039, 5
        %v1042 = vor.u32 %v1038, %v1041
        %v1043 = vrot.slane %v1042, 4
        %v1045 = vshll.u32 %v988, 16
        %v1047 = vrot.slane %v1045, 5
        %v1048 = vsel %vm422, %v1043, %v1047
        %v1049 = vshrl.u32 %v988, 16
        %v1051 = vrot.slane %v1049, 4
        %v1052 = vor.u32 %v1051, %v1047
        %v1053 = vrot.slane %v1052, 4
        %v1055 = vshll.u32 %v1019, 16
        %v1057 = vrot.slane %v1055, 5
        %v1058 = vsel %vm422, %v1053, %v1057
        %v1060 = vshrl.u32 %v989, 16
        %v1062 = vrot.slane %v1060, 4
        %v1063 = vshll.u32 %v989, 16
        %v1065 = vrot.slane %v1063, 5
        %v1066 = vor.u32 %v1062, %v1065
        %v1067 = vrot.slane %v1066, 4
        %v1069 = vshll.u32 %v990, 16
        %v1071 = vrot.slane %v1069, 5
        %v1072 = vsel %vm422, %v1067, %v1071
        %v1073 = vshrl.u32 %v990, 16
        %v1075 = vrot.slane %v1073, 4
        %v1076 = vor.u32 %v1075, %v1071
        %v1077 = vrot.slane %v1076, 4
        %v1079 = vshll.u32 %v1020, 16
        %v1081 = vrot.slane %v1079, 5
        %v1082 = vsel %vm422, %v1077, %v1081
        %v1084 = vshrl.u32 %v991, 16
        %v1086 = vrot.slane %v1084, 4
        %v1087 = vshll.u32 %v991, 16
        %v1089 = vrot.slane %v1087, 5
        %v1090 = vor.u32 %v1086, %v1089
        %v1091 = vrot.slane %v1090, 4
        %v1093 = vshll.u32 %v992, 16
        %v1095 = vrot.slane %v1093, 5
        %v1096 = vsel %vm422, %v1091, %v1095
        %v1097 = vshrl.u32 %v992, 16
        %v1099 = vrot.slane %v1097, 4
        %v1100 = vor.u32 %v1099, %v1095
        %v1101 = vrot.slane %v1100, 4
        %v1103 = vshll.u32 %v1021, 16
        %v1105 = vrot.slane %v1103, 5
        %v1106 = vsel %vm422, %v1101, %v1105
        %v1108 = vshrl.u32 %v993, 16
        %v1110 = vrot.slane %v1108, 4
        %v1111 = vshll.u32 %v993, 16
        %v1113 = vrot.slane %v1111, 5
        %v1114 = vor.u32 %v1110, %v1113
        %v1115 = vrot.slane %v1114, 4
        %v1117 = vshll.u32 %v994, 16
        %v1119 = vrot.slane %v1117, 5
        %v1120 = vsel %vm422, %v1115, %v1119
        %v1121 = vshrl.u32 %v994, 16
        %v1123 = vrot.slane %v1121, 4
        %v1124 = vor.u32 %v1123, %v1119
        %v1125 = vrot.slane %v1124, 4
        %v1127 = vshll.u32 %v1022, 16
        %v1129 = vrot.slane %v1127, 5
        %v1130 = vsel %vm422, %v1125, %v1129
        %v1132 = vshrl.u32 %v995, 16
        %v1134 = vrot.slane %v1132, 4
        %v1135 = vshll.u32 %v995, 16
        %v1137 = vrot.slane %v1135, 5
        %v1138 = vor.u32 %v1134, %v1137
        %v1139 = vrot.slane %v1138, 4
        %v1141 = vshll.u32 %v996, 16
        %v1143 = vrot.slane %v1141, 5
        %v1144 = vsel %vm422, %v1139, %v1143
        %v1145 = vshrl.u32 %v996, 16
        %v1147 = vrot.slane %v1145, 4
        %v1148 = vor.u32 %v1147, %v1143
        %v1149 = vrot.slane %v1148, 4
        %v1151 = vshll.u32 %v1023, 16
        %v1153 = vrot.slane %v1151, 5
        %v1154 = vsel %vm422, %v1149, %v1153
        %v1156 = vshrl.u32 %v997, 16
        %v1158 = vrot.slane %v1156, 4
        %v1159 = vshll.u32 %v997, 16
        %v1161 = vrot.slane %v1159, 5
        %v1162 = vor.u32 %v1158, %v1161
        %v1163 = vrot.slane %v1162, 4
        %v1165 = vshll.u32 %v998, 16
        %v1167 = vrot.slane %v1165, 5
        %v1168 = vsel %vm422, %v1163, %v1167
        %v1169 = vshrl.u32 %v998, 16
        %v1171 = vrot.slane %v1169, 4
        %v1172 = vor.u32 %v1171, %v1167
        %v1173 = vrot.slane %v1172, 4
        %v1175 = vshll.u32 %v1024, 16
        %v1177 = vrot.slane %v1175, 5
        %v1178 = vsel %vm422, %v1173, %v1177
        %v1180 = vshrl.u32 %v999, 16
        %v1182 = vrot.slane %v1180, 4
        %v1183 = vshll.u32 %v999, 16
        %v1185 = vrot.slane %v1183, 5
        %v1186 = vor.u32 %v1182, %v1185
        %v1187 = vrot.slane %v1186, 4
        %v1189 = vshll.u32 %v1000, 16
        %v1191 = vrot.slane %v1189, 5
        %v1192 = vsel %vm422, %v1187, %v1191
        %v1193 = vshrl.u32 %v1000, 16
        %v1195 = vrot.slane %v1193, 4
        %v1196 = vor.u32 %v1195, %v1191
        %v1197 = vrot.slane %v1196, 4
        %v1199 = vshll.u32 %v1025, 16
        %v1201 = vrot.slane %v1199, 5
        %v1202 = vsel %vm422, %v1197, %v1201
        %v1204 = vshrl.u32 %v1001, 16
        %v1206 = vrot.slane %v1204, 4
        %v1207 = vshll.u32 %v1001, 16
        %v1209 = vrot.slane %v1207, 5
        %v1210 = vor.u32 %v1206, %v1209
        %v1211 = vrot.slane %v1210, 4
        %v1213 = vshll.u32 %v1002, 16
        %v1215 = vrot.slane %v1213, 5
        %v1216 = vsel %vm422, %v1211, %v1215
        %v1217 = vshrl.u32 %v1002, 16
        %v1219 = vrot.slane %v1217, 4
        %v1220 = vor.u32 %v1219, %v1215
        %v1221 = vrot.slane %v1220, 4
        %v1223 = vshll.u32 %v1026, 16
        %v1225 = vrot.slane %v1223, 5
        %v1226 = vsel %vm422, %v1221, %v1225
        %v1228 = vshrl.u32 %v1003, 16
        %v1230 = vrot.slane %v1228, 4
        %v1231 = vshll.u32 %v1003, 16
        %v1233 = vrot.slane %v1231, 5
        %v1234 = vor.u32 %v1230, %v1233
        %v1235 = vrot.slane %v1234, 4
        %v1237 = vshll.u32 %v1004, 16
        %v1239 = vrot.slane %v1237, 5
        %v1240 = vsel %vm422, %v1235, %v1239
        %v1241 = vshrl.u32 %v1004, 16
        %v1243 = vrot.slane %v1241, 4
        %v1244 = vor.u32 %v1243, %v1239
        %v1245 = vrot.slane %v1244, 4
        %v1247 = vshll.u32 %v1027, 16
        %v1249 = vrot.slane %v1247, 5
        %v1250 = vsel %vm422, %v1245, %v1249
        %v1252 = vshrl.u32 %v1005, 16
        %v1254 = vrot.slane %v1252, 4
        %v1255 = vshll.u32 %v1005, 16
        %v1257 = vrot.slane %v1255, 5
        %v1258 = vor.u32 %v1254, %v1257
        %v1259 = vrot.slane %v1258, 4
        %v1261 = vshll.u32 %v1006, 16
        %v1263 = vrot.slane %v1261, 5
        %v1264 = vsel %vm422, %v1259, %v1263
        %v1265 = vshrl.u32 %v1006, 16
        %v1267 = vrot.slane %v1265, 4
        %v1268 = vor.u32 %v1267, %v1263
        %v1269 = vrot.slane %v1268, 4
        %v1271 = vshll.u32 %v1028, 16
        %v1273 = vrot.slane %v1271, 5
        %v1274 = vsel %vm422, %v1269, %v1273
        %v1276 = vshrl.u32 %v1007, 16
        %v1278 = vrot.slane %v1276, 4
        %v1279 = vshll.u32 %v1007, 16
        %v1281 = vrot.slane %v1279, 5
        %v1282 = vor.u32 %v1278, %v1281
        %v1283 = vrot.slane %v1282, 4
        %v1285 = vshll.u32 %v1008, 16
        %v1287 = vrot.slane %v1285, 5
        %v1288 = vsel %vm422, %v1283, %v1287
        %v1289 = vshrl.u32 %v1008, 16
        %v1291 = vrot.slane %v1289, 4
        %v1292 = vor.u32 %v1291, %v1287
        %v1293 = vrot.slane %v1292, 4
        %v1295 = vshll.u32 %v1029, 16
        %v1297 = vrot.slane %v1295, 5
        %v1298 = vsel %vm422, %v1293, %v1297
        %v1300 = vshrl.u32 %v1009, 16
        %v1302 = vrot.slane %v1300, 4
        %v1303 = vshll.u32 %v1009, 16
        %v1305 = vrot.slane %v1303, 5
        %v1306 = vor.u32 %v1302, %v1305
        %v1307 = vrot.slane %v1306, 4
        %v1309 = vshll.u32 %v1010, 16
        %v1311 = vrot.slane %v1309, 5
        %v1312 = vsel %vm422, %v1307, %v1311
        %v1313 = vshrl.u32 %v1010, 16
        %v1315 = vrot.slane %v1313, 4
        %v1316 = vor.u32 %v1315, %v1311
        %v1317 = vrot.slane %v1316, 4
        %v1319 = vshll.u32 %v1030, 16
        %v1321 = vrot.slane %v1319, 5
        %v1322 = vsel %vm422, %v1317, %v1321
        %v1324 = vshrl.u32 %v1011, 16
        %v1326 = vrot.slane %v1324, 4
        %v1327 = vshll.u32 %v1011, 16
        %v1329 = vrot.slane %v1327, 5
        %v1330 = vor.u32 %v1326, %v1329
        %v1331 = vrot.slane %v1330, 4
        %v1333 = vshll.u32 %v1012, 16
        %v1335 = vrot.slane %v1333, 5
        %v1336 = vsel %vm422, %v1331, %v1335
        %v1337 = vshrl.u32 %v1012, 16
        %v1339 = vrot.slane %v1337, 4
        %v1340 = vor.u32 %v1339, %v1335
        %v1341 = vrot.slane %v1340, 4
        %v1343 = vshll.u32 %v1031, 16
        %v1345 = vrot.slane %v1343, 5
        %v1346 = vsel %vm422, %v1341, %v1345
        %v1348 = vshrl.u32 %v1013, 16
        %v1350 = vrot.slane %v1348, 4
        %v1351 = vshll.u32 %v1013, 16
        %v1353 = vrot.slane %v1351, 5
        %v1354 = vor.u32 %v1350, %v1353
        %v1355 = vrot.slane %v1354, 4
        %v1357 = vshll.u32 %v1014, 16
        %v1359 = vrot.slane %v1357, 5
        %v1360 = vsel %vm422, %v1355, %v1359
        %v1361 = vshrl.u32 %v1014, 16
        %v1363 = vrot.slane %v1361, 4
        %v1364 = vor.u32 %v1363, %v1359
        %v1365 = vrot.slane %v1364, 4
        %v1367 = vshll.u32 %v1032, 16
        %v1369 = vrot.slane %v1367, 5
        %v1370 = vsel %vm422, %v1365, %v1369
        %v1372 = vshrl.u32 %v1015, 16
        %v1374 = vrot.slane %v1372, 4
        %v1375 = vshll.u32 %v1015, 16
        %v1377 = vrot.slane %v1375, 5
        %v1378 = vor.u32 %v1374, %v1377
        %v1379 = vrot.slane %v1378, 4
        %v1381 = vshll.u32 %v1016, 16
        %v1383 = vrot.slane %v1381, 5
        %v1384 = vsel %vm422, %v1379, %v1383
        %v1385 = vshrl.u32 %v1016, 16
        %v1387 = vrot.slane %v1385, 4
        %v1388 = vor.u32 %v1387, %v1383
        %v1389 = vrot.slane %v1388, 4
        %v1391 = vshll.u32 %v1033, 16
        %v1393 = vrot.slane %v1391, 5
        %v1394 = vsel %vm422, %v1389, %v1393
        %v1396 = vshrl.u32 %v1017, 16
        %v1398 = vrot.slane %v1396, 4
        %v1399 = vshll.u32 %v1017, 16
        %v1401 = vrot.slane %v1399, 5
        %v1402 = vor.u32 %v1398, %v1401
        %v1403 = vrot.slane %v1402, 4
        %v1405 = vshll.u32 %v1018, 16
        %v1407 = vrot.slane %v1405, 5
        %v1408 = vsel %vm422, %v1403, %v1407
        %v1409 = vshrl.u32 %v1018, 16
        %v1411 = vrot.slane %v1409, 4
        %v1412 = vor.u32 %v1411, %v1407
        %v1413 = vrot.slane %v1412, 4
        %v1415 = vshll.u32 %v1034, 16
        %v1417 = vrot.slane %v1415, 5
        %v1418 = vsel %vm422, %v1413, %v1417
        %v1419 = vld [vmem:[%s986] sm:$0xe]
        %v1420 = vld [vmem:[%s986 + $0xc] sm:$0xe]
        %v1421 = vld [vmem:[%s986 + $0x18] sm:$0xe]
        %v1422 = vld [vmem:[%s986 + $0x24] sm:$0xe]
        %v1423 = vld [vmem:[%s986 + $0x30] sm:$0xe]
        %v1424 = vld [vmem:[%s986 + $0x3c] sm:$0xe]
        %v1425 = vld [vmem:[%s986 + $0x48] sm:$0xe]
        %v1426 = vld [vmem:[%s986 + $0x54] sm:$0xe]
        %v1427 = vld [vmem:[%s986 + $0x60] sm:$0xe]
        %v1428 = vld [vmem:[%s986 + $0x6c] sm:$0xe]
        %v1429 = vld [vmem:[%s986 + $0x78] sm:$0xe]
        %v1430 = vld [vmem:[%s986 + $0x84] sm:$0xe]
        %v1431 = vld [vmem:[%s986 + $0x90] sm:$0xe]
        %v1432 = vld [vmem:[%s986 + $0x9c] sm:$0xe]
        %v1433 = vld [vmem:[%s986 + $0xa8] sm:$0xe]
        %v1434 = vld [vmem:[%s986 + $0xb4] sm:$0xe]
        %v1483 = vrot.slane %v1419, 5
        %v1484 = vrot.slane %v1483, 4
        %v1485 = vrot.slane %v988, 5
        %v1486 = vsel %vm873, %v1484, %v1485
        %v1487 = vrot.slane %v1485, 4
        %v1488 = vrot.slane %v1019, 5
        %v1489 = vsel %vm873, %v1487, %v1488
        %v1490 = vrot.slane %v1420, 5
        %v1491 = vrot.slane %v1490, 4
        %v1492 = vrot.slane %v990, 5
        %v1493 = vsel %vm873, %v1491, %v1492
        %v1494 = vrot.slane %v1492, 4
        %v1495 = vrot.slane %v1020, 5
        %v1496 = vsel %vm873, %v1494, %v1495
        %v1497 = vrot.slane %v1421, 5
        %v1498 = vrot.slane %v1497, 4
        %v1499 = vrot.slane %v992, 5
        %v1500 = vsel %vm873, %v1498, %v1499
        %v1501 = vrot.slane %v1499, 4
        %v1502 = vrot.slane %v1021, 5
        %v1503 = vsel %vm873, %v1501, %v1502
        %v1504 = vrot.slane %v1422, 5
        %v1505 = vrot.slane %v1504, 4
        %v1506 = vrot.slane %v994, 5
        %v1507 = vsel %vm873, %v1505, %v1506
        %v1508 = vrot.slane %v1506, 4
        %v1509 = vrot.slane %v1022, 5
        %v1510 = vsel %vm873, %v1508, %v1509
        %v1511 = vrot.slane %v1423, 5
        %v1512 = vrot.slane %v1511, 4
        %v1513 = vrot.slane %v996, 5
        %v1514 = vsel %vm873, %v1512, %v1513
        %v1515 = vrot.slane %v1513, 4
        %v1516 = vrot.slane %v1023, 5
        %v1517 = vsel %vm873, %v1515, %v1516
        %v1518 = vrot.slane %v1424, 5
        %v1519 = vrot.slane %v1518, 4
        %v1520 = vrot.slane %v998, 5
        %v1521 = vsel %vm873, %v1519, %v1520
        %v1522 = vrot.slane %v1520, 4
        %v1523 = vrot.slane %v1024, 5
        %v1524 = vsel %vm873, %v1522, %v1523
        %v1525 = vrot.slane %v1425, 5
        %v1526 = vrot.slane %v1525, 4
        %v1527 = vrot.slane %v1000, 5
        %v1528 = vsel %vm873, %v1526, %v1527
        %v1529 = vrot.slane %v1527, 4
        %v1530 = vrot.slane %v1025, 5
        %v1531 = vsel %vm873, %v1529, %v1530
        %v1532 = vrot.slane %v1426, 5
        %v1533 = vrot.slane %v1532, 4
        %v1534 = vrot.slane %v1002, 5
        %v1535 = vsel %vm873, %v1533, %v1534
        %v1536 = vrot.slane %v1534, 4
        %v1537 = vrot.slane %v1026, 5
        %v1538 = vsel %vm873, %v1536, %v1537
        %v1539 = vrot.slane %v1427, 5
        %v1540 = vrot.slane %v1539, 4
        %v1541 = vrot.slane %v1004, 5
        %v1542 = vsel %vm873, %v1540, %v1541
        %v1543 = vrot.slane %v1541, 4
        %v1544 = vrot.slane %v1027, 5
        %v1545 = vsel %vm873, %v1543, %v1544
        %v1546 = vrot.slane %v1428, 5
        %v1547 = vrot.slane %v1546, 4
        %v1548 = vrot.slane %v1006, 5
        %v1549 = vsel %vm873, %v1547, %v1548
        %v1550 = vrot.slane %v1548, 4
        %v1551 = vrot.slane %v1028, 5
        %v1552 = vsel %vm873, %v1550, %v1551
        %v1553 = vrot.slane %v1429, 5
        %v1554 = vrot.slane %v1553, 4
        %v1555 = vrot.slane %v1008, 5
        %v1556 = vsel %vm873, %v1554, %v1555
        %v1557 = vrot.slane %v1555, 4
        %v1558 = vrot.slane %v1029, 5
        %v1559 = vsel %vm873, %v1557, %v1558
        %v1560 = vrot.slane %v1430, 5
        %v1561 = vrot.slane %v1560, 4
        %v1562 = vrot.slane %v1010, 5
        %v1563 = vsel %vm873, %v1561, %v1562
        %v1564 = vrot.slane %v1562, 4
        %v1565 = vrot.slane %v1030, 5
        %v1566 = vsel %vm873, %v1564, %v1565
        %v1567 = vrot.slane %v1431, 5
        %v1568 = vrot.slane %v1567, 4
        %v1569 = vrot.slane %v1012, 5
        %v1570 = vsel %vm873, %v1568, %v1569
        %v1571 = vrot.slane %v1569, 4
        %v1572 = vrot.slane %v1031, 5
        %v1573 = vsel %vm873, %v1571, %v1572
        %v1574 = vrot.slane %v1432, 5
        %v1575 = vrot.slane %v1574, 4
        %v1576 = vrot.slane %v1014, 5
        %v1577 = vsel %vm873, %v1575, %v1576
        %v1578 = vrot.slane %v1576, 4
        %v1579 = vrot.slane %v1032, 5
        %v1580 = vsel %vm873, %v1578, %v1579
        %v1581 = vrot.slane %v1433, 5
        %v1582 = vrot.slane %v1581, 4
        %v1583 = vrot.slane %v1016, 5
        %v1584 = vsel %vm873, %v1582, %v1583
        %v1585 = vrot.slane %v1583, 4
        %v1586 = vrot.slane %v1033, 5
        %v1587 = vsel %vm873, %v1585, %v1586
        %v1588 = vrot.slane %v1434, 5
        %v1589 = vrot.slane %v1588, 4
        %v1590 = vrot.slane %v1018, 5
        %v1591 = vsel %vm873, %v1589, %v1590
        %v1592 = vrot.slane %v1590, 4
        %v1593 = vrot.slane %v1034, 5
        %v1594 = vsel %vm873, %v1592, %v1593
        %s1595 = scalar_lea.vmem %s249, 24
        %v1596 = vld [vmem:[%s1595] sm:$0xf]
        %v1597 = vld [vmem:[%s1595 + $0x4] sm:$0xf]
        %v1598 = vld [vmem:[%s1595 + $0xc] sm:$0xf]
        %v1599 = vld [vmem:[%s1595 + $0x10] sm:$0xf]
        %v1600 = vld [vmem:[%s1595 + $0x18] sm:$0xf]
        %v1601 = vld [vmem:[%s1595 + $0x1c] sm:$0xf]
        %v1602 = vld [vmem:[%s1595 + $0x24] sm:$0xf]
        %v1603 = vld [vmem:[%s1595 + $0x28] sm:$0xf]
        %v1604 = vld [vmem:[%s1595 + $0x30] sm:$0xf]
        %v1605 = vld [vmem:[%s1595 + $0x34] sm:$0xf]
        %v1606 = vld [vmem:[%s1595 + $0x3c] sm:$0xf]
        %v1607 = vld [vmem:[%s1595 + $0x40] sm:$0xf]
        %v1608 = vld [vmem:[%s1595 + $0x48] sm:$0xf]
        %v1609 = vld [vmem:[%s1595 + $0x4c] sm:$0xf]
        %v1610 = vld [vmem:[%s1595 + $0x54] sm:$0xf]
        %v1611 = vld [vmem:[%s1595 + $0x58] sm:$0xf]
        %v1612 = vld [vmem:[%s1595 + $0x60] sm:$0xf]
        %v1613 = vld [vmem:[%s1595 + $0x64] sm:$0xf]
        %v1614 = vld [vmem:[%s1595 + $0x6c] sm:$0xf]
        %v1615 = vld [vmem:[%s1595 + $0x70] sm:$0xf]
        %v1616 = vld [vmem:[%s1595 + $0x78] sm:$0xf]
        %v1617 = vld [vmem:[%s1595 + $0x7c] sm:$0xf]
        %v1618 = vld [vmem:[%s1595 + $0x84] sm:$0xf]
        %v1619 = vld [vmem:[%s1595 + $0x88] sm:$0xf]
        %v1620 = vld [vmem:[%s1595 + $0x90] sm:$0xf]
        %v1621 = vld [vmem:[%s1595 + $0x94] sm:$0xf]
        %v1622 = vld [vmem:[%s1595 + $0x9c] sm:$0xf]
        %v1623 = vld [vmem:[%s1595 + $0xa0] sm:$0xf]
        %v1624 = vld [vmem:[%s1595 + $0xa8] sm:$0xf]
        %v1625 = vld [vmem:[%s1595 + $0xac] sm:$0xf]
        %v1626 = vld [vmem:[%s1595 + $0xb4] sm:$0xf]
        %v1627 = vld [vmem:[%s1595 + $0xb8] sm:$0xf]
        %v1628 = vld [vmem:[%s1595 + $0x8] sm:$0x1]
        %v1629 = vld [vmem:[%s1595 + $0x14] sm:$0x1]
        %v1630 = vld [vmem:[%s1595 + $0x20] sm:$0x1]
        %v1631 = vld [vmem:[%s1595 + $0x2c] sm:$0x1]
        %v1632 = vld [vmem:[%s1595 + $0x38] sm:$0x1]
        %v1633 = vld [vmem:[%s1595 + $0x44] sm:$0x1]
        %v1634 = vld [vmem:[%s1595 + $0x50] sm:$0x1]
        %v1635 = vld [vmem:[%s1595 + $0x5c] sm:$0x1]
        %v1636 = vld [vmem:[%s1595 + $0x68] sm:$0x1]
        %v1637 = vld [vmem:[%s1595 + $0x74] sm:$0x1]
        %v1638 = vld [vmem:[%s1595 + $0x80] sm:$0x1]
        %v1639 = vld [vmem:[%s1595 + $0x8c] sm:$0x1]
        %v1640 = vld [vmem:[%s1595 + $0x98] sm:$0x1]
        %v1641 = vld [vmem:[%s1595 + $0xa4] sm:$0x1]
        %v1642 = vld [vmem:[%s1595 + $0xb0] sm:$0x1]
        %v1643 = vld [vmem:[%s1595 + $0xbc] sm:$0x1]
        %v1645 = vshrl.u32 %v1596, 16
        %v1647 = vrot.slane %v1645, 4
        %v1648 = vshll.u32 %v1596, 16
        %v1650 = vrot.slane %v1648, 5
        %v1651 = vor.u32 %v1647, %v1650
        %v1652 = vrot.slane %v1651, 4
        %v1654 = vshll.u32 %v1597, 16
        %v1656 = vrot.slane %v1654, 5
        %v1657 = vsel %vm422, %v1652, %v1656
        %v1658 = vshrl.u32 %v1597, 16
        %v1660 = vrot.slane %v1658, 4
        %v1661 = vor.u32 %v1660, %v1656
        %v1662 = vrot.slane %v1661, 4
        %v1664 = vshll.u32 %v1628, 16
        %v1666 = vrot.slane %v1664, 5
        %v1667 = vsel %vm422, %v1662, %v1666
        %v1669 = vshrl.u32 %v1598, 16
        %v1671 = vrot.slane %v1669, 4
        %v1672 = vshll.u32 %v1598, 16
        %v1674 = vrot.slane %v1672, 5
        %v1675 = vor.u32 %v1671, %v1674
        %v1676 = vrot.slane %v1675, 4
        %v1678 = vshll.u32 %v1599, 16
        %v1680 = vrot.slane %v1678, 5
        %v1681 = vsel %vm422, %v1676, %v1680
        %v1682 = vshrl.u32 %v1599, 16
        %v1684 = vrot.slane %v1682, 4
        %v1685 = vor.u32 %v1684, %v1680
        %v1686 = vrot.slane %v1685, 4
        %v1688 = vshll.u32 %v1629, 16
        %v1690 = vrot.slane %v1688, 5
        %v1691 = vsel %vm422, %v1686, %v1690
        %v1693 = vshrl.u32 %v1600, 16
        %v1695 = vrot.slane %v1693, 4
        %v1696 = vshll.u32 %v1600, 16
        %v1698 = vrot.slane %v1696, 5
        %v1699 = vor.u32 %v1695, %v1698
        %v1700 = vrot.slane %v1699, 4
        %v1702 = vshll.u32 %v1601, 16
        %v1704 = vrot.slane %v1702, 5
        %v1705 = vsel %vm422, %v1700, %v1704
        %v1706 = vshrl.u32 %v1601, 16
        %v1708 = vrot.slane %v1706, 4
        %v1709 = vor.u32 %v1708, %v1704
        %v1710 = vrot.slane %v1709, 4
        %v1712 = vshll.u32 %v1630, 16
        %v1714 = vrot.slane %v1712, 5
        %v1715 = vsel %vm422, %v1710, %v1714
        %v1717 = vshrl.u32 %v1602, 16
        %v1719 = vrot.slane %v1717, 4
        %v1720 = vshll.u32 %v1602, 16
        %v1722 = vrot.slane %v1720, 5
        %v1723 = vor.u32 %v1719, %v1722
        %v1724 = vrot.slane %v1723, 4
        %v1726 = vshll.u32 %v1603, 16
        %v1728 = vrot.slane %v1726, 5
        %v1729 = vsel %vm422, %v1724, %v1728
        %v1730 = vshrl.u32 %v1603, 16
        %v1732 = vrot.slane %v1730, 4
        %v1733 = vor.u32 %v1732, %v1728
        %v1734 = vrot.slane %v1733, 4
        %v1736 = vshll.u32 %v1631, 16
        %v1738 = vrot.slane %v1736, 5
        %v1739 = vsel %vm422, %v1734, %v1738
        %v1741 = vshrl.u32 %v1604, 16
        %v1743 = vrot.slane %v1741, 4
        %v1744 = vshll.u32 %v1604, 16
        %v1746 = vrot.slane %v1744, 5
        %v1747 = vor.u32 %v1743, %v1746
        %v1748 = vrot.slane %v1747, 4
        %v1750 = vshll.u32 %v1605, 16
        %v1752 = vrot.slane %v1750, 5
        %v1753 = vsel %vm422, %v1748, %v1752
        %v1754 = vshrl.u32 %v1605, 16
        %v1756 = vrot.slane %v1754, 4
        %v1757 = vor.u32 %v1756, %v1752
        %v1758 = vrot.slane %v1757, 4
        %v1760 = vshll.u32 %v1632, 16
        %v1762 = vrot.slane %v1760, 5
        %v1763 = vsel %vm422, %v1758, %v1762
        %v1765 = vshrl.u32 %v1606, 16
        %v1767 = vrot.slane %v1765, 4
        %v1768 = vshll.u32 %v1606, 16
        %v1770 = vrot.slane %v1768, 5
        %v1771 = vor.u32 %v1767, %v1770
        %v1772 = vrot.slane %v1771, 4
        %v1774 = vshll.u32 %v1607, 16
        %v1776 = vrot.slane %v1774, 5
        %v1777 = vsel %vm422, %v1772, %v1776
        %v1778 = vshrl.u32 %v1607, 16
        %v1780 = vrot.slane %v1778, 4
        %v1781 = vor.u32 %v1780, %v1776
        %v1782 = vrot.slane %v1781, 4
        %v1784 = vshll.u32 %v1633, 16
        %v1786 = vrot.slane %v1784, 5
        %v1787 = vsel %vm422, %v1782, %v1786
        %v1789 = vshrl.u32 %v1608, 16
        %v1791 = vrot.slane %v1789, 4
        %v1792 = vshll.u32 %v1608, 16
        %v1794 = vrot.slane %v1792, 5
        %v1795 = vor.u32 %v1791, %v1794
        %v1796 = vrot.slane %v1795, 4
        %v1798 = vshll.u32 %v1609, 16
        %v1800 = vrot.slane %v1798, 5
        %v1801 = vsel %vm422, %v1796, %v1800
        %v1802 = vshrl.u32 %v1609, 16
        %v1804 = vrot.slane %v1802, 4
        %v1805 = vor.u32 %v1804, %v1800
        %v1806 = vrot.slane %v1805, 4
        %v1808 = vshll.u32 %v1634, 16
        %v1810 = vrot.slane %v1808, 5
        %v1811 = vsel %vm422, %v1806, %v1810
        %v1813 = vshrl.u32 %v1610, 16
        %v1815 = vrot.slane %v1813, 4
        %v1816 = vshll.u32 %v1610, 16
        %v1818 = vrot.slane %v1816, 5
        %v1819 = vor.u32 %v1815, %v1818
        %v1820 = vrot.slane %v1819, 4
        %v1822 = vshll.u32 %v1611, 16
        %v1824 = vrot.slane %v1822, 5
        %v1825 = vsel %vm422, %v1820, %v1824
        %v1826 = vshrl.u32 %v1611, 16
        %v1828 = vrot.slane %v1826, 4
        %v1829 = vor.u32 %v1828, %v1824
        %v1830 = vrot.slane %v1829, 4
        %v1832 = vshll.u32 %v1635, 16
        %v1834 = vrot.slane %v1832, 5
        %v1835 = vsel %vm422, %v1830, %v1834
        %v1837 = vshrl.u32 %v1612, 16
        %v1839 = vrot.slane %v1837, 4
        %v1840 = vshll.u32 %v1612, 16
        %v1842 = vrot.slane %v1840, 5
        %v1843 = vor.u32 %v1839, %v1842
        %v1844 = vrot.slane %v1843, 4
        %v1846 = vshll.u32 %v1613, 16
        %v1848 = vrot.slane %v1846, 5
        %v1849 = vsel %vm422, %v1844, %v1848
        %v1850 = vshrl.u32 %v1613, 16
        %v1852 = vrot.slane %v1850, 4
        %v1853 = vor.u32 %v1852, %v1848
        %v1854 = vrot.slane %v1853, 4
        %v1856 = vshll.u32 %v1636, 16
        %v1858 = vrot.slane %v1856, 5
        %v1859 = vsel %vm422, %v1854, %v1858
        %v1861 = vshrl.u32 %v1614, 16
        %v1863 = vrot.slane %v1861, 4
        %v1864 = vshll.u32 %v1614, 16
        %v1866 = vrot.slane %v1864, 5
        %v1867 = vor.u32 %v1863, %v1866
        %v1868 = vrot.slane %v1867, 4
        %v1870 = vshll.u32 %v1615, 16
        %v1872 = vrot.slane %v1870, 5
        %v1873 = vsel %vm422, %v1868, %v1872
        %v1874 = vshrl.u32 %v1615, 16
        %v1876 = vrot.slane %v1874, 4
        %v1877 = vor.u32 %v1876, %v1872
        %v1878 = vrot.slane %v1877, 4
        %v1880 = vshll.u32 %v1637, 16
        %v1882 = vrot.slane %v1880, 5
        %v1883 = vsel %vm422, %v1878, %v1882
        %v1885 = vshrl.u32 %v1616, 16
        %v1887 = vrot.slane %v1885, 4
        %v1888 = vshll.u32 %v1616, 16
        %v1890 = vrot.slane %v1888, 5
        %v1891 = vor.u32 %v1887, %v1890
        %v1892 = vrot.slane %v1891, 4
        %v1894 = vshll.u32 %v1617, 16
        %v1896 = vrot.slane %v1894, 5
        %v1897 = vsel %vm422, %v1892, %v1896
        %v1898 = vshrl.u32 %v1617, 16
        %v1900 = vrot.slane %v1898, 4
        %v1901 = vor.u32 %v1900, %v1896
        %v1902 = vrot.slane %v1901, 4
        %v1904 = vshll.u32 %v1638, 16
        %v1906 = vrot.slane %v1904, 5
        %v1907 = vsel %vm422, %v1902, %v1906
        %v1909 = vshrl.u32 %v1618, 16
        %v1911 = vrot.slane %v1909, 4
        %v1912 = vshll.u32 %v1618, 16
        %v1914 = vrot.slane %v1912, 5
        %v1915 = vor.u32 %v1911, %v1914
        %v1916 = vrot.slane %v1915, 4
        %v1918 = vshll.u32 %v1619, 16
        %v1920 = vrot.slane %v1918, 5
        %v1921 = vsel %vm422, %v1916, %v1920
        %v1922 = vshrl.u32 %v1619, 16
        %v1924 = vrot.slane %v1922, 4
        %v1925 = vor.u32 %v1924, %v1920
        %v1926 = vrot.slane %v1925, 4
        %v1928 = vshll.u32 %v1639, 16
        %v1930 = vrot.slane %v1928, 5
        %v1931 = vsel %vm422, %v1926, %v1930
        %v1933 = vshrl.u32 %v1620, 16
        %v1935 = vrot.slane %v1933, 4
        %v1936 = vshll.u32 %v1620, 16
        %v1938 = vrot.slane %v1936, 5
        %v1939 = vor.u32 %v1935, %v1938
        %v1940 = vrot.slane %v1939, 4
        %v1942 = vshll.u32 %v1621, 16
        %v1944 = vrot.slane %v1942, 5
        %v1945 = vsel %vm422, %v1940, %v1944
        %v1946 = vshrl.u32 %v1621, 16
        %v1948 = vrot.slane %v1946, 4
        %v1949 = vor.u32 %v1948, %v1944
        %v1950 = vrot.slane %v1949, 4
        %v1952 = vshll.u32 %v1640, 16
        %v1954 = vrot.slane %v1952, 5
        %v1955 = vsel %vm422, %v1950, %v1954
        %v1957 = vshrl.u32 %v1622, 16
        %v1959 = vrot.slane %v1957, 4
        %v1960 = vshll.u32 %v1622, 16
        %v1962 = vrot.slane %v1960, 5
        %v1963 = vor.u32 %v1959, %v1962
        %v1964 = vrot.slane %v1963, 4
        %v1966 = vshll.u32 %v1623, 16
        %v1968 = vrot.slane %v1966, 5
        %v1969 = vsel %vm422, %v1964, %v1968
        %v1970 = vshrl.u32 %v1623, 16
        %v1972 = vrot.slane %v1970, 4
        %v1973 = vor.u32 %v1972, %v1968
        %v1974 = vrot.slane %v1973, 4
        %v1976 = vshll.u32 %v1641, 16
        %v1978 = vrot.slane %v1976, 5
        %v1979 = vsel %vm422, %v1974, %v1978
        %v1981 = vshrl.u32 %v1624, 16
        %v1983 = vrot.slane %v1981, 4
        %v1984 = vshll.u32 %v1624, 16
        %v1986 = vrot.slane %v1984, 5
        %v1987 = vor.u32 %v1983, %v1986
        %v1988 = vrot.slane %v1987, 4
        %v1990 = vshll.u32 %v1625, 16
        %v1992 = vrot.slane %v1990, 5
        %v1993 = vsel %vm422, %v1988, %v1992
        %v1994 = vshrl.u32 %v1625, 16
        %v1996 = vrot.slane %v1994, 4
        %v1997 = vor.u32 %v1996, %v1992
        %v1998 = vrot.slane %v1997, 4
        %v2000 = vshll.u32 %v1642, 16
        %v2002 = vrot.slane %v2000, 5
        %v2003 = vsel %vm422, %v1998, %v2002
        %v2005 = vshrl.u32 %v1626, 16
        %v2007 = vrot.slane %v2005, 4
        %v2008 = vshll.u32 %v1626, 16
        %v2010 = vrot.slane %v2008, 5
        %v2011 = vor.u32 %v2007, %v2010
        %v2012 = vrot.slane %v2011, 4
        %v2014 = vshll.u32 %v1627, 16
        %v2016 = vrot.slane %v2014, 5
        %v2017 = vsel %vm422, %v2012, %v2016
        %v2018 = vshrl.u32 %v1627, 16
        %v2020 = vrot.slane %v2018, 4
        %v2021 = vor.u32 %v2020, %v2016
        %v2022 = vrot.slane %v2021, 4
        %v2024 = vshll.u32 %v1643, 16
        %v2026 = vrot.slane %v2024, 5
        %v2027 = vsel %vm422, %v2022, %v2026
        %v2028 = vld [vmem:[%s1595] sm:$0xe]
        %v2029 = vld [vmem:[%s1595 + $0xc] sm:$0xe]
        %v2030 = vld [vmem:[%s1595 + $0x18] sm:$0xe]
        %v2031 = vld [vmem:[%s1595 + $0x24] sm:$0xe]
        %v2032 = vld [vmem:[%s1595 + $0x30] sm:$0xe]
        %v2033 = vld [vmem:[%s1595 + $0x3c] sm:$0xe]
        %v2034 = vld [vmem:[%s1595 + $0x48] sm:$0xe]
        %v2035 = vld [vmem:[%s1595 + $0x54] sm:$0xe]
        %v2036 = vld [vmem:[%s1595 + $0x60] sm:$0xe]
        %v2037 = vld [vmem:[%s1595 + $0x6c] sm:$0xe]
        %v2038 = vld [vmem:[%s1595 + $0x78] sm:$0xe]
        %v2039 = vld [vmem:[%s1595 + $0x84] sm:$0xe]
        %v2040 = vld [vmem:[%s1595 + $0x90] sm:$0xe]
        %v2041 = vld [vmem:[%s1595 + $0x9c] sm:$0xe]
        %v2042 = vld [vmem:[%s1595 + $0xa8] sm:$0xe]
        %v2043 = vld [vmem:[%s1595 + $0xb4] sm:$0xe]
        %v2092 = vrot.slane %v2028, 5
        %v2093 = vrot.slane %v2092, 4
        %v2094 = vrot.slane %v1597, 5
        %v2095 = vsel %vm873, %v2093, %v2094
        %v2096 = vrot.slane %v2094, 4
        %v2097 = vrot.slane %v1628, 5
        %v2098 = vsel %vm873, %v2096, %v2097
        %v2099 = vrot.slane %v2029, 5
        %v2100 = vrot.slane %v2099, 4
        %v2101 = vrot.slane %v1599, 5
        %v2102 = vsel %vm873, %v2100, %v2101
        %v2103 = vrot.slane %v2101, 4
        %v2104 = vrot.slane %v1629, 5
        %v2105 = vsel %vm873, %v2103, %v2104
        %v2106 = vrot.slane %v2030, 5
        %v2107 = vrot.slane %v2106, 4
        %v2108 = vrot.slane %v1601, 5
        %v2109 = vsel %vm873, %v2107, %v2108
        %v2110 = vrot.slane %v2108, 4
        %v2111 = vrot.slane %v1630, 5
        %v2112 = vsel %vm873, %v2110, %v2111
        %v2113 = vrot.slane %v2031, 5
        %v2114 = vrot.slane %v2113, 4
        %v2115 = vrot.slane %v1603, 5
        %v2116 = vsel %vm873, %v2114, %v2115
        %v2117 = vrot.slane %v2115, 4
        %v2118 = vrot.slane %v1631, 5
        %v2119 = vsel %vm873, %v2117, %v2118
        %v2120 = vrot.slane %v2032, 5
        %v2121 = vrot.slane %v2120, 4
        %v2122 = vrot.slane %v1605, 5
        %v2123 = vsel %vm873, %v2121, %v2122
        %v2124 = vrot.slane %v2122, 4
        %v2125 = vrot.slane %v1632, 5
        %v2126 = vsel %vm873, %v2124, %v2125
        %v2127 = vrot.slane %v2033, 5
        %v2128 = vrot.slane %v2127, 4
        %v2129 = vrot.slane %v1607, 5
        %v2130 = vsel %vm873, %v2128, %v2129
        %v2131 = vrot.slane %v2129, 4
        %v2132 = vrot.slane %v1633, 5
        %v2133 = vsel %vm873, %v2131, %v2132
        %v2134 = vrot.slane %v2034, 5
        %v2135 = vrot.slane %v2134, 4
        %v2136 = vrot.slane %v1609, 5
        %v2137 = vsel %vm873, %v2135, %v2136
        %v2138 = vrot.slane %v2136, 4
        %v2139 = vrot.slane %v1634, 5
        %v2140 = vsel %vm873, %v2138, %v2139
        %v2141 = vrot.slane %v2035, 5
        %v2142 = vrot.slane %v2141, 4
        %v2143 = vrot.slane %v1611, 5
        %v2144 = vsel %vm873, %v2142, %v2143
        %v2145 = vrot.slane %v2143, 4
        %v2146 = vrot.slane %v1635, 5
        %v2147 = vsel %vm873, %v2145, %v2146
        %v2148 = vrot.slane %v2036, 5
        %v2149 = vrot.slane %v2148, 4
        %v2150 = vrot.slane %v1613, 5
        %v2151 = vsel %vm873, %v2149, %v2150
        %v2152 = vrot.slane %v2150, 4
        %v2153 = vrot.slane %v1636, 5
        %v2154 = vsel %vm873, %v2152, %v2153
        %v2155 = vrot.slane %v2037, 5
        %v2156 = vrot.slane %v2155, 4
        %v2157 = vrot.slane %v1615, 5
        %v2158 = vsel %vm873, %v2156, %v2157
        %v2159 = vrot.slane %v2157, 4
        %v2160 = vrot.slane %v1637, 5
        %v2161 = vsel %vm873, %v2159, %v2160
        %v2162 = vrot.slane %v2038, 5
        %v2163 = vrot.slane %v2162, 4
        %v2164 = vrot.slane %v1617, 5
        %v2165 = vsel %vm873, %v2163, %v2164
        %v2166 = vrot.slane %v2164, 4
        %v2167 = vrot.slane %v1638, 5
        %v2168 = vsel %vm873, %v2166, %v2167
        %v2169 = vrot.slane %v2039, 5
        %v2170 = vrot.slane %v2169, 4
        %v2171 = vrot.slane %v1619, 5
        %v2172 = vsel %vm873, %v2170, %v2171
        %v2173 = vrot.slane %v2171, 4
        %v2174 = vrot.slane %v1639, 5
        %v2175 = vsel %vm873, %v2173, %v2174
        %v2176 = vrot.slane %v2040, 5
        %v2177 = vrot.slane %v2176, 4
        %v2178 = vrot.slane %v1621, 5
        %v2179 = vsel %vm873, %v2177, %v2178
        %v2180 = vrot.slane %v2178, 4
        %v2181 = vrot.slane %v1640, 5
        %v2182 = vsel %vm873, %v2180, %v2181
        %v2183 = vrot.slane %v2041, 5
        %v2184 = vrot.slane %v2183, 4
        %v2185 = vrot.slane %v1623, 5
        %v2186 = vsel %vm873, %v2184, %v2185
        %v2187 = vrot.slane %v2185, 4
        %v2188 = vrot.slane %v1641, 5
        %v2189 = vsel %vm873, %v2187, %v2188
        %v2190 = vrot.slane %v2042, 5
        %v2191 = vrot.slane %v2190, 4
        %v2192 = vrot.slane %v1625, 5
        %v2193 = vsel %vm873, %v2191, %v2192
        %v2194 = vrot.slane %v2192, 4
        %v2195 = vrot.slane %v1642, 5
        %v2196 = vsel %vm873, %v2194, %v2195
        %v2197 = vrot.slane %v2043, 5
        %v2198 = vrot.slane %v2197, 4
        %v2199 = vrot.slane %v1627, 5
        %v2200 = vsel %vm873, %v2198, %v2199
        %v2201 = vrot.slane %v2199, 4
        %v2202 = vrot.slane %v1643, 5
        %v2203 = vsel %vm873, %v2201, %v2202
        %v2220 = vunpack.c.l.b16 %v372
        %v2221 = vunpack.c.l.b16 %v373
        %v2222 = vunpack.c.l.b16 %v374
        %v2223 = vunpack.c.l.b16 %v375
        %v2224 = vunpack.c.l.b16 %v376
        %v2225 = vunpack.c.l.b16 %v377
        %v2226 = vunpack.c.l.b16 %v378
        %v2227 = vunpack.c.l.b16 %v379
        %v2228 = vunpack.c.l.b16 %v380
        %v2229 = vunpack.c.l.b16 %v381
        %v2230 = vunpack.c.l.b16 %v382
        %v2231 = vunpack.c.l.b16 %v383
        %v2232 = vunpack.c.l.b16 %v384
        %v2233 = vunpack.c.l.b16 %v385
        %v2234 = vunpack.c.l.b16 %v386
        %v2235 = vunpack.c.l.b16 %v387
        %v2236 = vunpack.c.l.b16 %v388
        %v2237 = vunpack.c.l.b16 %v389
        %v2238 = vunpack.c.l.b16 %v390
        %v2239 = vunpack.c.l.b16 %v391
        %v2240 = vunpack.c.l.b16 %v392
        %v2241 = vunpack.c.l.b16 %v393
        %v2242 = vunpack.c.l.b16 %v394
        %v2243 = vunpack.c.l.b16 %v395
        %v2244 = vunpack.c.l.b16 %v396
        %v2245 = vunpack.c.l.b16 %v397
        %v2246 = vunpack.c.l.b16 %v398
        %v2247 = vunpack.c.l.b16 %v399
        %v2248 = vunpack.c.l.b16 %v400
        %v2249 = vunpack.c.l.b16 %v401
        %v2250 = vunpack.c.l.b16 %v402
        %v2251 = vunpack.c.l.b16 %v403
        %v2252 = vpack.c.b16 %v2221, %v2220
        %v2253 = vpack.c.b16 %v2223, %v2222
        %v2254 = vpack.c.b16 %v2225, %v2224
        %v2255 = vpack.c.b16 %v2227, %v2226
        %v2256 = vpack.c.b16 %v2229, %v2228
        %v2257 = vpack.c.b16 %v2231, %v2230
        %v2258 = vpack.c.b16 %v2233, %v2232
        %v2259 = vpack.c.b16 %v2235, %v2234
        %v2260 = vpack.c.b16 %v2237, %v2236
        %v2261 = vpack.c.b16 %v2239, %v2238
        %v2262 = vpack.c.b16 %v2241, %v2240
        %v2263 = vpack.c.b16 %v2243, %v2242
        %v2264 = vpack.c.b16 %v2245, %v2244
        %v2265 = vpack.c.b16 %v2247, %v2246
        %v2266 = vpack.c.b16 %v2249, %v2248
        %v2267 = vpack.c.b16 %v2251, %v2250
        %v2268 = vunpack.c.l.b16 %v436
        %v2269 = vunpack.c.l.b16 %v446
        %v2270 = vunpack.c.l.b16 %v460
        %v2271 = vunpack.c.l.b16 %v470
        %v2272 = vunpack.c.l.b16 %v484
        %v2273 = vunpack.c.l.b16 %v494
        %v2274 = vunpack.c.l.b16 %v508
        %v2275 = vunpack.c.l.b16 %v518
        %v2276 = vunpack.c.l.b16 %v532
        %v2277 = vunpack.c.l.b16 %v542
        %v2278 = vunpack.c.l.b16 %v556
        %v2279 = vunpack.c.l.b16 %v566
        %v2280 = vunpack.c.l.b16 %v580
        %v2281 = vunpack.c.l.b16 %v590
        %v2282 = vunpack.c.l.b16 %v604
        %v2283 = vunpack.c.l.b16 %v614
        %v2284 = vunpack.c.l.b16 %v628
        %v2285 = vunpack.c.l.b16 %v638
        %v2286 = vunpack.c.l.b16 %v652
        %v2287 = vunpack.c.l.b16 %v662
        %v2288 = vunpack.c.l.b16 %v676
        %v2289 = vunpack.c.l.b16 %v686
        %v2290 = vunpack.c.l.b16 %v700
        %v2291 = vunpack.c.l.b16 %v710
        %v2292 = vunpack.c.l.b16 %v724
        %v2293 = vunpack.c.l.b16 %v734
        %v2294 = vunpack.c.l.b16 %v748
        %v2295 = vunpack.c.l.b16 %v758
        %v2296 = vunpack.c.l.b16 %v772
        %v2297 = vunpack.c.l.b16 %v782
        %v2298 = vunpack.c.l.b16 %v796
        %v2299 = vunpack.c.l.b16 %v806
        %v2300 = vpack.c.b16 %v2269, %v2268
        %v2301 = vpack.c.b16 %v2271, %v2270
        %v2302 = vpack.c.b16 %v2273, %v2272
        %v2303 = vpack.c.b16 %v2275, %v2274
        %v2304 = vpack.c.b16 %v2277, %v2276
        %v2305 = vpack.c.b16 %v2279, %v2278
        %v2306 = vpack.c.b16 %v2281, %v2280
        %v2307 = vpack.c.b16 %v2283, %v2282
        %v2308 = vpack.c.b16 %v2285, %v2284
        %v2309 = vpack.c.b16 %v2287, %v2286
        %v2310 = vpack.c.b16 %v2289, %v2288
        %v2311 = vpack.c.b16 %v2291, %v2290
        %v2312 = vpack.c.b16 %v2293, %v2292
        %v2313 = vpack.c.b16 %v2295, %v2294
        %v2314 = vpack.c.b16 %v2297, %v2296
        %v2315 = vpack.c.b16 %v2299, %v2298
        %2316 = vrot.lane.b32.xlu0 %v2300, 4
        %v2317 = vpop.permute.xlu0 %2316
        %2318 = vrot.lane.b32.xlu0 %v2301, 4
        %v2319 = vpop.permute.xlu0 %2318
        %2320 = vrot.lane.b32.xlu0 %v2302, 4
        %v2321 = vpop.permute.xlu0 %2320
        %2322 = vrot.lane.b32.xlu0 %v2303, 4
        %v2323 = vpop.permute.xlu0 %2322
        %2324 = vrot.lane.b32.xlu0 %v2304, 4
        %v2325 = vpop.permute.xlu0 %2324
        %2326 = vrot.lane.b32.xlu0 %v2305, 4
        %v2327 = vpop.permute.xlu0 %2326
        %2328 = vrot.lane.b32.xlu0 %v2306, 4
        %v2329 = vpop.permute.xlu0 %2328
        %2330 = vrot.lane.b32.xlu0 %v2307, 4
        %v2331 = vpop.permute.xlu0 %2330
        %2332 = vrot.lane.b32.xlu0 %v2308, 4
        %v2333 = vpop.permute.xlu0 %2332
        %2334 = vrot.lane.b32.xlu0 %v2309, 4
        %v2335 = vpop.permute.xlu0 %2334
        %2336 = vrot.lane.b32.xlu0 %v2310, 4
        %v2337 = vpop.permute.xlu0 %2336
        %2338 = vrot.lane.b32.xlu0 %v2311, 4
        %v2339 = vpop.permute.xlu0 %2338
        %2340 = vrot.lane.b32.xlu0 %v2312, 4
        %v2341 = vpop.permute.xlu0 %2340
        %2342 = vrot.lane.b32.xlu0 %v2313, 4
        %v2343 = vpop.permute.xlu0 %2342
        %2344 = vrot.lane.b32.xlu0 %v2314, 4
        %v2345 = vpop.permute.xlu0 %2344
        %2346 = vrot.lane.b32.xlu0 %v2315, 4
        %v2347 = vpop.permute.xlu0 %2346
        %v2348 = vunpack.c.l.b16 %v877
        %v2349 = vunpack.c.l.b16 %v880
        %v2350 = vunpack.c.l.b16 %v884
        %v2351 = vunpack.c.l.b16 %v887
        %v2352 = vunpack.c.l.b16 %v891
        %v2353 = vunpack.c.l.b16 %v894
        %v2354 = vunpack.c.l.b16 %v898
        %v2355 = vunpack.c.l.b16 %v901
        %v2356 = vunpack.c.l.b16 %v905
        %v2357 = vunpack.c.l.b16 %v908
        %v2358 = vunpack.c.l.b16 %v912
        %v2359 = vunpack.c.l.b16 %v915
        %v2360 = vunpack.c.l.b16 %v919
        %v2361 = vunpack.c.l.b16 %v922
        %v2362 = vunpack.c.l.b16 %v926
        %v2363 = vunpack.c.l.b16 %v929
        %v2364 = vunpack.c.l.b16 %v933
        %v2365 = vunpack.c.l.b16 %v936
        %v2366 = vunpack.c.l.b16 %v940
        %v2367 = vunpack.c.l.b16 %v943
        %v2368 = vunpack.c.l.b16 %v947
        %v2369 = vunpack.c.l.b16 %v950
        %v2370 = vunpack.c.l.b16 %v954
        %v2371 = vunpack.c.l.b16 %v957
        %v2372 = vunpack.c.l.b16 %v961
        %v2373 = vunpack.c.l.b16 %v964
        %v2374 = vunpack.c.l.b16 %v968
        %v2375 = vunpack.c.l.b16 %v971
        %v2376 = vunpack.c.l.b16 %v975
        %v2377 = vunpack.c.l.b16 %v978
        %v2378 = vunpack.c.l.b16 %v982
        %v2379 = vunpack.c.l.b16 %v985
        %v2380 = vpack.c.b16 %v2349, %v2348
        %v2381 = vpack.c.b16 %v2351, %v2350
        %v2382 = vpack.c.b16 %v2353, %v2352
        %v2383 = vpack.c.b16 %v2355, %v2354
        %v2384 = vpack.c.b16 %v2357, %v2356
        %v2385 = vpack.c.b16 %v2359, %v2358
        %v2386 = vpack.c.b16 %v2361, %v2360
        %v2387 = vpack.c.b16 %v2363, %v2362
        %v2388 = vpack.c.b16 %v2365, %v2364
        %v2389 = vpack.c.b16 %v2367, %v2366
        %v2390 = vpack.c.b16 %v2369, %v2368
        %v2391 = vpack.c.b16 %v2371, %v2370
        %v2392 = vpack.c.b16 %v2373, %v2372
        %v2393 = vpack.c.b16 %v2375, %v2374
        %v2394 = vpack.c.b16 %v2377, %v2376
        %v2395 = vpack.c.b16 %v2379, %v2378
        %2396 = vrot.lane.b32.xlu0 %v2380, 8
        %v2397 = vpop.permute.xlu0 %2396
        %2398 = vrot.lane.b32.xlu0 %v2381, 8
        %v2399 = vpop.permute.xlu0 %2398
        %2400 = vrot.lane.b32.xlu0 %v2382, 8
        %v2401 = vpop.permute.xlu0 %2400
        %2402 = vrot.lane.b32.xlu0 %v2383, 8
        %v2403 = vpop.permute.xlu0 %2402
        %2404 = vrot.lane.b32.xlu0 %v2384, 8
        %v2405 = vpop.permute.xlu0 %2404
        %2406 = vrot.lane.b32.xlu0 %v2385, 8
        %v2407 = vpop.permute.xlu0 %2406
        %2408 = vrot.lane.b32.xlu0 %v2386, 8
        %v2409 = vpop.permute.xlu0 %2408
        %2410 = vrot.lane.b32.xlu0 %v2387, 8
        %v2411 = vpop.permute.xlu0 %2410
        %2412 = vrot.lane.b32.xlu0 %v2388, 8
        %v2413 = vpop.permute.xlu0 %2412
        %2414 = vrot.lane.b32.xlu0 %v2389, 8
        %v2415 = vpop.permute.xlu0 %2414
        %2416 = vrot.lane.b32.xlu0 %v2390, 8
        %v2417 = vpop.permute.xlu0 %2416
        %2418 = vrot.lane.b32.xlu0 %v2391, 8
        %v2419 = vpop.permute.xlu0 %2418
        %2420 = vrot.lane.b32.xlu0 %v2392, 8
        %v2421 = vpop.permute.xlu0 %2420
        %2422 = vrot.lane.b32.xlu0 %v2393, 8
        %v2423 = vpop.permute.xlu0 %2422
        %2424 = vrot.lane.b32.xlu0 %v2394, 8
        %v2425 = vpop.permute.xlu0 %2424
        %2426 = vrot.lane.b32.xlu0 %v2395, 8
        %v2427 = vpop.permute.xlu0 %2426
        %v2444 = vunpack.c.l.b16 %v987
        %v2445 = vunpack.c.l.b16 %v988
        %v2446 = vunpack.c.l.b16 %v989
        %v2447 = vunpack.c.l.b16 %v990
        %v2448 = vunpack.c.l.b16 %v991
        %v2449 = vunpack.c.l.b16 %v992
        %v2450 = vunpack.c.l.b16 %v993
        %v2451 = vunpack.c.l.b16 %v994
        %v2452 = vunpack.c.l.b16 %v995
        %v2453 = vunpack.c.l.b16 %v996
        %v2454 = vunpack.c.l.b16 %v997
        %v2455 = vunpack.c.l.b16 %v998
        %v2456 = vunpack.c.l.b16 %v999
        %v2457 = vunpack.c.l.b16 %v1000
        %v2458 = vunpack.c.l.b16 %v1001
        %v2459 = vunpack.c.l.b16 %v1002
        %v2460 = vunpack.c.l.b16 %v1003
        %v2461 = vunpack.c.l.b16 %v1004
        %v2462 = vunpack.c.l.b16 %v1005
        %v2463 = vunpack.c.l.b16 %v1006
        %v2464 = vunpack.c.l.b16 %v1007
        %v2465 = vunpack.c.l.b16 %v1008
        %v2466 = vunpack.c.l.b16 %v1009
        %v2467 = vunpack.c.l.b16 %v1010
        %v2468 = vunpack.c.l.b16 %v1011
        %v2469 = vunpack.c.l.b16 %v1012
        %v2470 = vunpack.c.l.b16 %v1013
        %v2471 = vunpack.c.l.b16 %v1014
        %v2472 = vunpack.c.l.b16 %v1015
        %v2473 = vunpack.c.l.b16 %v1016
        %v2474 = vunpack.c.l.b16 %v1017
        %v2475 = vunpack.c.l.b16 %v1018
        %v2476 = vpack.c.b16 %v2445, %v2444
        %v2477 = vpack.c.b16 %v2447, %v2446
        %v2478 = vpack.c.b16 %v2449, %v2448
        %v2479 = vpack.c.b16 %v2451, %v2450
        %v2480 = vpack.c.b16 %v2453, %v2452
        %v2481 = vpack.c.b16 %v2455, %v2454
        %v2482 = vpack.c.b16 %v2457, %v2456
        %v2483 = vpack.c.b16 %v2459, %v2458
        %v2484 = vpack.c.b16 %v2461, %v2460
        %v2485 = vpack.c.b16 %v2463, %v2462
        %v2486 = vpack.c.b16 %v2465, %v2464
        %v2487 = vpack.c.b16 %v2467, %v2466
        %v2488 = vpack.c.b16 %v2469, %v2468
        %v2489 = vpack.c.b16 %v2471, %v2470
        %v2490 = vpack.c.b16 %v2473, %v2472
        %v2491 = vpack.c.b16 %v2475, %v2474
        %2492 = vrot.lane.b32.xlu0 %v2476, 12
        %v2493 = vpop.permute.xlu0 %2492
        %2494 = vrot.lane.b32.xlu0 %v2477, 12
        %v2495 = vpop.permute.xlu0 %2494
        %2496 = vrot.lane.b32.xlu0 %v2478, 12
        %v2497 = vpop.permute.xlu0 %2496
        %2498 = vrot.lane.b32.xlu0 %v2479, 12
        %v2499 = vpop.permute.xlu0 %2498
        %2500 = vrot.lane.b32.xlu0 %v2480, 12
        %v2501 = vpop.permute.xlu0 %2500
        %2502 = vrot.lane.b32.xlu0 %v2481, 12
        %v2503 = vpop.permute.xlu0 %2502
        %2504 = vrot.lane.b32.xlu0 %v2482, 12
        %v2505 = vpop.permute.xlu0 %2504
        %2506 = vrot.lane.b32.xlu0 %v2483, 12
        %v2507 = vpop.permute.xlu0 %2506
        %2508 = vrot.lane.b32.xlu0 %v2484, 12
        %v2509 = vpop.permute.xlu0 %2508
        %2510 = vrot.lane.b32.xlu0 %v2485, 12
        %v2511 = vpop.permute.xlu0 %2510
        %2512 = vrot.lane.b32.xlu0 %v2486, 12
        %v2513 = vpop.permute.xlu0 %2512
        %2514 = vrot.lane.b32.xlu0 %v2487, 12
        %v2515 = vpop.permute.xlu0 %2514
        %2516 = vrot.lane.b32.xlu0 %v2488, 12
        %v2517 = vpop.permute.xlu0 %2516
        %2518 = vrot.lane.b32.xlu0 %v2489, 12
        %v2519 = vpop.permute.xlu0 %2518
        %2520 = vrot.lane.b32.xlu0 %v2490, 12
        %v2521 = vpop.permute.xlu0 %2520
        %2522 = vrot.lane.b32.xlu0 %v2491, 12
        %v2523 = vpop.permute.xlu0 %2522
        %v2524 = vunpack.c.l.b16 %v1048
        %v2525 = vunpack.c.l.b16 %v1058
        %v2526 = vunpack.c.l.b16 %v1072
        %v2527 = vunpack.c.l.b16 %v1082
        %v2528 = vunpack.c.l.b16 %v1096
        %v2529 = vunpack.c.l.b16 %v1106
        %v2530 = vunpack.c.l.b16 %v1120
        %v2531 = vunpack.c.l.b16 %v1130
        %v2532 = vunpack.c.l.b16 %v1144
        %v2533 = vunpack.c.l.b16 %v1154
        %v2534 = vunpack.c.l.b16 %v1168
        %v2535 = vunpack.c.l.b16 %v1178
        %v2536 = vunpack.c.l.b16 %v1192
        %v2537 = vunpack.c.l.b16 %v1202
        %v2538 = vunpack.c.l.b16 %v1216
        %v2539 = vunpack.c.l.b16 %v1226
        %v2540 = vunpack.c.l.b16 %v1240
        %v2541 = vunpack.c.l.b16 %v1250
        %v2542 = vunpack.c.l.b16 %v1264
        %v2543 = vunpack.c.l.b16 %v1274
        %v2544 = vunpack.c.l.b16 %v1288
        %v2545 = vunpack.c.l.b16 %v1298
        %v2546 = vunpack.c.l.b16 %v1312
        %v2547 = vunpack.c.l.b16 %v1322
        %v2548 = vunpack.c.l.b16 %v1336
        %v2549 = vunpack.c.l.b16 %v1346
        %v2550 = vunpack.c.l.b16 %v1360
        %v2551 = vunpack.c.l.b16 %v1370
        %v2552 = vunpack.c.l.b16 %v1384
        %v2553 = vunpack.c.l.b16 %v1394
        %v2554 = vunpack.c.l.b16 %v1408
        %v2555 = vunpack.c.l.b16 %v1418
        %v2556 = vpack.c.b16 %v2525, %v2524
        %v2557 = vpack.c.b16 %v2527, %v2526
        %v2558 = vpack.c.b16 %v2529, %v2528
        %v2559 = vpack.c.b16 %v2531, %v2530
        %v2560 = vpack.c.b16 %v2533, %v2532
        %v2561 = vpack.c.b16 %v2535, %v2534
        %v2562 = vpack.c.b16 %v2537, %v2536
        %v2563 = vpack.c.b16 %v2539, %v2538
        %v2564 = vpack.c.b16 %v2541, %v2540
        %v2565 = vpack.c.b16 %v2543, %v2542
        %v2566 = vpack.c.b16 %v2545, %v2544
        %v2567 = vpack.c.b16 %v2547, %v2546
        %v2568 = vpack.c.b16 %v2549, %v2548
        %v2569 = vpack.c.b16 %v2551, %v2550
        %v2570 = vpack.c.b16 %v2553, %v2552
        %v2571 = vpack.c.b16 %v2555, %v2554
        %2572 = vrot.lane.b32.xlu0 %v2556, 16
        %v2573 = vpop.permute.xlu0 %2572
        %2574 = vrot.lane.b32.xlu0 %v2557, 16
        %v2575 = vpop.permute.xlu0 %2574
        %2576 = vrot.lane.b32.xlu0 %v2558, 16
        %v2577 = vpop.permute.xlu0 %2576
        %2578 = vrot.lane.b32.xlu0 %v2559, 16
        %v2579 = vpop.permute.xlu0 %2578
        %2580 = vrot.lane.b32.xlu0 %v2560, 16
        %v2581 = vpop.permute.xlu0 %2580
        %2582 = vrot.lane.b32.xlu0 %v2561, 16
        %v2583 = vpop.permute.xlu0 %2582
        %2584 = vrot.lane.b32.xlu0 %v2562, 16
        %v2585 = vpop.permute.xlu0 %2584
        %2586 = vrot.lane.b32.xlu0 %v2563, 16
        %v2587 = vpop.permute.xlu0 %2586
        %2588 = vrot.lane.b32.xlu0 %v2564, 16
        %v2589 = vpop.permute.xlu0 %2588
        %2590 = vrot.lane.b32.xlu0 %v2565, 16
        %v2591 = vpop.permute.xlu0 %2590
        %2592 = vrot.lane.b32.xlu0 %v2566, 16
        %v2593 = vpop.permute.xlu0 %2592
        %2594 = vrot.lane.b32.xlu0 %v2567, 16
        %v2595 = vpop.permute.xlu0 %2594
        %2596 = vrot.lane.b32.xlu0 %v2568, 16
        %v2597 = vpop.permute.xlu0 %2596
        %2598 = vrot.lane.b32.xlu0 %v2569, 16
        %v2599 = vpop.permute.xlu0 %2598
        %2600 = vrot.lane.b32.xlu0 %v2570, 16
        %v2601 = vpop.permute.xlu0 %2600
        %2602 = vrot.lane.b32.xlu0 %v2571, 16
        %v2603 = vpop.permute.xlu0 %2602
        %v2604 = vunpack.c.l.b16 %v1486
        %v2605 = vunpack.c.l.b16 %v1489
        %v2606 = vunpack.c.l.b16 %v1493
        %v2607 = vunpack.c.l.b16 %v1496
        %v2608 = vunpack.c.l.b16 %v1500
        %v2609 = vunpack.c.l.b16 %v1503
        %v2610 = vunpack.c.l.b16 %v1507
        %v2611 = vunpack.c.l.b16 %v1510
        %v2612 = vunpack.c.l.b16 %v1514
        %v2613 = vunpack.c.l.b16 %v1517
        %v2614 = vunpack.c.l.b16 %v1521
        %v2615 = vunpack.c.l.b16 %v1524
        %v2616 = vunpack.c.l.b16 %v1528
        %v2617 = vunpack.c.l.b16 %v1531
        %v2618 = vunpack.c.l.b16 %v1535
        %v2619 = vunpack.c.l.b16 %v1538
        %v2620 = vunpack.c.l.b16 %v1542
        %v2621 = vunpack.c.l.b16 %v1545
        %v2622 = vunpack.c.l.b16 %v1549
        %v2623 = vunpack.c.l.b16 %v1552
        %v2624 = vunpack.c.l.b16 %v1556
        %v2625 = vunpack.c.l.b16 %v1559
        %v2626 = vunpack.c.l.b16 %v1563
        %v2627 = vunpack.c.l.b16 %v1566
        %v2628 = vunpack.c.l.b16 %v1570
        %v2629 = vunpack.c.l.b16 %v1573
        %v2630 = vunpack.c.l.b16 %v1577
        %v2631 = vunpack.c.l.b16 %v1580
        %v2632 = vunpack.c.l.b16 %v1584
        %v2633 = vunpack.c.l.b16 %v1587
        %v2634 = vunpack.c.l.b16 %v1591
        %v2635 = vunpack.c.l.b16 %v1594
        %v2636 = vpack.c.b16 %v2605, %v2604
        %v2637 = vpack.c.b16 %v2607, %v2606
        %v2638 = vpack.c.b16 %v2609, %v2608
        %v2639 = vpack.c.b16 %v2611, %v2610
        %v2640 = vpack.c.b16 %v2613, %v2612
        %v2641 = vpack.c.b16 %v2615, %v2614
        %v2642 = vpack.c.b16 %v2617, %v2616
        %v2643 = vpack.c.b16 %v2619, %v2618
        %v2644 = vpack.c.b16 %v2621, %v2620
        %v2645 = vpack.c.b16 %v2623, %v2622
        %v2646 = vpack.c.b16 %v2625, %v2624
        %v2647 = vpack.c.b16 %v2627, %v2626
        %v2648 = vpack.c.b16 %v2629, %v2628
        %v2649 = vpack.c.b16 %v2631, %v2630
        %v2650 = vpack.c.b16 %v2633, %v2632
        %v2651 = vpack.c.b16 %v2635, %v2634
        %2652 = vrot.lane.b32.xlu0 %v2636, 20
        %v2653 = vpop.permute.xlu0 %2652
        %2654 = vrot.lane.b32.xlu0 %v2637, 20
        %v2655 = vpop.permute.xlu0 %2654
        %2656 = vrot.lane.b32.xlu0 %v2638, 20
        %v2657 = vpop.permute.xlu0 %2656
        %2658 = vrot.lane.b32.xlu0 %v2639, 20
        %v2659 = vpop.permute.xlu0 %2658
        %2660 = vrot.lane.b32.xlu0 %v2640, 20
        %v2661 = vpop.permute.xlu0 %2660
        %2662 = vrot.lane.b32.xlu0 %v2641, 20
        %v2663 = vpop.permute.xlu0 %2662
        %2664 = vrot.lane.b32.xlu0 %v2642, 20
        %v2665 = vpop.permute.xlu0 %2664
        %2666 = vrot.lane.b32.xlu0 %v2643, 20
        %v2667 = vpop.permute.xlu0 %2666
        %2668 = vrot.lane.b32.xlu0 %v2644, 20
        %v2669 = vpop.permute.xlu0 %2668
        %2670 = vrot.lane.b32.xlu0 %v2645, 20
        %v2671 = vpop.permute.xlu0 %2670
        %2672 = vrot.lane.b32.xlu0 %v2646, 20
        %v2673 = vpop.permute.xlu0 %2672
        %2674 = vrot.lane.b32.xlu0 %v2647, 20
        %v2675 = vpop.permute.xlu0 %2674
        %2676 = vrot.lane.b32.xlu0 %v2648, 20
        %v2677 = vpop.permute.xlu0 %2676
        %2678 = vrot.lane.b32.xlu0 %v2649, 20
        %v2679 = vpop.permute.xlu0 %2678
        %2680 = vrot.lane.b32.xlu0 %v2650, 20
        %v2681 = vpop.permute.xlu0 %2680
        %2682 = vrot.lane.b32.xlu0 %v2651, 20
        %v2683 = vpop.permute.xlu0 %2682
        %v2700 = vunpack.c.l.b16 %v1596
        %v2701 = vunpack.c.l.b16 %v1597
        %v2702 = vunpack.c.l.b16 %v1598
        %v2703 = vunpack.c.l.b16 %v1599
        %v2704 = vunpack.c.l.b16 %v1600
        %v2705 = vunpack.c.l.b16 %v1601
        %v2706 = vunpack.c.l.b16 %v1602
        %v2707 = vunpack.c.l.b16 %v1603
        %v2708 = vunpack.c.l.b16 %v1604
        %v2709 = vunpack.c.l.b16 %v1605
        %v2710 = vunpack.c.l.b16 %v1606
        %v2711 = vunpack.c.l.b16 %v1607
        %v2712 = vunpack.c.l.b16 %v1608
        %v2713 = vunpack.c.l.b16 %v1609
        %v2714 = vunpack.c.l.b16 %v1610
        %v2715 = vunpack.c.l.b16 %v1611
        %v2716 = vunpack.c.l.b16 %v1612
        %v2717 = vunpack.c.l.b16 %v1613
        %v2718 = vunpack.c.l.b16 %v1614
        %v2719 = vunpack.c.l.b16 %v1615
        %v2720 = vunpack.c.l.b16 %v1616
        %v2721 = vunpack.c.l.b16 %v1617
        %v2722 = vunpack.c.l.b16 %v1618
        %v2723 = vunpack.c.l.b16 %v1619
        %v2724 = vunpack.c.l.b16 %v1620
        %v2725 = vunpack.c.l.b16 %v1621
        %v2726 = vunpack.c.l.b16 %v1622
        %v2727 = vunpack.c.l.b16 %v1623
        %v2728 = vunpack.c.l.b16 %v1624
        %v2729 = vunpack.c.l.b16 %v1625
        %v2730 = vunpack.c.l.b16 %v1626
        %v2731 = vunpack.c.l.b16 %v1627
        %v2732 = vpack.c.b16 %v2701, %v2700
        %v2733 = vpack.c.b16 %v2703, %v2702
        %v2734 = vpack.c.b16 %v2705, %v2704
        %v2735 = vpack.c.b16 %v2707, %v2706
        %v2736 = vpack.c.b16 %v2709, %v2708
        %v2737 = vpack.c.b16 %v2711, %v2710
        %v2738 = vpack.c.b16 %v2713, %v2712
        %v2739 = vpack.c.b16 %v2715, %v2714
        %v2740 = vpack.c.b16 %v2717, %v2716
        %v2741 = vpack.c.b16 %v2719, %v2718
        %v2742 = vpack.c.b16 %v2721, %v2720
        %v2743 = vpack.c.b16 %v2723, %v2722
        %v2744 = vpack.c.b16 %v2725, %v2724
        %v2745 = vpack.c.b16 %v2727, %v2726
        %v2746 = vpack.c.b16 %v2729, %v2728
        %v2747 = vpack.c.b16 %v2731, %v2730
        %2748 = vrot.lane.b32.xlu0 %v2732, 24
        %v2749 = vpop.permute.xlu0 %2748
        %2750 = vrot.lane.b32.xlu0 %v2733, 24
        %v2751 = vpop.permute.xlu0 %2750
        %2752 = vrot.lane.b32.xlu0 %v2734, 24
        %v2753 = vpop.permute.xlu0 %2752
        %2754 = vrot.lane.b32.xlu0 %v2735, 24
        %v2755 = vpop.permute.xlu0 %2754
        %2756 = vrot.lane.b32.xlu0 %v2736, 24
        %v2757 = vpop.permute.xlu0 %2756
        %2758 = vrot.lane.b32.xlu0 %v2737, 24
        %v2759 = vpop.permute.xlu0 %2758
        %2760 = vrot.lane.b32.xlu0 %v2738, 24
        %v2761 = vpop.permute.xlu0 %2760
        %2762 = vrot.lane.b32.xlu0 %v2739, 24
        %v2763 = vpop.permute.xlu0 %2762
        %2764 = vrot.lane.b32.xlu0 %v2740, 24
        %v2765 = vpop.permute.xlu0 %2764
        %2766 = vrot.lane.b32.xlu0 %v2741, 24
        %v2767 = vpop.permute.xlu0 %2766
        %2768 = vrot.lane.b32.xlu0 %v2742, 24
        %v2769 = vpop.permute.xlu0 %2768
        %2770 = vrot.lane.b32.xlu0 %v2743, 24
        %v2771 = vpop.permute.xlu0 %2770
        %2772 = vrot.lane.b32.xlu0 %v2744, 24
        %v2773 = vpop.permute.xlu0 %2772
        %2774 = vrot.lane.b32.xlu0 %v2745, 24
        %v2775 = vpop.permute.xlu0 %2774
        %2776 = vrot.lane.b32.xlu0 %v2746, 24
        %v2777 = vpop.permute.xlu0 %2776
        %2778 = vrot.lane.b32.xlu0 %v2747, 24
        %v2779 = vpop.permute.xlu0 %2778
        %v2780 = vunpack.c.l.b16 %v1657
        %v2781 = vunpack.c.l.b16 %v1667
        %v2782 = vunpack.c.l.b16 %v1681
        %v2783 = vunpack.c.l.b16 %v1691
        %v2784 = vunpack.c.l.b16 %v1705
        %v2785 = vunpack.c.l.b16 %v1715
        %v2786 = vunpack.c.l.b16 %v1729
        %v2787 = vunpack.c.l.b16 %v1739
        %v2788 = vunpack.c.l.b16 %v1753
        %v2789 = vunpack.c.l.b16 %v1763
        %v2790 = vunpack.c.l.b16 %v1777
        %v2791 = vunpack.c.l.b16 %v1787
        %v2792 = vunpack.c.l.b16 %v1801
        %v2793 = vunpack.c.l.b16 %v1811
        %v2794 = vunpack.c.l.b16 %v1825
        %v2795 = vunpack.c.l.b16 %v1835
        %v2796 = vunpack.c.l.b16 %v1849
        %v2797 = vunpack.c.l.b16 %v1859
        %v2798 = vunpack.c.l.b16 %v1873
        %v2799 = vunpack.c.l.b16 %v1883
        %v2800 = vunpack.c.l.b16 %v1897
        %v2801 = vunpack.c.l.b16 %v1907
        %v2802 = vunpack.c.l.b16 %v1921
        %v2803 = vunpack.c.l.b16 %v1931
        %v2804 = vunpack.c.l.b16 %v1945
        %v2805 = vunpack.c.l.b16 %v1955
        %v2806 = vunpack.c.l.b16 %v1969
        %v2807 = vunpack.c.l.b16 %v1979
        %v2808 = vunpack.c.l.b16 %v1993
        %v2809 = vunpack.c.l.b16 %v2003
        %v2810 = vunpack.c.l.b16 %v2017
        %v2811 = vunpack.c.l.b16 %v2027
        %v2812 = vpack.c.b16 %v2781, %v2780
        %v2813 = vpack.c.b16 %v2783, %v2782
        %v2814 = vpack.c.b16 %v2785, %v2784
        %v2815 = vpack.c.b16 %v2787, %v2786
        %v2816 = vpack.c.b16 %v2789, %v2788
        %v2817 = vpack.c.b16 %v2791, %v2790
        %v2818 = vpack.c.b16 %v2793, %v2792
        %v2819 = vpack.c.b16 %v2795, %v2794
        %v2820 = vpack.c.b16 %v2797, %v2796
        %v2821 = vpack.c.b16 %v2799, %v2798
        %v2822 = vpack.c.b16 %v2801, %v2800
        %v2823 = vpack.c.b16 %v2803, %v2802
        %v2824 = vpack.c.b16 %v2805, %v2804
        %v2825 = vpack.c.b16 %v2807, %v2806
        %v2826 = vpack.c.b16 %v2809, %v2808
        %v2827 = vpack.c.b16 %v2811, %v2810
        %2828 = vrot.lane.b32.xlu0 %v2812, 28
        %v2829 = vpop.permute.xlu0 %2828
        %2830 = vrot.lane.b32.xlu0 %v2813, 28
        %v2831 = vpop.permute.xlu0 %2830
        %2832 = vrot.lane.b32.xlu0 %v2814, 28
        %v2833 = vpop.permute.xlu0 %2832
        %2834 = vrot.lane.b32.xlu0 %v2815, 28
        %v2835 = vpop.permute.xlu0 %2834
        %2836 = vrot.lane.b32.xlu0 %v2816, 28
        %v2837 = vpop.permute.xlu0 %2836
        %2838 = vrot.lane.b32.xlu0 %v2817, 28
        %v2839 = vpop.permute.xlu0 %2838
        %2840 = vrot.lane.b32.xlu0 %v2818, 28
        %v2841 = vpop.permute.xlu0 %2840
        %2842 = vrot.lane.b32.xlu0 %v2819, 28
        %v2843 = vpop.permute.xlu0 %2842
        %2844 = vrot.lane.b32.xlu0 %v2820, 28
        %v2845 = vpop.permute.xlu0 %2844
        %2846 = vrot.lane.b32.xlu0 %v2821, 28
        %v2847 = vpop.permute.xlu0 %2846
        %2848 = vrot.lane.b32.xlu0 %v2822, 28
        %v2849 = vpop.permute.xlu0 %2848
        %2850 = vrot.lane.b32.xlu0 %v2823, 28
        %v2851 = vpop.permute.xlu0 %2850
        %2852 = vrot.lane.b32.xlu0 %v2824, 28
        %v2853 = vpop.permute.xlu0 %2852
        %2854 = vrot.lane.b32.xlu0 %v2825, 28
        %v2855 = vpop.permute.xlu0 %2854
        %2856 = vrot.lane.b32.xlu0 %v2826, 28
        %v2857 = vpop.permute.xlu0 %2856
        %2858 = vrot.lane.b32.xlu0 %v2827, 28
        %v2859 = vpop.permute.xlu0 %2858
        %v2860 = vunpack.c.l.b16 %v2095
        %v2861 = vunpack.c.l.b16 %v2098
        %v2862 = vunpack.c.l.b16 %v2102
        %v2863 = vunpack.c.l.b16 %v2105
        %v2864 = vunpack.c.l.b16 %v2109
        %v2865 = vunpack.c.l.b16 %v2112
        %v2866 = vunpack.c.l.b16 %v2116
        %v2867 = vunpack.c.l.b16 %v2119
        %v2868 = vunpack.c.l.b16 %v2123
        %v2869 = vunpack.c.l.b16 %v2126
        %v2870 = vunpack.c.l.b16 %v2130
        %v2871 = vunpack.c.l.b16 %v2133
        %v2872 = vunpack.c.l.b16 %v2137
        %v2873 = vunpack.c.l.b16 %v2140
        %v2874 = vunpack.c.l.b16 %v2144
        %v2875 = vunpack.c.l.b16 %v2147
        %v2876 = vunpack.c.l.b16 %v2151
        %v2877 = vunpack.c.l.b16 %v2154
        %v2878 = vunpack.c.l.b16 %v2158
        %v2879 = vunpack.c.l.b16 %v2161
        %v2880 = vunpack.c.l.b16 %v2165
        %v2881 = vunpack.c.l.b16 %v2168
        %v2882 = vunpack.c.l.b16 %v2172
        %v2883 = vunpack.c.l.b16 %v2175
        %v2884 = vunpack.c.l.b16 %v2179
        %v2885 = vunpack.c.l.b16 %v2182
        %v2886 = vunpack.c.l.b16 %v2186
        %v2887 = vunpack.c.l.b16 %v2189
        %v2888 = vunpack.c.l.b16 %v2193
        %v2889 = vunpack.c.l.b16 %v2196
        %v2890 = vunpack.c.l.b16 %v2200
        %v2891 = vunpack.c.l.b16 %v2203
        %v2892 = vpack.c.b16 %v2861, %v2860
        %v2893 = vpack.c.b16 %v2863, %v2862
        %v2894 = vpack.c.b16 %v2865, %v2864
        %v2895 = vpack.c.b16 %v2867, %v2866
        %v2896 = vpack.c.b16 %v2869, %v2868
        %v2897 = vpack.c.b16 %v2871, %v2870
        %v2898 = vpack.c.b16 %v2873, %v2872
        %v2899 = vpack.c.b16 %v2875, %v2874
        %v2900 = vpack.c.b16 %v2877, %v2876
        %v2901 = vpack.c.b16 %v2879, %v2878
        %v2902 = vpack.c.b16 %v2881, %v2880
        %v2903 = vpack.c.b16 %v2883, %v2882
        %v2904 = vpack.c.b16 %v2885, %v2884
        %v2905 = vpack.c.b16 %v2887, %v2886
        %v2906 = vpack.c.b16 %v2889, %v2888
        %v2907 = vpack.c.b16 %v2891, %v2890
        %2908 = vrot.lane.b32.xlu0 %v2892, 32
        %v2909 = vpop.permute.xlu0 %2908
        %2910 = vrot.lane.b32.xlu0 %v2893, 32
        %v2911 = vpop.permute.xlu0 %2910
        %2912 = vrot.lane.b32.xlu0 %v2894, 32
        %v2913 = vpop.permute.xlu0 %2912
        %2914 = vrot.lane.b32.xlu0 %v2895, 32
        %v2915 = vpop.permute.xlu0 %2914
        %2916 = vrot.lane.b32.xlu0 %v2896, 32
        %v2917 = vpop.permute.xlu0 %2916
        %2918 = vrot.lane.b32.xlu0 %v2897, 32
        %v2919 = vpop.permute.xlu0 %2918
        %2920 = vrot.lane.b32.xlu0 %v2898, 32
        %v2921 = vpop.permute.xlu0 %2920
        %2922 = vrot.lane.b32.xlu0 %v2899, 32
        %v2923 = vpop.permute.xlu0 %2922
        %2924 = vrot.lane.b32.xlu0 %v2900, 32
        %v2925 = vpop.permute.xlu0 %2924
        %2926 = vrot.lane.b32.xlu0 %v2901, 32
        %v2927 = vpop.permute.xlu0 %2926
        %2928 = vrot.lane.b32.xlu0 %v2902, 32
        %v2929 = vpop.permute.xlu0 %2928
        %2930 = vrot.lane.b32.xlu0 %v2903, 32
        %v2931 = vpop.permute.xlu0 %2930
        %2932 = vrot.lane.b32.xlu0 %v2904, 32
        %v2933 = vpop.permute.xlu0 %2932
        %2934 = vrot.lane.b32.xlu0 %v2905, 32
        %v2935 = vpop.permute.xlu0 %2934
        %2936 = vrot.lane.b32.xlu0 %v2906, 32
        %v2937 = vpop.permute.xlu0 %2936
        %2938 = vrot.lane.b32.xlu0 %v2907, 32
        %v2939 = vpop.permute.xlu0 %2938
        %vm2940 = vcmask 31744
        %v2943 = vsel %vm2940, %v2252, %v2317
        %v2946 = vsel %vm2940, %v2253, %v2319
        %v2949 = vsel %vm2940, %v2254, %v2321
        %v2952 = vsel %vm2940, %v2255, %v2323
        %v2955 = vsel %vm2940, %v2256, %v2325
        %v2958 = vsel %vm2940, %v2257, %v2327
        %v2961 = vsel %vm2940, %v2258, %v2329
        %v2964 = vsel %vm2940, %v2259, %v2331
        %v2967 = vsel %vm2940, %v2260, %v2333
        %v2970 = vsel %vm2940, %v2261, %v2335
        %v2973 = vsel %vm2940, %v2262, %v2337
        %v2976 = vsel %vm2940, %v2263, %v2339
        %v2979 = vsel %vm2940, %v2264, %v2341
        %v2982 = vsel %vm2940, %v2265, %v2343
        %v2985 = vsel %vm2940, %v2266, %v2345
        %v2988 = vsel %vm2940, %v2267, %v2347
        %vm2989 = vcmask 64512
        %v2991 = vsel %vm2989, %v2943, %v2397
        %v2993 = vsel %vm2989, %v2946, %v2399
        %v2995 = vsel %vm2989, %v2949, %v2401
        %v2997 = vsel %vm2989, %v2952, %v2403
        %v2999 = vsel %vm2989, %v2955, %v2405
        %v3001 = vsel %vm2989, %v2958, %v2407
        %v3003 = vsel %vm2989, %v2961, %v2409
        %v3005 = vsel %vm2989, %v2964, %v2411
        %v3007 = vsel %vm2989, %v2967, %v2413
        %v3009 = vsel %vm2989, %v2970, %v2415
        %v3011 = vsel %vm2989, %v2973, %v2417
        %v3013 = vsel %vm2989, %v2976, %v2419
        %v3015 = vsel %vm2989, %v2979, %v2421
        %v3017 = vsel %vm2989, %v2982, %v2423
        %v3019 = vsel %vm2989, %v2985, %v2425
        %v3021 = vsel %vm2989, %v2988, %v2427
        %vm3022 = vcmask 97280
        %v3024 = vsel %vm3022, %v2991, %v2493
        %v3026 = vsel %vm3022, %v2993, %v2495
        %v3028 = vsel %vm3022, %v2995, %v2497
        %v3030 = vsel %vm3022, %v2997, %v2499
        %v3032 = vsel %vm3022, %v2999, %v2501
        %v3034 = vsel %vm3022, %v3001, %v2503
        %v3036 = vsel %vm3022, %v3003, %v2505
        %v3038 = vsel %vm3022, %v3005, %v2507
        %v3040 = vsel %vm3022, %v3007, %v2509
        %v3042 = vsel %vm3022, %v3009, %v2511
        %v3044 = vsel %vm3022, %v3011, %v2513
        %v3046 = vsel %vm3022, %v3013, %v2515
        %v3048 = vsel %vm3022, %v3015, %v2517
        %v3050 = vsel %vm3022, %v3017, %v2519
        %v3052 = vsel %vm3022, %v3019, %v2521
        %v3054 = vsel %vm3022, %v3021, %v2523
        %vm3055 = vcmask 130048
        %v3057 = vsel %vm3055, %v3024, %v2573
        %v3059 = vsel %vm3055, %v3026, %v2575
        %v3061 = vsel %vm3055, %v3028, %v2577
        %v3063 = vsel %vm3055, %v3030, %v2579
        %v3065 = vsel %vm3055, %v3032, %v2581
        %v3067 = vsel %vm3055, %v3034, %v2583
        %v3069 = vsel %vm3055, %v3036, %v2585
        %v3071 = vsel %vm3055, %v3038, %v2587
        %v3073 = vsel %vm3055, %v3040, %v2589
        %v3075 = vsel %vm3055, %v3042, %v2591
        %v3077 = vsel %vm3055, %v3044, %v2593
        %v3079 = vsel %vm3055, %v3046, %v2595
        %v3081 = vsel %vm3055, %v3048, %v2597
        %v3083 = vsel %vm3055, %v3050, %v2599
        %v3085 = vsel %vm3055, %v3052, %v2601
        %v3087 = vsel %vm3055, %v3054, %v2603
        %vm3088 = vcmask 162816
        %v3090 = vsel %vm3088, %v3057, %v2653
        %v3092 = vsel %vm3088, %v3059, %v2655
        %v3094 = vsel %vm3088, %v3061, %v2657
        %v3096 = vsel %vm3088, %v3063, %v2659
        %v3098 = vsel %vm3088, %v3065, %v2661
        %v3100 = vsel %vm3088, %v3067, %v2663
        %v3102 = vsel %vm3088, %v3069, %v2665
        %v3104 = vsel %vm3088, %v3071, %v2667
        %v3106 = vsel %vm3088, %v3073, %v2669
        %v3108 = vsel %vm3088, %v3075, %v2671
        %v3110 = vsel %vm3088, %v3077, %v2673
        %v3112 = vsel %vm3088, %v3079, %v2675
        %v3114 = vsel %vm3088, %v3081, %v2677
        %v3116 = vsel %vm3088, %v3083, %v2679
        %v3118 = vsel %vm3088, %v3085, %v2681
        %v3120 = vsel %vm3088, %v3087, %v2683
        %vm3121 = vcmask 195584
        %v3123 = vsel %vm3121, %v3090, %v2749
        %v3125 = vsel %vm3121, %v3092, %v2751
        %v3127 = vsel %vm3121, %v3094, %v2753
        %v3129 = vsel %vm3121, %v3096, %v2755
        %v3131 = vsel %vm3121, %v3098, %v2757
        %v3133 = vsel %vm3121, %v3100, %v2759
        %v3135 = vsel %vm3121, %v3102, %v2761
        %v3137 = vsel %vm3121, %v3104, %v2763
        %v3139 = vsel %vm3121, %v3106, %v2765
        %v3141 = vsel %vm3121, %v3108, %v2767
        %v3143 = vsel %vm3121, %v3110, %v2769
        %v3145 = vsel %vm3121, %v3112, %v2771
        %v3147 = vsel %vm3121, %v3114, %v2773
        %v3149 = vsel %vm3121, %v3116, %v2775
        %v3151 = vsel %vm3121, %v3118, %v2777
        %v3153 = vsel %vm3121, %v3120, %v2779
        %vm3154 = vcmask 228352
        %v3156 = vsel %vm3154, %v3123, %v2829
        %v3158 = vsel %vm3154, %v3125, %v2831
        %v3160 = vsel %vm3154, %v3127, %v2833
        %v3162 = vsel %vm3154, %v3129, %v2835
        %v3164 = vsel %vm3154, %v3131, %v2837
        %v3166 = vsel %vm3154, %v3133, %v2839
        %v3168 = vsel %vm3154, %v3135, %v2841
        %v3170 = vsel %vm3154, %v3137, %v2843
        %v3172 = vsel %vm3154, %v3139, %v2845
        %v3174 = vsel %vm3154, %v3141, %v2847
        %v3176 = vsel %vm3154, %v3143, %v2849
        %v3178 = vsel %vm3154, %v3145, %v2851
        %v3180 = vsel %vm3154, %v3147, %v2853
        %v3182 = vsel %vm3154, %v3149, %v2855
        %v3184 = vsel %vm3154, %v3151, %v2857
        %v3186 = vsel %vm3154, %v3153, %v2859
        %vm3187 = vcmask 261120
        %v3189 = vsel %vm3187, %v3156, %v2909
        %v3191 = vsel %vm3187, %v3158, %v2911
        %v3193 = vsel %vm3187, %v3160, %v2913
        %v3195 = vsel %vm3187, %v3162, %v2915
        %v3197 = vsel %vm3187, %v3164, %v2917
        %v3199 = vsel %vm3187, %v3166, %v2919
        %v3201 = vsel %vm3187, %v3168, %v2921
        %v3203 = vsel %vm3187, %v3170, %v2923
        %v3205 = vsel %vm3187, %v3172, %v2925
        %v3207 = vsel %vm3187, %v3174, %v2927
        %v3209 = vsel %vm3187, %v3176, %v2929
        %v3211 = vsel %vm3187, %v3178, %v2931
        %v3213 = vsel %vm3187, %v3180, %v2933
        %v3215 = vsel %vm3187, %v3182, %v2935
        %v3217 = vsel %vm3187, %v3184, %v2937
        %v3219 = vsel %vm3187, %v3186, %v2939
        %v3220 = vld [vmem:[%s1] sm:$0xf]
        %v3221 = vld [vmem:[%s1 + $0x4] sm:$0xf]
        %v3222 = vld [vmem:[%s1 + $0x8] sm:$0xf]
        %v3223 = vld [vmem:[%s1 + $0xc] sm:$0xf]
        %v3224 = vld [vmem:[%s1 + $0x10] sm:$0x3]
        %v3225 = vld [vmem:[%s4] sm:$0x1]
        %v3227 = vlaneseq
        %v3228 = vshrl.u32 %v3227, 7
        %v3229 = vsub.s32 0, %v3228
        %v3230 = vrot.slane %v3225, %v3229
        %v3237 = vunpack.c.l.b16 %v3220
        %v3238 = vunpack.c.l.b16 %v3221
        %v3239 = vunpack.c.l.b16 %v3222
        %v3240 = vunpack.c.l.b16 %v3223
        %v3241 = vunpack.c.l.b16 %v3224
        %v3242 = vpack.c.b16 %v3238, %v3237
        %v3243 = vpack.c.b16 %v3240, %v3239
        %v3244 = vpack.c.b16 %v3241, %v3241
        %vm3247 = vcmask 293888
        %v3248 = vsel %vm3247, %v3189, 0
        %v3250 = vsel %vm3247, %v3191, 0
        %v3252 = vsel %vm3247, %v3193, 0
        %v3254 = vsel %vm3247, %v3195, 0
        %v3256 = vsel %vm3247, %v3197, 0
        %v3258 = vsel %vm3247, %v3199, 0
        %v3260 = vsel %vm3247, %v3201, 0
        %v3262 = vsel %vm3247, %v3203, 0
        %v3264 = vsel %vm3247, %v3205, 0
        %v3266 = vsel %vm3247, %v3207, 0
        %v3268 = vsel %vm3247, %v3209, 0
        %v3270 = vsel %vm3247, %v3211, 0
        %v3272 = vsel %vm3247, %v3213, 0
        %v3274 = vsel %vm3247, %v3215, 0
        %v3276 = vsel %vm3247, %v3217, 0
        %v3278 = vsel %vm3247, %v3219, 0
        %vm3280 = vcmask 1041408
        %v3282 = vsel %vm3280, %v3244, 0
        %3284 = vmatprep.subr.bf16.mxu0 0
        %3285 = vmatpush1.bf16.msra.mxu0 0
        %3286 = vmatprep.subr.bf16.mxu0 0
        %3287 = vmatpush1.bf16.msra.mxu0 0
        %3288 = vmatprep.subr.bf16.mxu0 0
        %3289 = vmatpush1.bf16.msra.mxu0 0
        %3290 = vmatprep.subr.bf16.mxu0 0
        %3291 = vmatpush1.bf16.msra.mxu0 0
        %3292 = vmatprep.subr.bf16.mxu0 0
        %3293 = vmatpush1.bf16.msra.mxu0 0
        %3294 = vmatprep.subr.bf16.mxu0 0
        %3295 = vmatpush1.bf16.msra.mxu0 %v3282
        %3296 = vmatprep.subr.bf16.mxu0 0
        %3297 = vmatpush1.bf16.msra.mxu0 %v3243
        %3298 = vmatprep.subr.bf16.mxu0 0
        %3299 = vmatpush1.bf16.msra.mxu0 %v3242
        %3300 = vmatprep.subr.bf16.mxu0 0
        %3301 = vmatpush2.bf16.msra.mxu0 0
        %3302 = vmatprep.subr.bf16.mxu0 0
        %3303 = vmatpush2.bf16.msra.mxu0 0
        %3304 = vmatprep.subr.bf16.mxu0 0
        %3305 = vmatpush2.bf16.msra.mxu0 0
        %3306 = vmatprep.subr.bf16.mxu0 0
        %3307 = vmatpush2.bf16.msra.mxu0 0
        %3308 = vmatprep.subr.bf16.mxu0 0
        %3309 = vmatpush2.bf16.msra.mxu0 0
        %3310 = vmatprep.subr.bf16.mxu0 0
        %3311 = vmatpush2.bf16.msra.mxu0 0
        %3312 = vmatprep.subr.bf16.mxu0 0
        %3313 = vmatpush2.bf16.msra.mxu0 0
        %3314 = vmatprep.subr.bf16.mxu0 0
        %3315 = vmatpush2.bf16.msra.mxu0 0
        %3316 = vmatprep.mubr.bf16.mxu0 0
        %3317 = vmatmul.mubr.bf16.gmra.mxu0 %v3248
        %v3318 = vpop.f32.mrf.mxu0
        %v3319 = vadd.f32 %v3230, %v3318
        %v3320 = vpop.f32.mrf.mxu0
        %v3321 = vpop.f32.mrf.mxu0
        %v3322 = vadd.f32 %v3230, %v3321
        %v3323 = vpop.f32.mrf.mxu0
        %3324 = vmatprep.mubr.bf16.mxu0 0
        %3325 = vmatmul.mubr.bf16.gmra.mxu0 %v3250
        %v3326 = vpop.f32.mrf.mxu0
        %v3327 = vadd.f32 %v3230, %v3326
        %v3328 = vpop.f32.mrf.mxu0
        %v3329 = vpop.f32.mrf.mxu0
        %v3330 = vadd.f32 %v3230, %v3329
        %v3331 = vpop.f32.mrf.mxu0
        %3332 = vmatprep.mubr.bf16.mxu0 0
        %3333 = vmatmul.mubr.bf16.gmra.mxu0 %v3252
        %v3334 = vpop.f32.mrf.mxu0
        %v3335 = vadd.f32 %v3230, %v3334
        %v3336 = vpop.f32.mrf.mxu0
        %v3337 = vpop.f32.mrf.mxu0
        %v3338 = vadd.f32 %v3230, %v3337
        %v3339 = vpop.f32.mrf.mxu0
        %3340 = vmatprep.mubr.bf16.mxu0 0
        %3341 = vmatmul.mubr.bf16.gmra.mxu0 %v3254
        %v3342 = vpop.f32.mrf.mxu0
        %v3343 = vadd.f32 %v3230, %v3342
        %v3344 = vpop.f32.mrf.mxu0
        %v3345 = vpop.f32.mrf.mxu0
        %v3346 = vadd.f32 %v3230, %v3345
        %v3347 = vpop.f32.mrf.mxu0
        %3348 = vmatprep.mubr.bf16.mxu0 0
        %3349 = vmatmul.mubr.bf16.gmra.mxu0 %v3256
        %v3350 = vpop.f32.mrf.mxu0
        %v3351 = vadd.f32 %v3230, %v3350
        %v3352 = vpop.f32.mrf.mxu0
        %v3353 = vpop.f32.mrf.mxu0
        %v3354 = vadd.f32 %v3230, %v3353
        %v3355 = vpop.f32.mrf.mxu0
        %3356 = vmatprep.mubr.bf16.mxu0 0
        %3357 = vmatmul.mubr.bf16.gmra.mxu0 %v3258
        %v3358 = vpop.f32.mrf.mxu0
        %v3359 = vadd.f32 %v3230, %v3358
        %v3360 = vpop.f32.mrf.mxu0
        %v3361 = vpop.f32.mrf.mxu0
        %v3362 = vadd.f32 %v3230, %v3361
        %v3363 = vpop.f32.mrf.mxu0
        %3364 = vmatprep.mubr.bf16.mxu0 0
        %3365 = vmatmul.mubr.bf16.gmra.mxu0 %v3260
        %v3366 = vpop.f32.mrf.mxu0
        %v3367 = vadd.f32 %v3230, %v3366
        %v3368 = vpop.f32.mrf.mxu0
        %v3369 = vpop.f32.mrf.mxu0
        %v3370 = vadd.f32 %v3230, %v3369
        %v3371 = vpop.f32.mrf.mxu0
        %3372 = vmatprep.mubr.bf16.mxu0 0
        %3373 = vmatmul.mubr.bf16.gmra.mxu0 %v3262
        %v3374 = vpop.f32.mrf.mxu0
        %v3375 = vadd.f32 %v3230, %v3374
        %v3376 = vpop.f32.mrf.mxu0
        %v3377 = vpop.f32.mrf.mxu0
        %v3378 = vadd.f32 %v3230, %v3377
        %v3379 = vpop.f32.mrf.mxu0
        %3380 = vmatprep.mubr.bf16.mxu0 0
        %3381 = vmatmul.mubr.bf16.gmra.mxu0 %v3264
        %v3382 = vpop.f32.mrf.mxu0
        %v3383 = vadd.f32 %v3230, %v3382
        %v3384 = vpop.f32.mrf.mxu0
        %v3385 = vpop.f32.mrf.mxu0
        %v3386 = vadd.f32 %v3230, %v3385
        %v3387 = vpop.f32.mrf.mxu0
        %3388 = vmatprep.mubr.bf16.mxu0 0
        %3389 = vmatmul.mubr.bf16.gmra.mxu0 %v3266
        %v3390 = vpop.f32.mrf.mxu0
        %v3391 = vadd.f32 %v3230, %v3390
        %v3392 = vpop.f32.mrf.mxu0
        %v3393 = vpop.f32.mrf.mxu0
        %v3394 = vadd.f32 %v3230, %v3393
        %v3395 = vpop.f32.mrf.mxu0
        %3396 = vmatprep.mubr.bf16.mxu0 0
        %3397 = vmatmul.mubr.bf16.gmra.mxu0 %v3268
        %v3398 = vpop.f32.mrf.mxu0
        %v3399 = vadd.f32 %v3230, %v3398
        %v3400 = vpop.f32.mrf.mxu0
        %v3401 = vpop.f32.mrf.mxu0
        %v3402 = vadd.f32 %v3230, %v3401
        %v3403 = vpop.f32.mrf.mxu0
        %3404 = vmatprep.mubr.bf16.mxu0 0
        %3405 = vmatmul.mubr.bf16.gmra.mxu0 %v3270
        %v3406 = vpop.f32.mrf.mxu0
        %v3407 = vadd.f32 %v3230, %v3406
        %v3408 = vpop.f32.mrf.mxu0
        %v3409 = vpop.f32.mrf.mxu0
        %v3410 = vadd.f32 %v3230, %v3409
        %v3411 = vpop.f32.mrf.mxu0
        %3412 = vmatprep.mubr.bf16.mxu0 0
        %3413 = vmatmul.mubr.bf16.gmra.mxu0 %v3272
        %v3414 = vpop.f32.mrf.mxu0
        %v3415 = vadd.f32 %v3230, %v3414
        %v3416 = vpop.f32.mrf.mxu0
        %v3417 = vpop.f32.mrf.mxu0
        %v3418 = vadd.f32 %v3230, %v3417
        %v3419 = vpop.f32.mrf.mxu0
        %3420 = vmatprep.mubr.bf16.mxu0 0
        %3421 = vmatmul.mubr.bf16.gmra.mxu0 %v3274
        %v3422 = vpop.f32.mrf.mxu0
        %v3423 = vadd.f32 %v3230, %v3422
        %v3424 = vpop.f32.mrf.mxu0
        %v3425 = vpop.f32.mrf.mxu0
        %v3426 = vadd.f32 %v3230, %v3425
        %v3427 = vpop.f32.mrf.mxu0
        %3428 = vmatprep.mubr.bf16.mxu0 0
        %3429 = vmatmul.mubr.bf16.gmra.mxu0 %v3276
        %v3430 = vpop.f32.mrf.mxu0
        %v3431 = vadd.f32 %v3230, %v3430
        %v3432 = vpop.f32.mrf.mxu0
        %v3433 = vpop.f32.mrf.mxu0
        %v3434 = vadd.f32 %v3230, %v3433
        %v3435 = vpop.f32.mrf.mxu0
        %3436 = vmatprep.mubr.bf16.mxu0 0
        %3437 = vmatmul.mubr.bf16.gmra.mxu0 %v3278
        %v3438 = vpop.f32.mrf.mxu0
        %v3439 = vadd.f32 %v3230, %v3438
        %v3440 = vpop.f32.mrf.mxu0
        %v3441 = vpop.f32.mrf.mxu0
        %v3442 = vadd.f32 %v3230, %v3441
        %v3443 = vpop.f32.mrf.mxu0
        %3444 = vdwg.mxu0
        %v3445 = vmax.f32 %v3319, 0.0
        %v3446 = vmax.f32 %v3322, 0.0
        %v3447 = vmax.f32 %v3327, 0.0
        %v3448 = vmax.f32 %v3330, 0.0
        %v3449 = vmax.f32 %v3335, 0.0
        %v3450 = vmax.f32 %v3338, 0.0
        %v3451 = vmax.f32 %v3343, 0.0
        %v3452 = vmax.f32 %v3346, 0.0
        %v3453 = vmax.f32 %v3351, 0.0
        %v3454 = vmax.f32 %v3354, 0.0
        %v3455 = vmax.f32 %v3359, 0.0
        %v3456 = vmax.f32 %v3362, 0.0
        %v3457 = vmax.f32 %v3367, 0.0
        %v3458 = vmax.f32 %v3370, 0.0
        %v3459 = vmax.f32 %v3375, 0.0
        %v3460 = vmax.f32 %v3378, 0.0
        %v3461 = vmax.f32 %v3383, 0.0
        %v3462 = vmax.f32 %v3386, 0.0
        %v3463 = vmax.f32 %v3391, 0.0
        %v3464 = vmax.f32 %v3394, 0.0
        %v3465 = vmax.f32 %v3399, 0.0
        %v3466 = vmax.f32 %v3402, 0.0
        %v3467 = vmax.f32 %v3407, 0.0
        %v3468 = vmax.f32 %v3410, 0.0
        %v3469 = vmax.f32 %v3415, 0.0
        %v3470 = vmax.f32 %v3418, 0.0
        %v3471 = vmax.f32 %v3423, 0.0
        %v3472 = vmax.f32 %v3426, 0.0
        %v3473 = vmax.f32 %v3431, 0.0
        %v3474 = vmax.f32 %v3434, 0.0
        %v3475 = vmax.f32 %v3439, 0.0
        %v3476 = vmax.f32 %v3442, 0.0
        %v3477 = vpack.c.bf16 %v3446, %v3445
        %v3478 = vpack.c.bf16 %v3448, %v3447
        %v3479 = vpack.c.bf16 %v3450, %v3449
        %v3480 = vpack.c.bf16 %v3452, %v3451
        %v3481 = vpack.c.bf16 %v3454, %v3453
        %v3482 = vpack.c.bf16 %v3456, %v3455
        %v3483 = vpack.c.bf16 %v3458, %v3457
        %v3484 = vpack.c.bf16 %v3460, %v3459
        %v3485 = vpack.c.bf16 %v3462, %v3461
        %v3486 = vpack.c.bf16 %v3464, %v3463
        %v3487 = vpack.c.bf16 %v3466, %v3465
        %v3488 = vpack.c.bf16 %v3468, %v3467
        %v3489 = vpack.c.bf16 %v3470, %v3469
        %v3490 = vpack.c.bf16 %v3472, %v3471
        %v3491 = vpack.c.bf16 %v3474, %v3473
        %v3492 = vpack.c.bf16 %v3476, %v3475
        %v3509 = vunpack.c.l.b16 %v3477
        %v3510 = vunpack.c.h.b16 %v3477
        %v3511 = vunpack.c.l.b16 %v3478
        %v3512 = vunpack.c.h.b16 %v3478
        %v3513 = vunpack.c.l.b16 %v3479
        %v3514 = vunpack.c.h.b16 %v3479
        %v3515 = vunpack.c.l.b16 %v3480
        %v3516 = vunpack.c.h.b16 %v3480
        %v3517 = vunpack.c.l.b16 %v3481
        %v3518 = vunpack.c.h.b16 %v3481
        %v3519 = vunpack.c.l.b16 %v3482
        %v3520 = vunpack.c.h.b16 %v3482
        %v3521 = vunpack.c.l.b16 %v3483
        %v3522 = vunpack.c.h.b16 %v3483
        %v3523 = vunpack.c.l.b16 %v3484
        %v3524 = vunpack.c.h.b16 %v3484
        %v3525 = vunpack.c.l.b16 %v3485
        %v3526 = vunpack.c.h.b16 %v3485
        %v3527 = vunpack.c.l.b16 %v3486
        %v3528 = vunpack.c.h.b16 %v3486
        %v3529 = vunpack.c.l.b16 %v3487
        %v3530 = vunpack.c.h.b16 %v3487
        %v3531 = vunpack.c.l.b16 %v3488
        %v3532 = vunpack.c.h.b16 %v3488
        %v3533 = vunpack.c.l.b16 %v3489
        %v3534 = vunpack.c.h.b16 %v3489
        %v3535 = vunpack.c.l.b16 %v3490
        %v3536 = vunpack.c.h.b16 %v3490
        %v3537 = vunpack.c.l.b16 %v3491
        %v3538 = vunpack.c.h.b16 %v3491
        %v3539 = vunpack.c.l.b16 %v3492
        %v3540 = vunpack.c.h.b16 %v3492
        %v3541 = vpack.c.b16 %v3509, %v3509
        %v3542 = vpack.c.b16 %v3510, %v3510
        %v3543 = vpack.c.b16 %v3511, %v3511
        %v3544 = vpack.c.b16 %v3512, %v3512
        %v3545 = vpack.c.b16 %v3513, %v3513
        %v3546 = vpack.c.b16 %v3514, %v3514
        %v3547 = vpack.c.b16 %v3515, %v3515
        %v3548 = vpack.c.b16 %v3516, %v3516
        %v3549 = vpack.c.b16 %v3517, %v3517
        %v3550 = vpack.c.b16 %v3518, %v3518
        %v3551 = vpack.c.b16 %v3519, %v3519
        %v3552 = vpack.c.b16 %v3520, %v3520
        %v3553 = vpack.c.b16 %v3521, %v3521
        %v3554 = vpack.c.b16 %v3522, %v3522
        %v3555 = vpack.c.b16 %v3523, %v3523
        %v3556 = vpack.c.b16 %v3524, %v3524
        %v3557 = vpack.c.b16 %v3525, %v3525
        %v3558 = vpack.c.b16 %v3526, %v3526
        %v3559 = vpack.c.b16 %v3527, %v3527
        %v3560 = vpack.c.b16 %v3528, %v3528
        %v3561 = vpack.c.b16 %v3529, %v3529
        %v3562 = vpack.c.b16 %v3530, %v3530
        %v3563 = vpack.c.b16 %v3531, %v3531
        %v3564 = vpack.c.b16 %v3532, %v3532
        %v3565 = vpack.c.b16 %v3533, %v3533
        %v3566 = vpack.c.b16 %v3534, %v3534
        %v3567 = vpack.c.b16 %v3535, %v3535
        %v3568 = vpack.c.b16 %v3536, %v3536
        %v3569 = vpack.c.b16 %v3537, %v3537
        %v3570 = vpack.c.b16 %v3538, %v3538
        %v3571 = vpack.c.b16 %v3539, %v3539
        %v3572 = vpack.c.b16 %v3540, %v3540
        %vm3573 = vsmask.f32 4368
        %vm3574 = vmor %vm260, %vm3573
        %v3576 = vshrl.u32 %v3541, 16
        %v3578 = vrot.slane %v3576, 7
        %v3579 = vshll.u32 %v3541, 16
        %v3581 = vor.u32 %v3578, %v3579
        %v3582 = vrot.slane %v3578, 4
        %v3584 = vshrl.u32 %v3542, 16
        %v3586 = vrot.slane %v3584, 7
        %v3587 = vshll.u32 %v3542, 16
        %v3589 = vor.u32 %v3586, %v3587
        %v3590 = vsel %vm3574, %v3582, %v3589
        %v3591 = vrot.slane %v3586, 4
        %v3593 = vshrl.u32 %v3543, 16
        %v3595 = vrot.slane %v3593, 7
        %v3596 = vshll.u32 %v3543, 16
        %v3598 = vor.u32 %v3595, %v3596
        %v3599 = vrot.slane %v3595, 4
        %v3601 = vshrl.u32 %v3544, 16
        %v3603 = vrot.slane %v3601, 7
        %v3604 = vshll.u32 %v3544, 16
        %v3606 = vor.u32 %v3603, %v3604
        %v3607 = vsel %vm3574, %v3599, %v3606
        %v3608 = vrot.slane %v3603, 4
        %v3610 = vshrl.u32 %v3545, 16
        %v3612 = vrot.slane %v3610, 7
        %v3613 = vshll.u32 %v3545, 16
        %v3615 = vor.u32 %v3612, %v3613
        %v3616 = vrot.slane %v3612, 4
        %v3618 = vshrl.u32 %v3546, 16
        %v3620 = vrot.slane %v3618, 7
        %v3621 = vshll.u32 %v3546, 16
        %v3623 = vor.u32 %v3620, %v3621
        %v3624 = vsel %vm3574, %v3616, %v3623
        %v3625 = vrot.slane %v3620, 4
        %v3627 = vshrl.u32 %v3547, 16
        %v3629 = vrot.slane %v3627, 7
        %v3630 = vshll.u32 %v3547, 16
        %v3632 = vor.u32 %v3629, %v3630
        %v3633 = vrot.slane %v3629, 4
        %v3635 = vshrl.u32 %v3548, 16
        %v3637 = vrot.slane %v3635, 7
        %v3638 = vshll.u32 %v3548, 16
        %v3640 = vor.u32 %v3637, %v3638
        %v3641 = vsel %vm3574, %v3633, %v3640
        %v3642 = vrot.slane %v3637, 4
        %v3644 = vshrl.u32 %v3549, 16
        %v3646 = vrot.slane %v3644, 7
        %v3647 = vshll.u32 %v3549, 16
        %v3649 = vor.u32 %v3646, %v3647
        %v3650 = vrot.slane %v3646, 4
        %v3652 = vshrl.u32 %v3550, 16
        %v3654 = vrot.slane %v3652, 7
        %v3655 = vshll.u32 %v3550, 16
        %v3657 = vor.u32 %v3654, %v3655
        %v3658 = vsel %vm3574, %v3650, %v3657
        %v3659 = vrot.slane %v3654, 4
        %v3661 = vshrl.u32 %v3551, 16
        %v3663 = vrot.slane %v3661, 7
        %v3664 = vshll.u32 %v3551, 16
        %v3666 = vor.u32 %v3663, %v3664
        %v3667 = vrot.slane %v3663, 4
        %v3669 = vshrl.u32 %v3552, 16
        %v3671 = vrot.slane %v3669, 7
        %v3672 = vshll.u32 %v3552, 16
        %v3674 = vor.u32 %v3671, %v3672
        %v3675 = vsel %vm3574, %v3667, %v3674
        %v3676 = vrot.slane %v3671, 4
        %v3678 = vshrl.u32 %v3553, 16
        %v3680 = vrot.slane %v3678, 7
        %v3681 = vshll.u32 %v3553, 16
        %v3683 = vor.u32 %v3680, %v3681
        %v3684 = vrot.slane %v3680, 4
        %v3686 = vshrl.u32 %v3554, 16
        %v3688 = vrot.slane %v3686, 7
        %v3689 = vshll.u32 %v3554, 16
        %v3691 = vor.u32 %v3688, %v3689
        %v3692 = vsel %vm3574, %v3684, %v3691
        %v3693 = vrot.slane %v3688, 4
        %v3695 = vshrl.u32 %v3555, 16
        %v3697 = vrot.slane %v3695, 7
        %v3698 = vshll.u32 %v3555, 16
        %v3700 = vor.u32 %v3697, %v3698
        %v3701 = vrot.slane %v3697, 4
        %v3703 = vshrl.u32 %v3556, 16
        %v3705 = vrot.slane %v3703, 7
        %v3706 = vshll.u32 %v3556, 16
        %v3708 = vor.u32 %v3705, %v3706
        %v3709 = vsel %vm3574, %v3701, %v3708
        %v3710 = vrot.slane %v3705, 4
        %v3712 = vshrl.u32 %v3557, 16
        %v3714 = vrot.slane %v3712, 7
        %v3715 = vshll.u32 %v3557, 16
        %v3717 = vor.u32 %v3714, %v3715
        %v3718 = vrot.slane %v3714, 4
        %v3720 = vshrl.u32 %v3558, 16
        %v3722 = vrot.slane %v3720, 7
        %v3723 = vshll.u32 %v3558, 16
        %v3725 = vor.u32 %v3722, %v3723
        %v3726 = vsel %vm3574, %v3718, %v3725
        %v3727 = vrot.slane %v3722, 4
        %v3729 = vshrl.u32 %v3559, 16
        %v3731 = vrot.slane %v3729, 7
        %v3732 = vshll.u32 %v3559, 16
        %v3734 = vor.u32 %v3731, %v3732
        %v3735 = vrot.slane %v3731, 4
        %v3737 = vshrl.u32 %v3560, 16
        %v3739 = vrot.slane %v3737, 7
        %v3740 = vshll.u32 %v3560, 16
        %v3742 = vor.u32 %v3739, %v3740
        %v3743 = vsel %vm3574, %v3735, %v3742
        %v3744 = vrot.slane %v3739, 4
        %v3746 = vshrl.u32 %v3561, 16
        %v3748 = vrot.slane %v3746, 7
        %v3749 = vshll.u32 %v3561, 16
        %v3751 = vor.u32 %v3748, %v3749
        %v3752 = vrot.slane %v3748, 4
        %v3754 = vshrl.u32 %v3562, 16
        %v3756 = vrot.slane %v3754, 7
        %v3757 = vshll.u32 %v3562, 16
        %v3759 = vor.u32 %v3756, %v3757
        %v3760 = vsel %vm3574, %v3752, %v3759
        %v3761 = vrot.slane %v3756, 4
        %v3763 = vshrl.u32 %v3563, 16
        %v3765 = vrot.slane %v3763, 7
        %v3766 = vshll.u32 %v3563, 16
        %v3768 = vor.u32 %v3765, %v3766
        %v3769 = vrot.slane %v3765, 4
        %v3771 = vshrl.u32 %v3564, 16
        %v3773 = vrot.slane %v3771, 7
        %v3774 = vshll.u32 %v3564, 16
        %v3776 = vor.u32 %v3773, %v3774
        %v3777 = vsel %vm3574, %v3769, %v3776
        %v3778 = vrot.slane %v3773, 4
        %v3780 = vshrl.u32 %v3565, 16
        %v3782 = vrot.slane %v3780, 7
        %v3783 = vshll.u32 %v3565, 16
        %v3785 = vor.u32 %v3782, %v3783
        %v3786 = vrot.slane %v3782, 4
        %v3788 = vshrl.u32 %v3566, 16
        %v3790 = vrot.slane %v3788, 7
        %v3791 = vshll.u32 %v3566, 16
        %v3793 = vor.u32 %v3790, %v3791
        %v3794 = vsel %vm3574, %v3786, %v3793
        %v3795 = vrot.slane %v3790, 4
        %v3797 = vshrl.u32 %v3567, 16
        %v3799 = vrot.slane %v3797, 7
        %v3800 = vshll.u32 %v3567, 16
        %v3802 = vor.u32 %v3799, %v3800
        %v3803 = vrot.slane %v3799, 4
        %v3805 = vshrl.u32 %v3568, 16
        %v3807 = vrot.slane %v3805, 7
        %v3808 = vshll.u32 %v3568, 16
        %v3810 = vor.u32 %v3807, %v3808
        %v3811 = vsel %vm3574, %v3803, %v3810
        %v3812 = vrot.slane %v3807, 4
        %v3814 = vshrl.u32 %v3569, 16
        %v3816 = vrot.slane %v3814, 7
        %v3817 = vshll.u32 %v3569, 16
        %v3819 = vor.u32 %v3816, %v3817
        %v3820 = vrot.slane %v3816, 4
        %v3822 = vshrl.u32 %v3570, 16
        %v3824 = vrot.slane %v3822, 7
        %v3825 = vshll.u32 %v3570, 16
        %v3827 = vor.u32 %v3824, %v3825
        %v3828 = vsel %vm3574, %v3820, %v3827
        %v3829 = vrot.slane %v3824, 4
        %v3831 = vshrl.u32 %v3571, 16
        %v3833 = vrot.slane %v3831, 7
        %v3834 = vshll.u32 %v3571, 16
        %v3836 = vor.u32 %v3833, %v3834
        %v3837 = vrot.slane %v3833, 4
        %v3839 = vshrl.u32 %v3572, 16
        %v3841 = vrot.slane %v3839, 7
        %v3842 = vshll.u32 %v3572, 16
        %v3844 = vor.u32 %v3841, %v3842
        %v3845 = vsel %vm3574, %v3837, %v3844
        %v3846 = vrot.slane %v3841, 4
        %s3895 = scalar_lea.vmem [#allocation2], 12
        %vm3896 = vcmask 60416
        %vm3897 = vmand %vm3896, %vm316
        %v3898 = vld [vmem:[%s3895] sm:$0xf]
        %v3899 = vsel %vm3897, %v3581, %v3898
        %3900 = vst [vmem:[%s3895] sm:$0xf] %v3899
        %3901 = vst.msk [vmem:[%s3895 + $0x4] sm:$0xf] %vm251, %v3590
        %v3902 = vld [vmem:[%s3895 + $0x8] sm:$0x1]
        %v3903 = vsel %vm261, %v3591, %v3902
        %3904 = vst [vmem:[%s3895 + $0x8] sm:$0x1] %v3903
        %v3905 = vld [vmem:[%s3895 + $0xc] sm:$0xf]
        %v3906 = vsel %vm3897, %v3598, %v3905
        %3907 = vst [vmem:[%s3895 + $0xc] sm:$0xf] %v3906
        %3908 = vst.msk [vmem:[%s3895 + $0x10] sm:$0xf] %vm251, %v3607
        %v3909 = vld [vmem:[%s3895 + $0x14] sm:$0x1]
        %v3910 = vsel %vm261, %v3608, %v3909
        %3911 = vst [vmem:[%s3895 + $0x14] sm:$0x1] %v3910
        %v3912 = vld [vmem:[%s3895 + $0x18] sm:$0xf]
        %v3913 = vsel %vm3897, %v3615, %v3912
        %3914 = vst [vmem:[%s3895 + $0x18] sm:$0xf] %v3913
        %3915 = vst.msk [vmem:[%s3895 + $0x1c] sm:$0xf] %vm251, %v3624
        %v3916 = vld [vmem:[%s3895 + $0x20] sm:$0x1]
        %v3917 = vsel %vm261, %v3625, %v3916
        %3918 = vst [vmem:[%s3895 + $0x20] sm:$0x1] %v3917
        %v3919 = vld [vmem:[%s3895 + $0x24] sm:$0xf]
        %v3920 = vsel %vm3897, %v3632, %v3919
        %3921 = vst [vmem:[%s3895 + $0x24] sm:$0xf] %v3920
        %3922 = vst.msk [vmem:[%s3895 + $0x28] sm:$0xf] %vm251, %v3641
        %v3923 = vld [vmem:[%s3895 + $0x2c] sm:$0x1]
        %v3924 = vsel %vm261, %v3642, %v3923
        %3925 = vst [vmem:[%s3895 + $0x2c] sm:$0x1] %v3924
        %v3926 = vld [vmem:[%s3895 + $0x30] sm:$0xf]
        %v3927 = vsel %vm3897, %v3649, %v3926
        %3928 = vst [vmem:[%s3895 + $0x30] sm:$0xf] %v3927
        %3929 = vst.msk [vmem:[%s3895 + $0x34] sm:$0xf] %vm251, %v3658
        %v3930 = vld [vmem:[%s3895 + $0x38] sm:$0x1]
        %v3931 = vsel %vm261, %v3659, %v3930
        %3932 = vst [vmem:[%s3895 + $0x38] sm:$0x1] %v3931
        %v3933 = vld [vmem:[%s3895 + $0x3c] sm:$0xf]
        %v3934 = vsel %vm3897, %v3666, %v3933
        %3935 = vst [vmem:[%s3895 + $0x3c] sm:$0xf] %v3934
        %3936 = vst.msk [vmem:[%s3895 + $0x40] sm:$0xf] %vm251, %v3675
        %v3937 = vld [vmem:[%s3895 + $0x44] sm:$0x1]
        %v3938 = vsel %vm261, %v3676, %v3937
        %3939 = vst [vmem:[%s3895 + $0x44] sm:$0x1] %v3938
        %v3940 = vld [vmem:[%s3895 + $0x48] sm:$0xf]
        %v3941 = vsel %vm3897, %v3683, %v3940
        %3942 = vst [vmem:[%s3895 + $0x48] sm:$0xf] %v3941
        %3943 = vst.msk [vmem:[%s3895 + $0x4c] sm:$0xf] %vm251, %v3692
        %v3944 = vld [vmem:[%s3895 + $0x50] sm:$0x1]
        %v3945 = vsel %vm261, %v3693, %v3944
        %3946 = vst [vmem:[%s3895 + $0x50] sm:$0x1] %v3945
        %v3947 = vld [vmem:[%s3895 + $0x54] sm:$0xf]
        %v3948 = vsel %vm3897, %v3700, %v3947
        %3949 = vst [vmem:[%s3895 + $0x54] sm:$0xf] %v3948
        %3950 = vst.msk [vmem:[%s3895 + $0x58] sm:$0xf] %vm251, %v3709
        %v3951 = vld [vmem:[%s3895 + $0x5c] sm:$0x1]
        %v3952 = vsel %vm261, %v3710, %v3951
        %3953 = vst [vmem:[%s3895 + $0x5c] sm:$0x1] %v3952
        %v3954 = vld [vmem:[%s3895 + $0x60] sm:$0xf]
        %v3955 = vsel %vm3897, %v3717, %v3954
        %3956 = vst [vmem:[%s3895 + $0x60] sm:$0xf] %v3955
        %3957 = vst.msk [vmem:[%s3895 + $0x64] sm:$0xf] %vm251, %v3726
        %v3958 = vld [vmem:[%s3895 + $0x68] sm:$0x1]
        %v3959 = vsel %vm261, %v3727, %v3958
        %3960 = vst [vmem:[%s3895 + $0x68] sm:$0x1] %v3959
        %v3961 = vld [vmem:[%s3895 + $0x6c] sm:$0xf]
        %v3962 = vsel %vm3897, %v3734, %v3961
        %3963 = vst [vmem:[%s3895 + $0x6c] sm:$0xf] %v3962
        %3964 = vst.msk [vmem:[%s3895 + $0x70] sm:$0xf] %vm251, %v3743
        %v3965 = vld [vmem:[%s3895 + $0x74] sm:$0x1]
        %v3966 = vsel %vm261, %v3744, %v3965
        %3967 = vst [vmem:[%s3895 + $0x74] sm:$0x1] %v3966
        %v3968 = vld [vmem:[%s3895 + $0x78] sm:$0xf]
        %v3969 = vsel %vm3897, %v3751, %v3968
        %3970 = vst [vmem:[%s3895 + $0x78] sm:$0xf] %v3969
        %3971 = vst.msk [vmem:[%s3895 + $0x7c] sm:$0xf] %vm251, %v3760
        %v3972 = vld [vmem:[%s3895 + $0x80] sm:$0x1]
        %v3973 = vsel %vm261, %v3761, %v3972
        %3974 = vst [vmem:[%s3895 + $0x80] sm:$0x1] %v3973
        %v3975 = vld [vmem:[%s3895 + $0x84] sm:$0xf]
        %v3976 = vsel %vm3897, %v3768, %v3975
        %3977 = vst [vmem:[%s3895 + $0x84] sm:$0xf] %v3976
        %3978 = vst.msk [vmem:[%s3895 + $0x88] sm:$0xf] %vm251, %v3777
        %v3979 = vld [vmem:[%s3895 + $0x8c] sm:$0x1]
        %v3980 = vsel %vm261, %v3778, %v3979
        %3981 = vst [vmem:[%s3895 + $0x8c] sm:$0x1] %v3980
        %v3982 = vld [vmem:[%s3895 + $0x90] sm:$0xf]
        %v3983 = vsel %vm3897, %v3785, %v3982
        %3984 = vst [vmem:[%s3895 + $0x90] sm:$0xf] %v3983
        %3985 = vst.msk [vmem:[%s3895 + $0x94] sm:$0xf] %vm251, %v3794
        %v3986 = vld [vmem:[%s3895 + $0x98] sm:$0x1]
        %v3987 = vsel %vm261, %v3795, %v3986
        %3988 = vst [vmem:[%s3895 + $0x98] sm:$0x1] %v3987
        %v3989 = vld [vmem:[%s3895 + $0x9c] sm:$0xf]
        %v3990 = vsel %vm3897, %v3802, %v3989
        %3991 = vst [vmem:[%s3895 + $0x9c] sm:$0xf] %v3990
        %3992 = vst.msk [vmem:[%s3895 + $0xa0] sm:$0xf] %vm251, %v3811
        %v3993 = vld [vmem:[%s3895 + $0xa4] sm:$0x1]
        %v3994 = vsel %vm261, %v3812, %v3993
        %3995 = vst [vmem:[%s3895 + $0xa4] sm:$0x1] %v3994
        %v3996 = vld [vmem:[%s3895 + $0xa8] sm:$0xf]
        %v3997 = vsel %vm3897, %v3819, %v3996
        %3998 = vst [vmem:[%s3895 + $0xa8] sm:$0xf] %v3997
        %3999 = vst.msk [vmem:[%s3895 + $0xac] sm:$0xf] %vm251, %v3828
        %v4000 = vld [vmem:[%s3895 + $0xb0] sm:$0x1]
        %v4001 = vsel %vm261, %v3829, %v4000
        %4002 = vst [vmem:[%s3895 + $0xb0] sm:$0x1] %v4001
        %v4003 = vld [vmem:[%s3895 + $0xb4] sm:$0xf]
        %v4004 = vsel %vm3897, %v3836, %v4003
        %4005 = vst [vmem:[%s3895 + $0xb4] sm:$0xf] %v4004
        %4006 = vst.msk [vmem:[%s3895 + $0xb8] sm:$0xf] %vm251, %v3845
        %v4007 = vld [vmem:[%s3895 + $0xbc] sm:$0x1]
        %v4008 = vsel %vm261, %v3846, %v4007
        %4009 = vst [vmem:[%s3895 + $0xbc] sm:$0x1] %v4008
        %v4010 = vld [vmem:[%s986] sm:$0xf]
        %v4011 = vld [vmem:[%s986 + $0x4] sm:$0xf]
        %v4012 = vld [vmem:[%s986 + $0x8] sm:$0x1]
        %v4013 = vld [vmem:[%s986 + $0xc] sm:$0xf]
        %v4014 = vld [vmem:[%s986 + $0x10] sm:$0xf]
        %v4015 = vld [vmem:[%s986 + $0x14] sm:$0x1]
        %v4016 = vld [vmem:[%s986 + $0x18] sm:$0xf]
        %v4017 = vld [vmem:[%s986 + $0x1c] sm:$0xf]
        %v4018 = vld [vmem:[%s986 + $0x20] sm:$0x1]
        %v4019 = vld [vmem:[%s986 + $0x24] sm:$0xf]
        %v4020 = vld [vmem:[%s986 + $0x28] sm:$0xf]
        %v4021 = vld [vmem:[%s986 + $0x2c] sm:$0x1]
        %v4022 = vld [vmem:[%s986 + $0x30] sm:$0xf]
        %v4023 = vld [vmem:[%s986 + $0x34] sm:$0xf]
        %v4024 = vld [vmem:[%s986 + $0x38] sm:$0x1]
        %v4025 = vld [vmem:[%s986 + $0x3c] sm:$0xf]
        %v4026 = vld [vmem:[%s986 + $0x40] sm:$0xf]
        %v4027 = vld [vmem:[%s986 + $0x44] sm:$0x1]
        %v4028 = vld [vmem:[%s986 + $0x48] sm:$0xf]
        %v4029 = vld [vmem:[%s986 + $0x4c] sm:$0xf]
        %v4030 = vld [vmem:[%s986 + $0x50] sm:$0x1]
        %v4031 = vld [vmem:[%s986 + $0x54] sm:$0xf]
        %v4032 = vld [vmem:[%s986 + $0x58] sm:$0xf]
        %v4033 = vld [vmem:[%s986 + $0x5c] sm:$0x1]
        %v4034 = vld [vmem:[%s986 + $0x60] sm:$0xf]
        %v4035 = vld [vmem:[%s986 + $0x64] sm:$0xf]
        %v4036 = vld [vmem:[%s986 + $0x68] sm:$0x1]
        %v4037 = vld [vmem:[%s986 + $0x6c] sm:$0xf]
        %v4038 = vld [vmem:[%s986 + $0x70] sm:$0xf]
        %v4039 = vld [vmem:[%s986 + $0x74] sm:$0x1]
        %v4040 = vld [vmem:[%s986 + $0x78] sm:$0xf]
        %v4041 = vld [vmem:[%s986 + $0x7c] sm:$0xf]
        %v4042 = vld [vmem:[%s986 + $0x80] sm:$0x1]
        %v4043 = vld [vmem:[%s986 + $0x84] sm:$0xf]
        %v4044 = vld [vmem:[%s986 + $0x88] sm:$0xf]
        %v4045 = vld [vmem:[%s986 + $0x8c] sm:$0x1]
        %v4046 = vld [vmem:[%s986 + $0x90] sm:$0xf]
        %v4047 = vld [vmem:[%s986 + $0x94] sm:$0xf]
        %v4048 = vld [vmem:[%s986 + $0x98] sm:$0x1]
        %v4049 = vld [vmem:[%s986 + $0x9c] sm:$0xf]
        %v4050 = vld [vmem:[%s986 + $0xa0] sm:$0xf]
        %v4051 = vld [vmem:[%s986 + $0xa4] sm:$0x1]
        %v4052 = vld [vmem:[%s986 + $0xa8] sm:$0xf]
        %v4053 = vld [vmem:[%s986 + $0xac] sm:$0xf]
        %v4054 = vld [vmem:[%s986 + $0xb0] sm:$0x1]
        %v4055 = vld [vmem:[%s986 + $0xb4] sm:$0xf]
        %v4056 = vld [vmem:[%s986 + $0xb8] sm:$0xf]
        %v4057 = vld [vmem:[%s986 + $0xbc] sm:$0x1]
        %v4059 = vshrl.u32 %v4010, 16
        %v4061 = vrot.slane %v4059, 4
        %v4062 = vshll.u32 %v4010, 16
        %v4064 = vrot.slane %v4062, 5
        %v4065 = vor.u32 %v4061, %v4064
        %v4066 = vrot.slane %v4065, 4
        %v4068 = vshll.u32 %v4011, 16
        %v4070 = vrot.slane %v4068, 5
        %v4071 = vsel %vm422, %v4066, %v4070
        %v4072 = vshrl.u32 %v4011, 16
        %v4074 = vrot.slane %v4072, 4
        %v4075 = vor.u32 %v4074, %v4070
        %v4076 = vrot.slane %v4075, 4
        %v4078 = vshll.u32 %v4012, 16
        %v4080 = vrot.slane %v4078, 5
        %v4081 = vsel %vm422, %v4076, %v4080
        %v4083 = vshrl.u32 %v4013, 16
        %v4085 = vrot.slane %v4083, 4
        %v4086 = vshll.u32 %v4013, 16
        %v4088 = vrot.slane %v4086, 5
        %v4089 = vor.u32 %v4085, %v4088
        %v4090 = vrot.slane %v4089, 4
        %v4092 = vshll.u32 %v4014, 16
        %v4094 = vrot.slane %v4092, 5
        %v4095 = vsel %vm422, %v4090, %v4094
        %v4096 = vshrl.u32 %v4014, 16
        %v4098 = vrot.slane %v4096, 4
        %v4099 = vor.u32 %v4098, %v4094
        %v4100 = vrot.slane %v4099, 4
        %v4102 = vshll.u32 %v4015, 16
        %v4104 = vrot.slane %v4102, 5
        %v4105 = vsel %vm422, %v4100, %v4104
        %v4107 = vshrl.u32 %v4016, 16
        %v4109 = vrot.slane %v4107, 4
        %v4110 = vshll.u32 %v4016, 16
        %v4112 = vrot.slane %v4110, 5
        %v4113 = vor.u32 %v4109, %v4112
        %v4114 = vrot.slane %v4113, 4
        %v4116 = vshll.u32 %v4017, 16
        %v4118 = vrot.slane %v4116, 5
        %v4119 = vsel %vm422, %v4114, %v4118
        %v4120 = vshrl.u32 %v4017, 16
        %v4122 = vrot.slane %v4120, 4
        %v4123 = vor.u32 %v4122, %v4118
        %v4124 = vrot.slane %v4123, 4
        %v4126 = vshll.u32 %v4018, 16
        %v4128 = vrot.slane %v4126, 5
        %v4129 = vsel %vm422, %v4124, %v4128
        %v4131 = vshrl.u32 %v4019, 16
        %v4133 = vrot.slane %v4131, 4
        %v4134 = vshll.u32 %v4019, 16
        %v4136 = vrot.slane %v4134, 5
        %v4137 = vor.u32 %v4133, %v4136
        %v4138 = vrot.slane %v4137, 4
        %v4140 = vshll.u32 %v4020, 16
        %v4142 = vrot.slane %v4140, 5
        %v4143 = vsel %vm422, %v4138, %v4142
        %v4144 = vshrl.u32 %v4020, 16
        %v4146 = vrot.slane %v4144, 4
        %v4147 = vor.u32 %v4146, %v4142
        %v4148 = vrot.slane %v4147, 4
        %v4150 = vshll.u32 %v4021, 16
        %v4152 = vrot.slane %v4150, 5
        %v4153 = vsel %vm422, %v4148, %v4152
        %v4155 = vshrl.u32 %v4022, 16
        %v4157 = vrot.slane %v4155, 4
        %v4158 = vshll.u32 %v4022, 16
        %v4160 = vrot.slane %v4158, 5
        %v4161 = vor.u32 %v4157, %v4160
        %v4162 = vrot.slane %v4161, 4
        %v4164 = vshll.u32 %v4023, 16
        %v4166 = vrot.slane %v4164, 5
        %v4167 = vsel %vm422, %v4162, %v4166
        %v4168 = vshrl.u32 %v4023, 16
        %v4170 = vrot.slane %v4168, 4
        %v4171 = vor.u32 %v4170, %v4166
        %v4172 = vrot.slane %v4171, 4
        %v4174 = vshll.u32 %v4024, 16
        %v4176 = vrot.slane %v4174, 5
        %v4177 = vsel %vm422, %v4172, %v4176
        %v4179 = vshrl.u32 %v4025, 16
        %v4181 = vrot.slane %v4179, 4
        %v4182 = vshll.u32 %v4025, 16
        %v4184 = vrot.slane %v4182, 5
        %v4185 = vor.u32 %v4181, %v4184
        %v4186 = vrot.slane %v4185, 4
        %v4188 = vshll.u32 %v4026, 16
        %v4190 = vrot.slane %v4188, 5
        %v4191 = vsel %vm422, %v4186, %v4190
        %v4192 = vshrl.u32 %v4026, 16
        %v4194 = vrot.slane %v4192, 4
        %v4195 = vor.u32 %v4194, %v4190
        %v4196 = vrot.slane %v4195, 4
        %v4198 = vshll.u32 %v4027, 16
        %v4200 = vrot.slane %v4198, 5
        %v4201 = vsel %vm422, %v4196, %v4200
        %v4203 = vshrl.u32 %v4028, 16
        %v4205 = vrot.slane %v4203, 4
        %v4206 = vshll.u32 %v4028, 16
        %v4208 = vrot.slane %v4206, 5
        %v4209 = vor.u32 %v4205, %v4208
        %v4210 = vrot.slane %v4209, 4
        %v4212 = vshll.u32 %v4029, 16
        %v4214 = vrot.slane %v4212, 5
        %v4215 = vsel %vm422, %v4210, %v4214
        %v4216 = vshrl.u32 %v4029, 16
        %v4218 = vrot.slane %v4216, 4
        %v4219 = vor.u32 %v4218, %v4214
        %v4220 = vrot.slane %v4219, 4
        %v4222 = vshll.u32 %v4030, 16
        %v4224 = vrot.slane %v4222, 5
        %v4225 = vsel %vm422, %v4220, %v4224
        %v4227 = vshrl.u32 %v4031, 16
        %v4229 = vrot.slane %v4227, 4
        %v4230 = vshll.u32 %v4031, 16
        %v4232 = vrot.slane %v4230, 5
        %v4233 = vor.u32 %v4229, %v4232
        %v4234 = vrot.slane %v4233, 4
        %v4236 = vshll.u32 %v4032, 16
        %v4238 = vrot.slane %v4236, 5
        %v4239 = vsel %vm422, %v4234, %v4238
        %v4240 = vshrl.u32 %v4032, 16
        %v4242 = vrot.slane %v4240, 4
        %v4243 = vor.u32 %v4242, %v4238
        %v4244 = vrot.slane %v4243, 4
        %v4246 = vshll.u32 %v4033, 16
        %v4248 = vrot.slane %v4246, 5
        %v4249 = vsel %vm422, %v4244, %v4248
        %v4251 = vshrl.u32 %v4034, 16
        %v4253 = vrot.slane %v4251, 4
        %v4254 = vshll.u32 %v4034, 16
        %v4256 = vrot.slane %v4254, 5
        %v4257 = vor.u32 %v4253, %v4256
        %v4258 = vrot.slane %v4257, 4
        %v4260 = vshll.u32 %v4035, 16
        %v4262 = vrot.slane %v4260, 5
        %v4263 = vsel %vm422, %v4258, %v4262
        %v4264 = vshrl.u32 %v4035, 16
        %v4266 = vrot.slane %v4264, 4
        %v4267 = vor.u32 %v4266, %v4262
        %v4268 = vrot.slane %v4267, 4
        %v4270 = vshll.u32 %v4036, 16
        %v4272 = vrot.slane %v4270, 5
        %v4273 = vsel %vm422, %v4268, %v4272
        %v4275 = vshrl.u32 %v4037, 16
        %v4277 = vrot.slane %v4275, 4
        %v4278 = vshll.u32 %v4037, 16
        %v4280 = vrot.slane %v4278, 5
        %v4281 = vor.u32 %v4277, %v4280
        %v4282 = vrot.slane %v4281, 4
        %v4284 = vshll.u32 %v4038, 16
        %v4286 = vrot.slane %v4284, 5
        %v4287 = vsel %vm422, %v4282, %v4286
        %v4288 = vshrl.u32 %v4038, 16
        %v4290 = vrot.slane %v4288, 4
        %v4291 = vor.u32 %v4290, %v4286
        %v4292 = vrot.slane %v4291, 4
        %v4294 = vshll.u32 %v4039, 16
        %v4296 = vrot.slane %v4294, 5
        %v4297 = vsel %vm422, %v4292, %v4296
        %v4299 = vshrl.u32 %v4040, 16
        %v4301 = vrot.slane %v4299, 4
        %v4302 = vshll.u32 %v4040, 16
        %v4304 = vrot.slane %v4302, 5
        %v4305 = vor.u32 %v4301, %v4304
        %v4306 = vrot.slane %v4305, 4
        %v4308 = vshll.u32 %v4041, 16
        %v4310 = vrot.slane %v4308, 5
        %v4311 = vsel %vm422, %v4306, %v4310
        %v4312 = vshrl.u32 %v4041, 16
        %v4314 = vrot.slane %v4312, 4
        %v4315 = vor.u32 %v4314, %v4310
        %v4316 = vrot.slane %v4315, 4
        %v4318 = vshll.u32 %v4042, 16
        %v4320 = vrot.slane %v4318, 5
        %v4321 = vsel %vm422, %v4316, %v4320
        %v4323 = vshrl.u32 %v4043, 16
        %v4325 = vrot.slane %v4323, 4
        %v4326 = vshll.u32 %v4043, 16
        %v4328 = vrot.slane %v4326, 5
        %v4329 = vor.u32 %v4325, %v4328
        %v4330 = vrot.slane %v4329, 4
        %v4332 = vshll.u32 %v4044, 16
        %v4334 = vrot.slane %v4332, 5
        %v4335 = vsel %vm422, %v4330, %v4334
        %v4336 = vshrl.u32 %v4044, 16
        %v4338 = vrot.slane %v4336, 4
        %v4339 = vor.u32 %v4338, %v4334
        %v4340 = vrot.slane %v4339, 4
        %v4342 = vshll.u32 %v4045, 16
        %v4344 = vrot.slane %v4342, 5
        %v4345 = vsel %vm422, %v4340, %v4344
        %v4347 = vshrl.u32 %v4046, 16
        %v4349 = vrot.slane %v4347, 4
        %v4350 = vshll.u32 %v4046, 16
        %v4352 = vrot.slane %v4350, 5
        %v4353 = vor.u32 %v4349, %v4352
        %v4354 = vrot.slane %v4353, 4
        %v4356 = vshll.u32 %v4047, 16
        %v4358 = vrot.slane %v4356, 5
        %v4359 = vsel %vm422, %v4354, %v4358
        %v4360 = vshrl.u32 %v4047, 16
        %v4362 = vrot.slane %v4360, 4
        %v4363 = vor.u32 %v4362, %v4358
        %v4364 = vrot.slane %v4363, 4
        %v4366 = vshll.u32 %v4048, 16
        %v4368 = vrot.slane %v4366, 5
        %v4369 = vsel %vm422, %v4364, %v4368
        %v4371 = vshrl.u32 %v4049, 16
        %v4373 = vrot.slane %v4371, 4
        %v4374 = vshll.u32 %v4049, 16
        %v4376 = vrot.slane %v4374, 5
        %v4377 = vor.u32 %v4373, %v4376
        %v4378 = vrot.slane %v4377, 4
        %v4380 = vshll.u32 %v4050, 16
        %v4382 = vrot.slane %v4380, 5
        %v4383 = vsel %vm422, %v4378, %v4382
        %v4384 = vshrl.u32 %v4050, 16
        %v4386 = vrot.slane %v4384, 4
        %v4387 = vor.u32 %v4386, %v4382
        %v4388 = vrot.slane %v4387, 4
        %v4390 = vshll.u32 %v4051, 16
        %v4392 = vrot.slane %v4390, 5
        %v4393 = vsel %vm422, %v4388, %v4392
        %v4395 = vshrl.u32 %v4052, 16
        %v4397 = vrot.slane %v4395, 4
        %v4398 = vshll.u32 %v4052, 16
        %v4400 = vrot.slane %v4398, 5
        %v4401 = vor.u32 %v4397, %v4400
        %v4402 = vrot.slane %v4401, 4
        %v4404 = vshll.u32 %v4053, 16
        %v4406 = vrot.slane %v4404, 5
        %v4407 = vsel %vm422, %v4402, %v4406
        %v4408 = vshrl.u32 %v4053, 16
        %v4410 = vrot.slane %v4408, 4
        %v4411 = vor.u32 %v4410, %v4406
        %v4412 = vrot.slane %v4411, 4
        %v4414 = vshll.u32 %v4054, 16
        %v4416 = vrot.slane %v4414, 5
        %v4417 = vsel %vm422, %v4412, %v4416
        %v4419 = vshrl.u32 %v4055, 16
        %v4421 = vrot.slane %v4419, 4
        %v4422 = vshll.u32 %v4055, 16
        %v4424 = vrot.slane %v4422, 5
        %v4425 = vor.u32 %v4421, %v4424
        %v4426 = vrot.slane %v4425, 4
        %v4428 = vshll.u32 %v4056, 16
        %v4430 = vrot.slane %v4428, 5
        %v4431 = vsel %vm422, %v4426, %v4430
        %v4432 = vshrl.u32 %v4056, 16
        %v4434 = vrot.slane %v4432, 4
        %v4435 = vor.u32 %v4434, %v4430
        %v4436 = vrot.slane %v4435, 4
        %v4438 = vshll.u32 %v4057, 16
        %v4440 = vrot.slane %v4438, 5
        %v4441 = vsel %vm422, %v4436, %v4440
        %v4442 = vld [vmem:[%s3] sm:$0x3]
        %v4443 = vld [vmem:[#allocation2] sm:$0xf]
        %v4444 = vld [vmem:[#allocation2 + $0x4] sm:$0xf]
        %v4445 = vld [vmem:[#allocation2 + $0xc] sm:$0xf]
        %v4446 = vld [vmem:[#allocation2 + $0x10] sm:$0xf]
        %v4447 = vld [vmem:[#allocation2 + $0x18] sm:$0xf]
        %v4448 = vld [vmem:[#allocation2 + $0x1c] sm:$0xf]
        %v4449 = vld [vmem:[#allocation2 + $0x24] sm:$0xf]
        %v4450 = vld [vmem:[#allocation2 + $0x28] sm:$0xf]
        %v4451 = vld [vmem:[#allocation2 + $0x30] sm:$0xf]
        %v4452 = vld [vmem:[#allocation2 + $0x34] sm:$0xf]
        %v4453 = vld [vmem:[#allocation2 + $0x3c] sm:$0xf]
        %v4454 = vld [vmem:[#allocation2 + $0x40] sm:$0xf]
        %v4455 = vld [vmem:[#allocation2 + $0x48] sm:$0xf]
        %v4456 = vld [vmem:[#allocation2 + $0x4c] sm:$0xf]
        %v4457 = vld [vmem:[#allocation2 + $0x54] sm:$0xf]
        %v4458 = vld [vmem:[#allocation2 + $0x58] sm:$0xf]
        %v4459 = vld [vmem:[#allocation2 + $0x60] sm:$0xf]
        %v4460 = vld [vmem:[#allocation2 + $0x64] sm:$0xf]
        %v4461 = vld [vmem:[#allocation2 + $0x6c] sm:$0xf]
        %v4462 = vld [vmem:[#allocation2 + $0x70] sm:$0xf]
        %v4463 = vld [vmem:[#allocation2 + $0x78] sm:$0xf]
        %v4464 = vld [vmem:[#allocation2 + $0x7c] sm:$0xf]
        %v4465 = vld [vmem:[#allocation2 + $0x84] sm:$0xf]
        %v4466 = vld [vmem:[#allocation2 + $0x88] sm:$0xf]
        %v4467 = vld [vmem:[#allocation2 + $0x90] sm:$0xf]
        %v4468 = vld [vmem:[#allocation2 + $0x94] sm:$0xf]
        %v4469 = vld [vmem:[#allocation2 + $0x9c] sm:$0xf]
        %v4470 = vld [vmem:[#allocation2 + $0xa0] sm:$0xf]
        %v4471 = vld [vmem:[#allocation2 + $0xa8] sm:$0xf]
        %v4472 = vld [vmem:[#allocation2 + $0xac] sm:$0xf]
        %v4473 = vld [vmem:[#allocation2 + $0xb4] sm:$0xf]
        %v4474 = vld [vmem:[#allocation2 + $0xb8] sm:$0xf]
        %v4475 = vld [vmem:[#allocation2 + $0x8] sm:$0x1]
        %v4476 = vld [vmem:[#allocation2 + $0x14] sm:$0x1]
        %v4477 = vld [vmem:[#allocation2 + $0x20] sm:$0x1]
        %v4478 = vld [vmem:[#allocation2 + $0x2c] sm:$0x1]
        %v4479 = vld [vmem:[#allocation2 + $0x38] sm:$0x1]
        %v4480 = vld [vmem:[#allocation2 + $0x44] sm:$0x1]
        %v4481 = vld [vmem:[#allocation2 + $0x50] sm:$0x1]
        %v4482 = vld [vmem:[#allocation2 + $0x5c] sm:$0x1]
        %v4483 = vld [vmem:[#allocation2 + $0x68] sm:$0x1]
        %v4484 = vld [vmem:[#allocation2 + $0x74] sm:$0x1]
        %v4485 = vld [vmem:[#allocation2 + $0x80] sm:$0x1]
        %v4486 = vld [vmem:[#allocation2 + $0x8c] sm:$0x1]
        %v4487 = vld [vmem:[#allocation2 + $0x98] sm:$0x1]
        %v4488 = vld [vmem:[#allocation2 + $0xa4] sm:$0x1]
        %v4489 = vld [vmem:[#allocation2 + $0xb0] sm:$0x1]
        %v4490 = vld [vmem:[#allocation2 + $0xbc] sm:$0x1]
        %v4492 = vshrl.u32 %v4443, 16
        %v4494 = vrot.slane %v4492, 4
        %v4495 = vshll.u32 %v4443, 16
        %v4497 = vrot.slane %v4495, 5
        %v4498 = vor.u32 %v4494, %v4497
        %v4499 = vrot.slane %v4498, 4
        %v4501 = vshll.u32 %v4444, 16
        %v4503 = vrot.slane %v4501, 5
        %v4504 = vsel %vm422, %v4499, %v4503
        %v4505 = vshrl.u32 %v4444, 16
        %v4507 = vrot.slane %v4505, 4
        %v4508 = vor.u32 %v4507, %v4503
        %v4509 = vrot.slane %v4508, 4
        %v4511 = vshll.u32 %v4475, 16
        %v4513 = vrot.slane %v4511, 5
        %v4514 = vsel %vm422, %v4509, %v4513
        %v4516 = vshrl.u32 %v4445, 16
        %v4518 = vrot.slane %v4516, 4
        %v4519 = vshll.u32 %v4445, 16
        %v4521 = vrot.slane %v4519, 5
        %v4522 = vor.u32 %v4518, %v4521
        %v4523 = vrot.slane %v4522, 4
        %v4525 = vshll.u32 %v4446, 16
        %v4527 = vrot.slane %v4525, 5
        %v4528 = vsel %vm422, %v4523, %v4527
        %v4529 = vshrl.u32 %v4446, 16
        %v4531 = vrot.slane %v4529, 4
        %v4532 = vor.u32 %v4531, %v4527
        %v4533 = vrot.slane %v4532, 4
        %v4535 = vshll.u32 %v4476, 16
        %v4537 = vrot.slane %v4535, 5
        %v4538 = vsel %vm422, %v4533, %v4537
        %v4540 = vshrl.u32 %v4447, 16
        %v4542 = vrot.slane %v4540, 4
        %v4543 = vshll.u32 %v4447, 16
        %v4545 = vrot.slane %v4543, 5
        %v4546 = vor.u32 %v4542, %v4545
        %v4547 = vrot.slane %v4546, 4
        %v4549 = vshll.u32 %v4448, 16
        %v4551 = vrot.slane %v4549, 5
        %v4552 = vsel %vm422, %v4547, %v4551
        %v4553 = vshrl.u32 %v4448, 16
        %v4555 = vrot.slane %v4553, 4
        %v4556 = vor.u32 %v4555, %v4551
        %v4557 = vrot.slane %v4556, 4
        %v4559 = vshll.u32 %v4477, 16
        %v4561 = vrot.slane %v4559, 5
        %v4562 = vsel %vm422, %v4557, %v4561
        %v4564 = vshrl.u32 %v4449, 16
        %v4566 = vrot.slane %v4564, 4
        %v4567 = vshll.u32 %v4449, 16
        %v4569 = vrot.slane %v4567, 5
        %v4570 = vor.u32 %v4566, %v4569
        %v4571 = vrot.slane %v4570, 4
        %v4573 = vshll.u32 %v4450, 16
        %v4575 = vrot.slane %v4573, 5
        %v4576 = vsel %vm422, %v4571, %v4575
        %v4577 = vshrl.u32 %v4450, 16
        %v4579 = vrot.slane %v4577, 4
        %v4580 = vor.u32 %v4579, %v4575
        %v4581 = vrot.slane %v4580, 4
        %v4583 = vshll.u32 %v4478, 16
        %v4585 = vrot.slane %v4583, 5
        %v4586 = vsel %vm422, %v4581, %v4585
        %v4588 = vshrl.u32 %v4451, 16
        %v4590 = vrot.slane %v4588, 4
        %v4591 = vshll.u32 %v4451, 16
        %v4593 = vrot.slane %v4591, 5
        %v4594 = vor.u32 %v4590, %v4593
        %v4595 = vrot.slane %v4594, 4
        %v4597 = vshll.u32 %v4452, 16
        %v4599 = vrot.slane %v4597, 5
        %v4600 = vsel %vm422, %v4595, %v4599
        %v4601 = vshrl.u32 %v4452, 16
        %v4603 = vrot.slane %v4601, 4
        %v4604 = vor.u32 %v4603, %v4599
        %v4605 = vrot.slane %v4604, 4
        %v4607 = vshll.u32 %v4479, 16
        %v4609 = vrot.slane %v4607, 5
        %v4610 = vsel %vm422, %v4605, %v4609
        %v4612 = vshrl.u32 %v4453, 16
        %v4614 = vrot.slane %v4612, 4
        %v4615 = vshll.u32 %v4453, 16
        %v4617 = vrot.slane %v4615, 5
        %v4618 = vor.u32 %v4614, %v4617
        %v4619 = vrot.slane %v4618, 4
        %v4621 = vshll.u32 %v4454, 16
        %v4623 = vrot.slane %v4621, 5
        %v4624 = vsel %vm422, %v4619, %v4623
        %v4625 = vshrl.u32 %v4454, 16
        %v4627 = vrot.slane %v4625, 4
        %v4628 = vor.u32 %v4627, %v4623
        %v4629 = vrot.slane %v4628, 4
        %v4631 = vshll.u32 %v4480, 16
        %v4633 = vrot.slane %v4631, 5
        %v4634 = vsel %vm422, %v4629, %v4633
        %v4636 = vshrl.u32 %v4455, 16
        %v4638 = vrot.slane %v4636, 4
        %v4639 = vshll.u32 %v4455, 16
        %v4641 = vrot.slane %v4639, 5
        %v4642 = vor.u32 %v4638, %v4641
        %v4643 = vrot.slane %v4642, 4
        %v4645 = vshll.u32 %v4456, 16
        %v4647 = vrot.slane %v4645, 5
        %v4648 = vsel %vm422, %v4643, %v4647
        %v4649 = vshrl.u32 %v4456, 16
        %v4651 = vrot.slane %v4649, 4
        %v4652 = vor.u32 %v4651, %v4647
        %v4653 = vrot.slane %v4652, 4
        %v4655 = vshll.u32 %v4481, 16
        %v4657 = vrot.slane %v4655, 5
        %v4658 = vsel %vm422, %v4653, %v4657
        %v4660 = vshrl.u32 %v4457, 16
        %v4662 = vrot.slane %v4660, 4
        %v4663 = vshll.u32 %v4457, 16
        %v4665 = vrot.slane %v4663, 5
        %v4666 = vor.u32 %v4662, %v4665
        %v4667 = vrot.slane %v4666, 4
        %v4669 = vshll.u32 %v4458, 16
        %v4671 = vrot.slane %v4669, 5
        %v4672 = vsel %vm422, %v4667, %v4671
        %v4673 = vshrl.u32 %v4458, 16
        %v4675 = vrot.slane %v4673, 4
        %v4676 = vor.u32 %v4675, %v4671
        %v4677 = vrot.slane %v4676, 4
        %v4679 = vshll.u32 %v4482, 16
        %v4681 = vrot.slane %v4679, 5
        %v4682 = vsel %vm422, %v4677, %v4681
        %v4684 = vshrl.u32 %v4459, 16
        %v4686 = vrot.slane %v4684, 4
        %v4687 = vshll.u32 %v4459, 16
        %v4689 = vrot.slane %v4687, 5
        %v4690 = vor.u32 %v4686, %v4689
        %v4691 = vrot.slane %v4690, 4
        %v4693 = vshll.u32 %v4460, 16
        %v4695 = vrot.slane %v4693, 5
        %v4696 = vsel %vm422, %v4691, %v4695
        %v4697 = vshrl.u32 %v4460, 16
        %v4699 = vrot.slane %v4697, 4
        %v4700 = vor.u32 %v4699, %v4695
        %v4701 = vrot.slane %v4700, 4
        %v4703 = vshll.u32 %v4483, 16
        %v4705 = vrot.slane %v4703, 5
        %v4706 = vsel %vm422, %v4701, %v4705
        %v4708 = vshrl.u32 %v4461, 16
        %v4710 = vrot.slane %v4708, 4
        %v4711 = vshll.u32 %v4461, 16
        %v4713 = vrot.slane %v4711, 5
        %v4714 = vor.u32 %v4710, %v4713
        %v4715 = vrot.slane %v4714, 4
        %v4717 = vshll.u32 %v4462, 16
        %v4719 = vrot.slane %v4717, 5
        %v4720 = vsel %vm422, %v4715, %v4719
        %v4721 = vshrl.u32 %v4462, 16
        %v4723 = vrot.slane %v4721, 4
        %v4724 = vor.u32 %v4723, %v4719
        %v4725 = vrot.slane %v4724, 4
        %v4727 = vshll.u32 %v4484, 16
        %v4729 = vrot.slane %v4727, 5
        %v4730 = vsel %vm422, %v4725, %v4729
        %v4732 = vshrl.u32 %v4463, 16
        %v4734 = vrot.slane %v4732, 4
        %v4735 = vshll.u32 %v4463, 16
        %v4737 = vrot.slane %v4735, 5
        %v4738 = vor.u32 %v4734, %v4737
        %v4739 = vrot.slane %v4738, 4
        %v4741 = vshll.u32 %v4464, 16
        %v4743 = vrot.slane %v4741, 5
        %v4744 = vsel %vm422, %v4739, %v4743
        %v4745 = vshrl.u32 %v4464, 16
        %v4747 = vrot.slane %v4745, 4
        %v4748 = vor.u32 %v4747, %v4743
        %v4749 = vrot.slane %v4748, 4
        %v4751 = vshll.u32 %v4485, 16
        %v4753 = vrot.slane %v4751, 5
        %v4754 = vsel %vm422, %v4749, %v4753
        %v4756 = vshrl.u32 %v4465, 16
        %v4758 = vrot.slane %v4756, 4
        %v4759 = vshll.u32 %v4465, 16
        %v4761 = vrot.slane %v4759, 5
        %v4762 = vor.u32 %v4758, %v4761
        %v4763 = vrot.slane %v4762, 4
        %v4765 = vshll.u32 %v4466, 16
        %v4767 = vrot.slane %v4765, 5
        %v4768 = vsel %vm422, %v4763, %v4767
        %v4769 = vshrl.u32 %v4466, 16
        %v4771 = vrot.slane %v4769, 4
        %v4772 = vor.u32 %v4771, %v4767
        %v4773 = vrot.slane %v4772, 4
        %v4775 = vshll.u32 %v4486, 16
        %v4777 = vrot.slane %v4775, 5
        %v4778 = vsel %vm422, %v4773, %v4777
        %v4780 = vshrl.u32 %v4467, 16
        %v4782 = vrot.slane %v4780, 4
        %v4783 = vshll.u32 %v4467, 16
        %v4785 = vrot.slane %v4783, 5
        %v4786 = vor.u32 %v4782, %v4785
        %v4787 = vrot.slane %v4786, 4
        %v4789 = vshll.u32 %v4468, 16
        %v4791 = vrot.slane %v4789, 5
        %v4792 = vsel %vm422, %v4787, %v4791
        %v4793 = vshrl.u32 %v4468, 16
        %v4795 = vrot.slane %v4793, 4
        %v4796 = vor.u32 %v4795, %v4791
        %v4797 = vrot.slane %v4796, 4
        %v4799 = vshll.u32 %v4487, 16
        %v4801 = vrot.slane %v4799, 5
        %v4802 = vsel %vm422, %v4797, %v4801
        %v4804 = vshrl.u32 %v4469, 16
        %v4806 = vrot.slane %v4804, 4
        %v4807 = vshll.u32 %v4469, 16
        %v4809 = vrot.slane %v4807, 5
        %v4810 = vor.u32 %v4806, %v4809
        %v4811 = vrot.slane %v4810, 4
        %v4813 = vshll.u32 %v4470, 16
        %v4815 = vrot.slane %v4813, 5
        %v4816 = vsel %vm422, %v4811, %v4815
        %v4817 = vshrl.u32 %v4470, 16
        %v4819 = vrot.slane %v4817, 4
        %v4820 = vor.u32 %v4819, %v4815
        %v4821 = vrot.slane %v4820, 4
        %v4823 = vshll.u32 %v4488, 16
        %v4825 = vrot.slane %v4823, 5
        %v4826 = vsel %vm422, %v4821, %v4825
        %v4828 = vshrl.u32 %v4471, 16
        %v4830 = vrot.slane %v4828, 4
        %v4831 = vshll.u32 %v4471, 16
        %v4833 = vrot.slane %v4831, 5
        %v4834 = vor.u32 %v4830, %v4833
        %v4835 = vrot.slane %v4834, 4
        %v4837 = vshll.u32 %v4472, 16
        %v4839 = vrot.slane %v4837, 5
        %v4840 = vsel %vm422, %v4835, %v4839
        %v4841 = vshrl.u32 %v4472, 16
        %v4843 = vrot.slane %v4841, 4
        %v4844 = vor.u32 %v4843, %v4839
        %v4845 = vrot.slane %v4844, 4
        %v4847 = vshll.u32 %v4489, 16
        %v4849 = vrot.slane %v4847, 5
        %v4850 = vsel %vm422, %v4845, %v4849
        %v4852 = vshrl.u32 %v4473, 16
        %v4854 = vrot.slane %v4852, 4
        %v4855 = vshll.u32 %v4473, 16
        %v4857 = vrot.slane %v4855, 5
        %v4858 = vor.u32 %v4854, %v4857
        %v4859 = vrot.slane %v4858, 4
        %v4861 = vshll.u32 %v4474, 16
        %v4863 = vrot.slane %v4861, 5
        %v4864 = vsel %vm422, %v4859, %v4863
        %v4865 = vshrl.u32 %v4474, 16
        %v4867 = vrot.slane %v4865, 4
        %v4868 = vor.u32 %v4867, %v4863
        %v4869 = vrot.slane %v4868, 4
        %v4871 = vshll.u32 %v4490, 16
        %v4873 = vrot.slane %v4871, 5
        %v4874 = vsel %vm422, %v4869, %v4873
        %v4875 = vld [vmem:[#allocation2] sm:$0xe]
        %v4876 = vld [vmem:[#allocation2 + $0xc] sm:$0xe]
        %v4877 = vld [vmem:[#allocation2 + $0x18] sm:$0xe]
        %v4878 = vld [vmem:[#allocation2 + $0x24] sm:$0xe]
        %v4879 = vld [vmem:[#allocation2 + $0x30] sm:$0xe]
        %v4880 = vld [vmem:[#allocation2 + $0x3c] sm:$0xe]
        %v4881 = vld [vmem:[#allocation2 + $0x48] sm:$0xe]
        %v4882 = vld [vmem:[#allocation2 + $0x54] sm:$0xe]
        %v4883 = vld [vmem:[#allocation2 + $0x60] sm:$0xe]
        %v4884 = vld [vmem:[#allocation2 + $0x6c] sm:$0xe]
        %v4885 = vld [vmem:[#allocation2 + $0x78] sm:$0xe]
        %v4886 = vld [vmem:[#allocation2 + $0x84] sm:$0xe]
        %v4887 = vld [vmem:[#allocation2 + $0x90] sm:$0xe]
        %v4888 = vld [vmem:[#allocation2 + $0x9c] sm:$0xe]
        %v4889 = vld [vmem:[#allocation2 + $0xa8] sm:$0xe]
        %v4890 = vld [vmem:[#allocation2 + $0xb4] sm:$0xe]
        %v4939 = vrot.slane %v4875, 5
        %v4940 = vrot.slane %v4939, 4
        %v4941 = vrot.slane %v4444, 5
        %v4942 = vsel %vm873, %v4940, %v4941
        %v4943 = vrot.slane %v4941, 4
        %v4944 = vrot.slane %v4475, 5
        %v4945 = vsel %vm873, %v4943, %v4944
        %v4946 = vrot.slane %v4876, 5
        %v4947 = vrot.slane %v4946, 4
        %v4948 = vrot.slane %v4446, 5
        %v4949 = vsel %vm873, %v4947, %v4948
        %v4950 = vrot.slane %v4948, 4
        %v4951 = vrot.slane %v4476, 5
        %v4952 = vsel %vm873, %v4950, %v4951
        %v4953 = vrot.slane %v4877, 5
        %v4954 = vrot.slane %v4953, 4
        %v4955 = vrot.slane %v4448, 5
        %v4956 = vsel %vm873, %v4954, %v4955
        %v4957 = vrot.slane %v4955, 4
        %v4958 = vrot.slane %v4477, 5
        %v4959 = vsel %vm873, %v4957, %v4958
        %v4960 = vrot.slane %v4878, 5
        %v4961 = vrot.slane %v4960, 4
        %v4962 = vrot.slane %v4450, 5
        %v4963 = vsel %vm873, %v4961, %v4962
        %v4964 = vrot.slane %v4962, 4
        %v4965 = vrot.slane %v4478, 5
        %v4966 = vsel %vm873, %v4964, %v4965
        %v4967 = vrot.slane %v4879, 5
        %v4968 = vrot.slane %v4967, 4
        %v4969 = vrot.slane %v4452, 5
        %v4970 = vsel %vm873, %v4968, %v4969
        %v4971 = vrot.slane %v4969, 4
        %v4972 = vrot.slane %v4479, 5
        %v4973 = vsel %vm873, %v4971, %v4972
        %v4974 = vrot.slane %v4880, 5
        %v4975 = vrot.slane %v4974, 4
        %v4976 = vrot.slane %v4454, 5
        %v4977 = vsel %vm873, %v4975, %v4976
        %v4978 = vrot.slane %v4976, 4
        %v4979 = vrot.slane %v4480, 5
        %v4980 = vsel %vm873, %v4978, %v4979
        %v4981 = vrot.slane %v4881, 5
        %v4982 = vrot.slane %v4981, 4
        %v4983 = vrot.slane %v4456, 5
        %v4984 = vsel %vm873, %v4982, %v4983
        %v4985 = vrot.slane %v4983, 4
        %v4986 = vrot.slane %v4481, 5
        %v4987 = vsel %vm873, %v4985, %v4986
        %v4988 = vrot.slane %v4882, 5
        %v4989 = vrot.slane %v4988, 4
        %v4990 = vrot.slane %v4458, 5
        %v4991 = vsel %vm873, %v4989, %v4990
        %v4992 = vrot.slane %v4990, 4
        %v4993 = vrot.slane %v4482, 5
        %v4994 = vsel %vm873, %v4992, %v4993
        %v4995 = vrot.slane %v4883, 5
        %v4996 = vrot.slane %v4995, 4
        %v4997 = vrot.slane %v4460, 5
        %v4998 = vsel %vm873, %v4996, %v4997
        %v4999 = vrot.slane %v4997, 4
        %v5000 = vrot.slane %v4483, 5
        %v5001 = vsel %vm873, %v4999, %v5000
        %v5002 = vrot.slane %v4884, 5
        %v5003 = vrot.slane %v5002, 4
        %v5004 = vrot.slane %v4462, 5
        %v5005 = vsel %vm873, %v5003, %v5004
        %v5006 = vrot.slane %v5004, 4
        %v5007 = vrot.slane %v4484, 5
        %v5008 = vsel %vm873, %v5006, %v5007
        %v5009 = vrot.slane %v4885, 5
        %v5010 = vrot.slane %v5009, 4
        %v5011 = vrot.slane %v4464, 5
        %v5012 = vsel %vm873, %v5010, %v5011
        %v5013 = vrot.slane %v5011, 4
        %v5014 = vrot.slane %v4485, 5
        %v5015 = vsel %vm873, %v5013, %v5014
        %v5016 = vrot.slane %v4886, 5
        %v5017 = vrot.slane %v5016, 4
        %v5018 = vrot.slane %v4466, 5
        %v5019 = vsel %vm873, %v5017, %v5018
        %v5020 = vrot.slane %v5018, 4
        %v5021 = vrot.slane %v4486, 5
        %v5022 = vsel %vm873, %v5020, %v5021
        %v5023 = vrot.slane %v4887, 5
        %v5024 = vrot.slane %v5023, 4
        %v5025 = vrot.slane %v4468, 5
        %v5026 = vsel %vm873, %v5024, %v5025
        %v5027 = vrot.slane %v5025, 4
        %v5028 = vrot.slane %v4487, 5
        %v5029 = vsel %vm873, %v5027, %v5028
        %v5030 = vrot.slane %v4888, 5
        %v5031 = vrot.slane %v5030, 4
        %v5032 = vrot.slane %v4470, 5
        %v5033 = vsel %vm873, %v5031, %v5032
        %v5034 = vrot.slane %v5032, 4
        %v5035 = vrot.slane %v4488, 5
        %v5036 = vsel %vm873, %v5034, %v5035
        %v5037 = vrot.slane %v4889, 5
        %v5038 = vrot.slane %v5037, 4
        %v5039 = vrot.slane %v4472, 5
        %v5040 = vsel %vm873, %v5038, %v5039
        %v5041 = vrot.slane %v5039, 4
        %v5042 = vrot.slane %v4489, 5
        %v5043 = vsel %vm873, %v5041, %v5042
        %v5044 = vrot.slane %v4890, 5
        %v5045 = vrot.slane %v5044, 4
        %v5046 = vrot.slane %v4474, 5
        %v5047 = vsel %vm873, %v5045, %v5046
        %v5048 = vrot.slane %v5046, 4
        %v5049 = vrot.slane %v4490, 5
        %v5050 = vsel %vm873, %v5048, %v5049
        %v5051 = vld [vmem:[%s3895] sm:$0xf]
        %v5052 = vld [vmem:[%s3895 + $0x4] sm:$0xf]
        %v5053 = vld [vmem:[%s3895 + $0xc] sm:$0xf]
        %v5054 = vld [vmem:[%s3895 + $0x10] sm:$0xf]
        %v5055 = vld [vmem:[%s3895 + $0x18] sm:$0xf]
        %v5056 = vld [vmem:[%s3895 + $0x1c] sm:$0xf]
        %v5057 = vld [vmem:[%s3895 + $0x24] sm:$0xf]
        %v5058 = vld [vmem:[%s3895 + $0x28] sm:$0xf]
        %v5059 = vld [vmem:[%s3895 + $0x30] sm:$0xf]
        %v5060 = vld [vmem:[%s3895 + $0x34] sm:$0xf]
        %v5061 = vld [vmem:[%s3895 + $0x3c] sm:$0xf]
        %v5062 = vld [vmem:[%s3895 + $0x40] sm:$0xf]
        %v5063 = vld [vmem:[%s3895 + $0x48] sm:$0xf]
        %v5064 = vld [vmem:[%s3895 + $0x4c] sm:$0xf]
        %v5065 = vld [vmem:[%s3895 + $0x54] sm:$0xf]
        %v5066 = vld [vmem:[%s3895 + $0x58] sm:$0xf]
        %v5067 = vld [vmem:[%s3895 + $0x60] sm:$0xf]
        %v5068 = vld [vmem:[%s3895 + $0x64] sm:$0xf]
        %v5069 = vld [vmem:[%s3895 + $0x6c] sm:$0xf]
        %v5070 = vld [vmem:[%s3895 + $0x70] sm:$0xf]
        %v5071 = vld [vmem:[%s3895 + $0x78] sm:$0xf]
        %v5072 = vld [vmem:[%s3895 + $0x7c] sm:$0xf]
        %v5073 = vld [vmem:[%s3895 + $0x84] sm:$0xf]
        %v5074 = vld [vmem:[%s3895 + $0x88] sm:$0xf]
        %v5075 = vld [vmem:[%s3895 + $0x90] sm:$0xf]
        %v5076 = vld [vmem:[%s3895 + $0x94] sm:$0xf]
        %v5077 = vld [vmem:[%s3895 + $0x9c] sm:$0xf]
        %v5078 = vld [vmem:[%s3895 + $0xa0] sm:$0xf]
        %v5079 = vld [vmem:[%s3895 + $0xa8] sm:$0xf]
        %v5080 = vld [vmem:[%s3895 + $0xac] sm:$0xf]
        %v5081 = vld [vmem:[%s3895 + $0xb4] sm:$0xf]
        %v5082 = vld [vmem:[%s3895 + $0xb8] sm:$0xf]
        %v5083 = vld [vmem:[%s3895 + $0x8] sm:$0x1]
        %v5084 = vld [vmem:[%s3895 + $0x14] sm:$0x1]
        %v5085 = vld [vmem:[%s3895 + $0x20] sm:$0x1]
        %v5086 = vld [vmem:[%s3895 + $0x2c] sm:$0x1]
        %v5087 = vld [vmem:[%s3895 + $0x38] sm:$0x1]
        %v5088 = vld [vmem:[%s3895 + $0x44] sm:$0x1]
        %v5089 = vld [vmem:[%s3895 + $0x50] sm:$0x1]
        %v5090 = vld [vmem:[%s3895 + $0x5c] sm:$0x1]
        %v5091 = vld [vmem:[%s3895 + $0x68] sm:$0x1]
        %v5092 = vld [vmem:[%s3895 + $0x74] sm:$0x1]
        %v5093 = vld [vmem:[%s3895 + $0x80] sm:$0x1]
        %v5094 = vld [vmem:[%s3895 + $0x8c] sm:$0x1]
        %v5095 = vld [vmem:[%s3895 + $0x98] sm:$0x1]
        %v5096 = vld [vmem:[%s3895 + $0xa4] sm:$0x1]
        %v5097 = vld [vmem:[%s3895 + $0xb0] sm:$0x1]
        %v5098 = vld [vmem:[%s3895 + $0xbc] sm:$0x1]
        %v5100 = vshrl.u32 %v5051, 16
        %v5102 = vrot.slane %v5100, 4
        %v5103 = vshll.u32 %v5051, 16
        %v5105 = vrot.slane %v5103, 5
        %v5106 = vor.u32 %v5102, %v5105
        %v5107 = vrot.slane %v5106, 4
        %v5109 = vshll.u32 %v5052, 16
        %v5111 = vrot.slane %v5109, 5
        %v5112 = vsel %vm422, %v5107, %v5111
        %v5113 = vshrl.u32 %v5052, 16
        %v5115 = vrot.slane %v5113, 4
        %v5116 = vor.u32 %v5115, %v5111
        %v5117 = vrot.slane %v5116, 4
        %v5119 = vshll.u32 %v5083, 16
        %v5121 = vrot.slane %v5119, 5
        %v5122 = vsel %vm422, %v5117, %v5121
        %v5124 = vshrl.u32 %v5053, 16
        %v5126 = vrot.slane %v5124, 4
        %v5127 = vshll.u32 %v5053, 16
        %v5129 = vrot.slane %v5127, 5
        %v5130 = vor.u32 %v5126, %v5129
        %v5131 = vrot.slane %v5130, 4
        %v5133 = vshll.u32 %v5054, 16
        %v5135 = vrot.slane %v5133, 5
        %v5136 = vsel %vm422, %v5131, %v5135
        %v5137 = vshrl.u32 %v5054, 16
        %v5139 = vrot.slane %v5137, 4
        %v5140 = vor.u32 %v5139, %v5135
        %v5141 = vrot.slane %v5140, 4
        %v5143 = vshll.u32 %v5084, 16
        %v5145 = vrot.slane %v5143, 5
        %v5146 = vsel %vm422, %v5141, %v5145
        %v5148 = vshrl.u32 %v5055, 16
        %v5150 = vrot.slane %v5148, 4
        %v5151 = vshll.u32 %v5055, 16
        %v5153 = vrot.slane %v5151, 5
        %v5154 = vor.u32 %v5150, %v5153
        %v5155 = vrot.slane %v5154, 4
        %v5157 = vshll.u32 %v5056, 16
        %v5159 = vrot.slane %v5157, 5
        %v5160 = vsel %vm422, %v5155, %v5159
        %v5161 = vshrl.u32 %v5056, 16
        %v5163 = vrot.slane %v5161, 4
        %v5164 = vor.u32 %v5163, %v5159
        %v5165 = vrot.slane %v5164, 4
        %v5167 = vshll.u32 %v5085, 16
        %v5169 = vrot.slane %v5167, 5
        %v5170 = vsel %vm422, %v5165, %v5169
        %v5172 = vshrl.u32 %v5057, 16
        %v5174 = vrot.slane %v5172, 4
        %v5175 = vshll.u32 %v5057, 16
        %v5177 = vrot.slane %v5175, 5
        %v5178 = vor.u32 %v5174, %v5177
        %v5179 = vrot.slane %v5178, 4
        %v5181 = vshll.u32 %v5058, 16
        %v5183 = vrot.slane %v5181, 5
        %v5184 = vsel %vm422, %v5179, %v5183
        %v5185 = vshrl.u32 %v5058, 16
        %v5187 = vrot.slane %v5185, 4
        %v5188 = vor.u32 %v5187, %v5183
        %v5189 = vrot.slane %v5188, 4
        %v5191 = vshll.u32 %v5086, 16
        %v5193 = vrot.slane %v5191, 5
        %v5194 = vsel %vm422, %v5189, %v5193
        %v5196 = vshrl.u32 %v5059, 16
        %v5198 = vrot.slane %v5196, 4
        %v5199 = vshll.u32 %v5059, 16
        %v5201 = vrot.slane %v5199, 5
        %v5202 = vor.u32 %v5198, %v5201
        %v5203 = vrot.slane %v5202, 4
        %v5205 = vshll.u32 %v5060, 16
        %v5207 = vrot.slane %v5205, 5
        %v5208 = vsel %vm422, %v5203, %v5207
        %v5209 = vshrl.u32 %v5060, 16
        %v5211 = vrot.slane %v5209, 4
        %v5212 = vor.u32 %v5211, %v5207
        %v5213 = vrot.slane %v5212, 4
        %v5215 = vshll.u32 %v5087, 16
        %v5217 = vrot.slane %v5215, 5
        %v5218 = vsel %vm422, %v5213, %v5217
        %v5220 = vshrl.u32 %v5061, 16
        %v5222 = vrot.slane %v5220, 4
        %v5223 = vshll.u32 %v5061, 16
        %v5225 = vrot.slane %v5223, 5
        %v5226 = vor.u32 %v5222, %v5225
        %v5227 = vrot.slane %v5226, 4
        %v5229 = vshll.u32 %v5062, 16
        %v5231 = vrot.slane %v5229, 5
        %v5232 = vsel %vm422, %v5227, %v5231
        %v5233 = vshrl.u32 %v5062, 16
        %v5235 = vrot.slane %v5233, 4
        %v5236 = vor.u32 %v5235, %v5231
        %v5237 = vrot.slane %v5236, 4
        %v5239 = vshll.u32 %v5088, 16
        %v5241 = vrot.slane %v5239, 5
        %v5242 = vsel %vm422, %v5237, %v5241
        %v5244 = vshrl.u32 %v5063, 16
        %v5246 = vrot.slane %v5244, 4
        %v5247 = vshll.u32 %v5063, 16
        %v5249 = vrot.slane %v5247, 5
        %v5250 = vor.u32 %v5246, %v5249
        %v5251 = vrot.slane %v5250, 4
        %v5253 = vshll.u32 %v5064, 16
        %v5255 = vrot.slane %v5253, 5
        %v5256 = vsel %vm422, %v5251, %v5255
        %v5257 = vshrl.u32 %v5064, 16
        %v5259 = vrot.slane %v5257, 4
        %v5260 = vor.u32 %v5259, %v5255
        %v5261 = vrot.slane %v5260, 4
        %v5263 = vshll.u32 %v5089, 16
        %v5265 = vrot.slane %v5263, 5
        %v5266 = vsel %vm422, %v5261, %v5265
        %v5268 = vshrl.u32 %v5065, 16
        %v5270 = vrot.slane %v5268, 4
        %v5271 = vshll.u32 %v5065, 16
        %v5273 = vrot.slane %v5271, 5
        %v5274 = vor.u32 %v5270, %v5273
        %v5275 = vrot.slane %v5274, 4
        %v5277 = vshll.u32 %v5066, 16
        %v5279 = vrot.slane %v5277, 5
        %v5280 = vsel %vm422, %v5275, %v5279
        %v5281 = vshrl.u32 %v5066, 16
        %v5283 = vrot.slane %v5281, 4
        %v5284 = vor.u32 %v5283, %v5279
        %v5285 = vrot.slane %v5284, 4
        %v5287 = vshll.u32 %v5090, 16
        %v5289 = vrot.slane %v5287, 5
        %v5290 = vsel %vm422, %v5285, %v5289
        %v5292 = vshrl.u32 %v5067, 16
        %v5294 = vrot.slane %v5292, 4
        %v5295 = vshll.u32 %v5067, 16
        %v5297 = vrot.slane %v5295, 5
        %v5298 = vor.u32 %v5294, %v5297
        %v5299 = vrot.slane %v5298, 4
        %v5301 = vshll.u32 %v5068, 16
        %v5303 = vrot.slane %v5301, 5
        %v5304 = vsel %vm422, %v5299, %v5303
        %v5305 = vshrl.u32 %v5068, 16
        %v5307 = vrot.slane %v5305, 4
        %v5308 = vor.u32 %v5307, %v5303
        %v5309 = vrot.slane %v5308, 4
        %v5311 = vshll.u32 %v5091, 16
        %v5313 = vrot.slane %v5311, 5
        %v5314 = vsel %vm422, %v5309, %v5313
        %v5316 = vshrl.u32 %v5069, 16
        %v5318 = vrot.slane %v5316, 4
        %v5319 = vshll.u32 %v5069, 16
        %v5321 = vrot.slane %v5319, 5
        %v5322 = vor.u32 %v5318, %v5321
        %v5323 = vrot.slane %v5322, 4
        %v5325 = vshll.u32 %v5070, 16
        %v5327 = vrot.slane %v5325, 5
        %v5328 = vsel %vm422, %v5323, %v5327
        %v5329 = vshrl.u32 %v5070, 16
        %v5331 = vrot.slane %v5329, 4
        %v5332 = vor.u32 %v5331, %v5327
        %v5333 = vrot.slane %v5332, 4
        %v5335 = vshll.u32 %v5092, 16
        %v5337 = vrot.slane %v5335, 5
        %v5338 = vsel %vm422, %v5333, %v5337
        %v5340 = vshrl.u32 %v5071, 16
        %v5342 = vrot.slane %v5340, 4
        %v5343 = vshll.u32 %v5071, 16
        %v5345 = vrot.slane %v5343, 5
        %v5346 = vor.u32 %v5342, %v5345
        %v5347 = vrot.slane %v5346, 4
        %v5349 = vshll.u32 %v5072, 16
        %v5351 = vrot.slane %v5349, 5
        %v5352 = vsel %vm422, %v5347, %v5351
        %v5353 = vshrl.u32 %v5072, 16
        %v5355 = vrot.slane %v5353, 4
        %v5356 = vor.u32 %v5355, %v5351
        %v5357 = vrot.slane %v5356, 4
        %v5359 = vshll.u32 %v5093, 16
        %v5361 = vrot.slane %v5359, 5
        %v5362 = vsel %vm422, %v5357, %v5361
        %v5364 = vshrl.u32 %v5073, 16
        %v5366 = vrot.slane %v5364, 4
        %v5367 = vshll.u32 %v5073, 16
        %v5369 = vrot.slane %v5367, 5
        %v5370 = vor.u32 %v5366, %v5369
        %v5371 = vrot.slane %v5370, 4
        %v5373 = vshll.u32 %v5074, 16
        %v5375 = vrot.slane %v5373, 5
        %v5376 = vsel %vm422, %v5371, %v5375
        %v5377 = vshrl.u32 %v5074, 16
        %v5379 = vrot.slane %v5377, 4
        %v5380 = vor.u32 %v5379, %v5375
        %v5381 = vrot.slane %v5380, 4
        %v5383 = vshll.u32 %v5094, 16
        %v5385 = vrot.slane %v5383, 5
        %v5386 = vsel %vm422, %v5381, %v5385
        %v5388 = vshrl.u32 %v5075, 16
        %v5390 = vrot.slane %v5388, 4
        %v5391 = vshll.u32 %v5075, 16
        %v5393 = vrot.slane %v5391, 5
        %v5394 = vor.u32 %v5390, %v5393
        %v5395 = vrot.slane %v5394, 4
        %v5397 = vshll.u32 %v5076, 16
        %v5399 = vrot.slane %v5397, 5
        %v5400 = vsel %vm422, %v5395, %v5399
        %v5401 = vshrl.u32 %v5076, 16
        %v5403 = vrot.slane %v5401, 4
        %v5404 = vor.u32 %v5403, %v5399
        %v5405 = vrot.slane %v5404, 4
        %v5407 = vshll.u32 %v5095, 16
        %v5409 = vrot.slane %v5407, 5
        %v5410 = vsel %vm422, %v5405, %v5409
        %v5412 = vshrl.u32 %v5077, 16
        %v5414 = vrot.slane %v5412, 4
        %v5415 = vshll.u32 %v5077, 16
        %v5417 = vrot.slane %v5415, 5
        %v5418 = vor.u32 %v5414, %v5417
        %v5419 = vrot.slane %v5418, 4
        %v5421 = vshll.u32 %v5078, 16
        %v5423 = vrot.slane %v5421, 5
        %v5424 = vsel %vm422, %v5419, %v5423
        %v5425 = vshrl.u32 %v5078, 16
        %v5427 = vrot.slane %v5425, 4
        %v5428 = vor.u32 %v5427, %v5423
        %v5429 = vrot.slane %v5428, 4
        %v5431 = vshll.u32 %v5096, 16
        %v5433 = vrot.slane %v5431, 5
        %v5434 = vsel %vm422, %v5429, %v5433
        %v5436 = vshrl.u32 %v5079, 16
        %v5438 = vrot.slane %v5436, 4
        %v5439 = vshll.u32 %v5079, 16
        %v5441 = vrot.slane %v5439, 5
        %v5442 = vor.u32 %v5438, %v5441
        %v5443 = vrot.slane %v5442, 4
        %v5445 = vshll.u32 %v5080, 16
        %v5447 = vrot.slane %v5445, 5
        %v5448 = vsel %vm422, %v5443, %v5447
        %v5449 = vshrl.u32 %v5080, 16
        %v5451 = vrot.slane %v5449, 4
        %v5452 = vor.u32 %v5451, %v5447
        %v5453 = vrot.slane %v5452, 4
        %v5455 = vshll.u32 %v5097, 16
        %v5457 = vrot.slane %v5455, 5
        %v5458 = vsel %vm422, %v5453, %v5457
        %v5460 = vshrl.u32 %v5081, 16
        %v5462 = vrot.slane %v5460, 4
        %v5463 = vshll.u32 %v5081, 16
        %v5465 = vrot.slane %v5463, 5
        %v5466 = vor.u32 %v5462, %v5465
        %v5467 = vrot.slane %v5466, 4
        %v5469 = vshll.u32 %v5082, 16
        %v5471 = vrot.slane %v5469, 5
        %v5472 = vsel %vm422, %v5467, %v5471
        %v5473 = vshrl.u32 %v5082, 16
        %v5475 = vrot.slane %v5473, 4
        %v5476 = vor.u32 %v5475, %v5471
        %v5477 = vrot.slane %v5476, 4
        %v5479 = vshll.u32 %v5098, 16
        %v5481 = vrot.slane %v5479, 5
        %v5482 = vsel %vm422, %v5477, %v5481
        %v5483 = vld [vmem:[%s3895] sm:$0xe]
        %v5484 = vld [vmem:[%s3895 + $0xc] sm:$0xe]
        %v5485 = vld [vmem:[%s3895 + $0x18] sm:$0xe]
        %v5486 = vld [vmem:[%s3895 + $0x24] sm:$0xe]
        %v5487 = vld [vmem:[%s3895 + $0x30] sm:$0xe]
        %v5488 = vld [vmem:[%s3895 + $0x3c] sm:$0xe]
        %v5489 = vld [vmem:[%s3895 + $0x48] sm:$0xe]
        %v5490 = vld [vmem:[%s3895 + $0x54] sm:$0xe]
        %v5491 = vld [vmem:[%s3895 + $0x60] sm:$0xe]
        %v5492 = vld [vmem:[%s3895 + $0x6c] sm:$0xe]
        %v5493 = vld [vmem:[%s3895 + $0x78] sm:$0xe]
        %v5494 = vld [vmem:[%s3895 + $0x84] sm:$0xe]
        %v5495 = vld [vmem:[%s3895 + $0x90] sm:$0xe]
        %v5496 = vld [vmem:[%s3895 + $0x9c] sm:$0xe]
        %v5497 = vld [vmem:[%s3895 + $0xa8] sm:$0xe]
        %v5498 = vld [vmem:[%s3895 + $0xb4] sm:$0xe]
        %v5547 = vrot.slane %v5483, 5
        %v5548 = vrot.slane %v5547, 4
        %v5549 = vrot.slane %v5052, 5
        %v5550 = vsel %vm873, %v5548, %v5549
        %v5551 = vrot.slane %v5549, 4
        %v5552 = vrot.slane %v5083, 5
        %v5553 = vsel %vm873, %v5551, %v5552
        %v5554 = vrot.slane %v5484, 5
        %v5555 = vrot.slane %v5554, 4
        %v5556 = vrot.slane %v5054, 5
        %v5557 = vsel %vm873, %v5555, %v5556
        %v5558 = vrot.slane %v5556, 4
        %v5559 = vrot.slane %v5084, 5
        %v5560 = vsel %vm873, %v5558, %v5559
        %v5561 = vrot.slane %v5485, 5
        %v5562 = vrot.slane %v5561, 4
        %v5563 = vrot.slane %v5056, 5
        %v5564 = vsel %vm873, %v5562, %v5563
        %v5565 = vrot.slane %v5563, 4
        %v5566 = vrot.slane %v5085, 5
        %v5567 = vsel %vm873, %v5565, %v5566
        %v5568 = vrot.slane %v5486, 5
        %v5569 = vrot.slane %v5568, 4
        %v5570 = vrot.slane %v5058, 5
        %v5571 = vsel %vm873, %v5569, %v5570
        %v5572 = vrot.slane %v5570, 4
        %v5573 = vrot.slane %v5086, 5
        %v5574 = vsel %vm873, %v5572, %v5573
        %v5575 = vrot.slane %v5487, 5
        %v5576 = vrot.slane %v5575, 4
        %v5577 = vrot.slane %v5060, 5
        %v5578 = vsel %vm873, %v5576, %v5577
        %v5579 = vrot.slane %v5577, 4
        %v5580 = vrot.slane %v5087, 5
        %v5581 = vsel %vm873, %v5579, %v5580
        %v5582 = vrot.slane %v5488, 5
        %v5583 = vrot.slane %v5582, 4
        %v5584 = vrot.slane %v5062, 5
        %v5585 = vsel %vm873, %v5583, %v5584
        %v5586 = vrot.slane %v5584, 4
        %v5587 = vrot.slane %v5088, 5
        %v5588 = vsel %vm873, %v5586, %v5587
        %v5589 = vrot.slane %v5489, 5
        %v5590 = vrot.slane %v5589, 4
        %v5591 = vrot.slane %v5064, 5
        %v5592 = vsel %vm873, %v5590, %v5591
        %v5593 = vrot.slane %v5591, 4
        %v5594 = vrot.slane %v5089, 5
        %v5595 = vsel %vm873, %v5593, %v5594
        %v5596 = vrot.slane %v5490, 5
        %v5597 = vrot.slane %v5596, 4
        %v5598 = vrot.slane %v5066, 5
        %v5599 = vsel %vm873, %v5597, %v5598
        %v5600 = vrot.slane %v5598, 4
        %v5601 = vrot.slane %v5090, 5
        %v5602 = vsel %vm873, %v5600, %v5601
        %v5603 = vrot.slane %v5491, 5
        %v5604 = vrot.slane %v5603, 4
        %v5605 = vrot.slane %v5068, 5
        %v5606 = vsel %vm873, %v5604, %v5605
        %v5607 = vrot.slane %v5605, 4
        %v5608 = vrot.slane %v5091, 5
        %v5609 = vsel %vm873, %v5607, %v5608
        %v5610 = vrot.slane %v5492, 5
        %v5611 = vrot.slane %v5610, 4
        %v5612 = vrot.slane %v5070, 5
        %v5613 = vsel %vm873, %v5611, %v5612
        %v5614 = vrot.slane %v5612, 4
        %v5615 = vrot.slane %v5092, 5
        %v5616 = vsel %vm873, %v5614, %v5615
        %v5617 = vrot.slane %v5493, 5
        %v5618 = vrot.slane %v5617, 4
        %v5619 = vrot.slane %v5072, 5
        %v5620 = vsel %vm873, %v5618, %v5619
        %v5621 = vrot.slane %v5619, 4
        %v5622 = vrot.slane %v5093, 5
        %v5623 = vsel %vm873, %v5621, %v5622
        %v5624 = vrot.slane %v5494, 5
        %v5625 = vrot.slane %v5624, 4
        %v5626 = vrot.slane %v5074, 5
        %v5627 = vsel %vm873, %v5625, %v5626
        %v5628 = vrot.slane %v5626, 4
        %v5629 = vrot.slane %v5094, 5
        %v5630 = vsel %vm873, %v5628, %v5629
        %v5631 = vrot.slane %v5495, 5
        %v5632 = vrot.slane %v5631, 4
        %v5633 = vrot.slane %v5076, 5
        %v5634 = vsel %vm873, %v5632, %v5633
        %v5635 = vrot.slane %v5633, 4
        %v5636 = vrot.slane %v5095, 5
        %v5637 = vsel %vm873, %v5635, %v5636
        %v5638 = vrot.slane %v5496, 5
        %v5639 = vrot.slane %v5638, 4
        %v5640 = vrot.slane %v5078, 5
        %v5641 = vsel %vm873, %v5639, %v5640
        %v5642 = vrot.slane %v5640, 4
        %v5643 = vrot.slane %v5096, 5
        %v5644 = vsel %vm873, %v5642, %v5643
        %v5645 = vrot.slane %v5497, 5
        %v5646 = vrot.slane %v5645, 4
        %v5647 = vrot.slane %v5080, 5
        %v5648 = vsel %vm873, %v5646, %v5647
        %v5649 = vrot.slane %v5647, 4
        %v5650 = vrot.slane %v5097, 5
        %v5651 = vsel %vm873, %v5649, %v5650
        %v5652 = vrot.slane %v5498, 5
        %v5653 = vrot.slane %v5652, 4
        %v5654 = vrot.slane %v5082, 5
        %v5655 = vsel %vm873, %v5653, %v5654
        %v5656 = vrot.slane %v5654, 4
        %v5657 = vrot.slane %v5098, 5
        %v5658 = vsel %vm873, %v5656, %v5657
        %s5659 = scalar_lea.vmem [#allocation2], 24
        %v5660 = vld [vmem:[%s5659] sm:$0xf]
        %v5661 = vld [vmem:[%s5659 + $0x4] sm:$0xf]
        %v5662 = vld [vmem:[%s5659 + $0xc] sm:$0xf]
        %v5663 = vld [vmem:[%s5659 + $0x10] sm:$0xf]
        %v5664 = vld [vmem:[%s5659 + $0x18] sm:$0xf]
        %v5665 = vld [vmem:[%s5659 + $0x1c] sm:$0xf]
        %v5666 = vld [vmem:[%s5659 + $0x24] sm:$0xf]
        %v5667 = vld [vmem:[%s5659 + $0x28] sm:$0xf]
        %v5668 = vld [vmem:[%s5659 + $0x30] sm:$0xf]
        %v5669 = vld [vmem:[%s5659 + $0x34] sm:$0xf]
        %v5670 = vld [vmem:[%s5659 + $0x3c] sm:$0xf]
        %v5671 = vld [vmem:[%s5659 + $0x40] sm:$0xf]
        %v5672 = vld [vmem:[%s5659 + $0x48] sm:$0xf]
        %v5673 = vld [vmem:[%s5659 + $0x4c] sm:$0xf]
        %v5674 = vld [vmem:[%s5659 + $0x54] sm:$0xf]
        %v5675 = vld [vmem:[%s5659 + $0x58] sm:$0xf]
        %v5676 = vld [vmem:[%s5659 + $0x60] sm:$0xf]
        %v5677 = vld [vmem:[%s5659 + $0x64] sm:$0xf]
        %v5678 = vld [vmem:[%s5659 + $0x6c] sm:$0xf]
        %v5679 = vld [vmem:[%s5659 + $0x70] sm:$0xf]
        %v5680 = vld [vmem:[%s5659 + $0x78] sm:$0xf]
        %v5681 = vld [vmem:[%s5659 + $0x7c] sm:$0xf]
        %v5682 = vld [vmem:[%s5659 + $0x84] sm:$0xf]
        %v5683 = vld [vmem:[%s5659 + $0x88] sm:$0xf]
        %v5684 = vld [vmem:[%s5659 + $0x90] sm:$0xf]
        %v5685 = vld [vmem:[%s5659 + $0x94] sm:$0xf]
        %v5686 = vld [vmem:[%s5659 + $0x9c] sm:$0xf]
        %v5687 = vld [vmem:[%s5659 + $0xa0] sm:$0xf]
        %v5688 = vld [vmem:[%s5659 + $0xa8] sm:$0xf]
        %v5689 = vld [vmem:[%s5659 + $0xac] sm:$0xf]
        %v5690 = vld [vmem:[%s5659 + $0xb4] sm:$0xf]
        %v5691 = vld [vmem:[%s5659 + $0xb8] sm:$0xf]
        %v5692 = vld [vmem:[%s5659 + $0x8] sm:$0x1]
        %v5693 = vld [vmem:[%s5659 + $0x14] sm:$0x1]
        %v5694 = vld [vmem:[%s5659 + $0x20] sm:$0x1]
        %v5695 = vld [vmem:[%s5659 + $0x2c] sm:$0x1]
        %v5696 = vld [vmem:[%s5659 + $0x38] sm:$0x1]
        %v5697 = vld [vmem:[%s5659 + $0x44] sm:$0x1]
        %v5698 = vld [vmem:[%s5659 + $0x50] sm:$0x1]
        %v5699 = vld [vmem:[%s5659 + $0x5c] sm:$0x1]
        %v5700 = vld [vmem:[%s5659 + $0x68] sm:$0x1]
        %v5701 = vld [vmem:[%s5659 + $0x74] sm:$0x1]
        %v5702 = vld [vmem:[%s5659 + $0x80] sm:$0x1]
        %v5703 = vld [vmem:[%s5659 + $0x8c] sm:$0x1]
        %v5704 = vld [vmem:[%s5659 + $0x98] sm:$0x1]
        %v5705 = vld [vmem:[%s5659 + $0xa4] sm:$0x1]
        %v5706 = vld [vmem:[%s5659 + $0xb0] sm:$0x1]
        %v5707 = vld [vmem:[%s5659 + $0xbc] sm:$0x1]
        %v5709 = vshrl.u32 %v5660, 16
        %v5711 = vrot.slane %v5709, 4
        %v5712 = vshll.u32 %v5660, 16
        %v5714 = vrot.slane %v5712, 5
        %v5715 = vor.u32 %v5711, %v5714
        %v5716 = vrot.slane %v5715, 4
        %v5718 = vshll.u32 %v5661, 16
        %v5720 = vrot.slane %v5718, 5
        %v5721 = vsel %vm422, %v5716, %v5720
        %v5722 = vshrl.u32 %v5661, 16
        %v5724 = vrot.slane %v5722, 4
        %v5725 = vor.u32 %v5724, %v5720
        %v5726 = vrot.slane %v5725, 4
        %v5728 = vshll.u32 %v5692, 16
        %v5730 = vrot.slane %v5728, 5
        %v5731 = vsel %vm422, %v5726, %v5730
        %v5733 = vshrl.u32 %v5662, 16
        %v5735 = vrot.slane %v5733, 4
        %v5736 = vshll.u32 %v5662, 16
        %v5738 = vrot.slane %v5736, 5
        %v5739 = vor.u32 %v5735, %v5738
        %v5740 = vrot.slane %v5739, 4
        %v5742 = vshll.u32 %v5663, 16
        %v5744 = vrot.slane %v5742, 5
        %v5745 = vsel %vm422, %v5740, %v5744
        %v5746 = vshrl.u32 %v5663, 16
        %v5748 = vrot.slane %v5746, 4
        %v5749 = vor.u32 %v5748, %v5744
        %v5750 = vrot.slane %v5749, 4
        %v5752 = vshll.u32 %v5693, 16
        %v5754 = vrot.slane %v5752, 5
        %v5755 = vsel %vm422, %v5750, %v5754
        %v5757 = vshrl.u32 %v5664, 16
        %v5759 = vrot.slane %v5757, 4
        %v5760 = vshll.u32 %v5664, 16
        %v5762 = vrot.slane %v5760, 5
        %v5763 = vor.u32 %v5759, %v5762
        %v5764 = vrot.slane %v5763, 4
        %v5766 = vshll.u32 %v5665, 16
        %v5768 = vrot.slane %v5766, 5
        %v5769 = vsel %vm422, %v5764, %v5768
        %v5770 = vshrl.u32 %v5665, 16
        %v5772 = vrot.slane %v5770, 4
        %v5773 = vor.u32 %v5772, %v5768
        %v5774 = vrot.slane %v5773, 4
        %v5776 = vshll.u32 %v5694, 16
        %v5778 = vrot.slane %v5776, 5
        %v5779 = vsel %vm422, %v5774, %v5778
        %v5781 = vshrl.u32 %v5666, 16
        %v5783 = vrot.slane %v5781, 4
        %v5784 = vshll.u32 %v5666, 16
        %v5786 = vrot.slane %v5784, 5
        %v5787 = vor.u32 %v5783, %v5786
        %v5788 = vrot.slane %v5787, 4
        %v5790 = vshll.u32 %v5667, 16
        %v5792 = vrot.slane %v5790, 5
        %v5793 = vsel %vm422, %v5788, %v5792
        %v5794 = vshrl.u32 %v5667, 16
        %v5796 = vrot.slane %v5794, 4
        %v5797 = vor.u32 %v5796, %v5792
        %v5798 = vrot.slane %v5797, 4
        %v5800 = vshll.u32 %v5695, 16
        %v5802 = vrot.slane %v5800, 5
        %v5803 = vsel %vm422, %v5798, %v5802
        %v5805 = vshrl.u32 %v5668, 16
        %v5807 = vrot.slane %v5805, 4
        %v5808 = vshll.u32 %v5668, 16
        %v5810 = vrot.slane %v5808, 5
        %v5811 = vor.u32 %v5807, %v5810
        %v5812 = vrot.slane %v5811, 4
        %v5814 = vshll.u32 %v5669, 16
        %v5816 = vrot.slane %v5814, 5
        %v5817 = vsel %vm422, %v5812, %v5816
        %v5818 = vshrl.u32 %v5669, 16
        %v5820 = vrot.slane %v5818, 4
        %v5821 = vor.u32 %v5820, %v5816
        %v5822 = vrot.slane %v5821, 4
        %v5824 = vshll.u32 %v5696, 16
        %v5826 = vrot.slane %v5824, 5
        %v5827 = vsel %vm422, %v5822, %v5826
        %v5829 = vshrl.u32 %v5670, 16
        %v5831 = vrot.slane %v5829, 4
        %v5832 = vshll.u32 %v5670, 16
        %v5834 = vrot.slane %v5832, 5
        %v5835 = vor.u32 %v5831, %v5834
        %v5836 = vrot.slane %v5835, 4
        %v5838 = vshll.u32 %v5671, 16
        %v5840 = vrot.slane %v5838, 5
        %v5841 = vsel %vm422, %v5836, %v5840
        %v5842 = vshrl.u32 %v5671, 16
        %v5844 = vrot.slane %v5842, 4
        %v5845 = vor.u32 %v5844, %v5840
        %v5846 = vrot.slane %v5845, 4
        %v5848 = vshll.u32 %v5697, 16
        %v5850 = vrot.slane %v5848, 5
        %v5851 = vsel %vm422, %v5846, %v5850
        %v5853 = vshrl.u32 %v5672, 16
        %v5855 = vrot.slane %v5853, 4
        %v5856 = vshll.u32 %v5672, 16
        %v5858 = vrot.slane %v5856, 5
        %v5859 = vor.u32 %v5855, %v5858
        %v5860 = vrot.slane %v5859, 4
        %v5862 = vshll.u32 %v5673, 16
        %v5864 = vrot.slane %v5862, 5
        %v5865 = vsel %vm422, %v5860, %v5864
        %v5866 = vshrl.u32 %v5673, 16
        %v5868 = vrot.slane %v5866, 4
        %v5869 = vor.u32 %v5868, %v5864
        %v5870 = vrot.slane %v5869, 4
        %v5872 = vshll.u32 %v5698, 16
        %v5874 = vrot.slane %v5872, 5
        %v5875 = vsel %vm422, %v5870, %v5874
        %v5877 = vshrl.u32 %v5674, 16
        %v5879 = vrot.slane %v5877, 4
        %v5880 = vshll.u32 %v5674, 16
        %v5882 = vrot.slane %v5880, 5
        %v5883 = vor.u32 %v5879, %v5882
        %v5884 = vrot.slane %v5883, 4
        %v5886 = vshll.u32 %v5675, 16
        %v5888 = vrot.slane %v5886, 5
        %v5889 = vsel %vm422, %v5884, %v5888
        %v5890 = vshrl.u32 %v5675, 16
        %v5892 = vrot.slane %v5890, 4
        %v5893 = vor.u32 %v5892, %v5888
        %v5894 = vrot.slane %v5893, 4
        %v5896 = vshll.u32 %v5699, 16
        %v5898 = vrot.slane %v5896, 5
        %v5899 = vsel %vm422, %v5894, %v5898
        %v5901 = vshrl.u32 %v5676, 16
        %v5903 = vrot.slane %v5901, 4
        %v5904 = vshll.u32 %v5676, 16
        %v5906 = vrot.slane %v5904, 5
        %v5907 = vor.u32 %v5903, %v5906
        %v5908 = vrot.slane %v5907, 4
        %v5910 = vshll.u32 %v5677, 16
        %v5912 = vrot.slane %v5910, 5
        %v5913 = vsel %vm422, %v5908, %v5912
        %v5914 = vshrl.u32 %v5677, 16
        %v5916 = vrot.slane %v5914, 4
        %v5917 = vor.u32 %v5916, %v5912
        %v5918 = vrot.slane %v5917, 4
        %v5920 = vshll.u32 %v5700, 16
        %v5922 = vrot.slane %v5920, 5
        %v5923 = vsel %vm422, %v5918, %v5922
        %v5925 = vshrl.u32 %v5678, 16
        %v5927 = vrot.slane %v5925, 4
        %v5928 = vshll.u32 %v5678, 16
        %v5930 = vrot.slane %v5928, 5
        %v5931 = vor.u32 %v5927, %v5930
        %v5932 = vrot.slane %v5931, 4
        %v5934 = vshll.u32 %v5679, 16
        %v5936 = vrot.slane %v5934, 5
        %v5937 = vsel %vm422, %v5932, %v5936
        %v5938 = vshrl.u32 %v5679, 16
        %v5940 = vrot.slane %v5938, 4
        %v5941 = vor.u32 %v5940, %v5936
        %v5942 = vrot.slane %v5941, 4
        %v5944 = vshll.u32 %v5701, 16
        %v5946 = vrot.slane %v5944, 5
        %v5947 = vsel %vm422, %v5942, %v5946
        %v5949 = vshrl.u32 %v5680, 16
        %v5951 = vrot.slane %v5949, 4
        %v5952 = vshll.u32 %v5680, 16
        %v5954 = vrot.slane %v5952, 5
        %v5955 = vor.u32 %v5951, %v5954
        %v5956 = vrot.slane %v5955, 4
        %v5958 = vshll.u32 %v5681, 16
        %v5960 = vrot.slane %v5958, 5
        %v5961 = vsel %vm422, %v5956, %v5960
        %v5962 = vshrl.u32 %v5681, 16
        %v5964 = vrot.slane %v5962, 4
        %v5965 = vor.u32 %v5964, %v5960
        %v5966 = vrot.slane %v5965, 4
        %v5968 = vshll.u32 %v5702, 16
        %v5970 = vrot.slane %v5968, 5
        %v5971 = vsel %vm422, %v5966, %v5970
        %v5973 = vshrl.u32 %v5682, 16
        %v5975 = vrot.slane %v5973, 4
        %v5976 = vshll.u32 %v5682, 16
        %v5978 = vrot.slane %v5976, 5
        %v5979 = vor.u32 %v5975, %v5978
        %v5980 = vrot.slane %v5979, 4
        %v5982 = vshll.u32 %v5683, 16
        %v5984 = vrot.slane %v5982, 5
        %v5985 = vsel %vm422, %v5980, %v5984
        %v5986 = vshrl.u32 %v5683, 16
        %v5988 = vrot.slane %v5986, 4
        %v5989 = vor.u32 %v5988, %v5984
        %v5990 = vrot.slane %v5989, 4
        %v5992 = vshll.u32 %v5703, 16
        %v5994 = vrot.slane %v5992, 5
        %v5995 = vsel %vm422, %v5990, %v5994
        %v5997 = vshrl.u32 %v5684, 16
        %v5999 = vrot.slane %v5997, 4
        %v6000 = vshll.u32 %v5684, 16
        %v6002 = vrot.slane %v6000, 5
        %v6003 = vor.u32 %v5999, %v6002
        %v6004 = vrot.slane %v6003, 4
        %v6006 = vshll.u32 %v5685, 16
        %v6008 = vrot.slane %v6006, 5
        %v6009 = vsel %vm422, %v6004, %v6008
        %v6010 = vshrl.u32 %v5685, 16
        %v6012 = vrot.slane %v6010, 4
        %v6013 = vor.u32 %v6012, %v6008
        %v6014 = vrot.slane %v6013, 4
        %v6016 = vshll.u32 %v5704, 16
        %v6018 = vrot.slane %v6016, 5
        %v6019 = vsel %vm422, %v6014, %v6018
        %v6021 = vshrl.u32 %v5686, 16
        %v6023 = vrot.slane %v6021, 4
        %v6024 = vshll.u32 %v5686, 16
        %v6026 = vrot.slane %v6024, 5
        %v6027 = vor.u32 %v6023, %v6026
        %v6028 = vrot.slane %v6027, 4
        %v6030 = vshll.u32 %v5687, 16
        %v6032 = vrot.slane %v6030, 5
        %v6033 = vsel %vm422, %v6028, %v6032
        %v6034 = vshrl.u32 %v5687, 16
        %v6036 = vrot.slane %v6034, 4
        %v6037 = vor.u32 %v6036, %v6032
        %v6038 = vrot.slane %v6037, 4
        %v6040 = vshll.u32 %v5705, 16
        %v6042 = vrot.slane %v6040, 5
        %v6043 = vsel %vm422, %v6038, %v6042
        %v6045 = vshrl.u32 %v5688, 16
        %v6047 = vrot.slane %v6045, 4
        %v6048 = vshll.u32 %v5688, 16
        %v6050 = vrot.slane %v6048, 5
        %v6051 = vor.u32 %v6047, %v6050
        %v6052 = vrot.slane %v6051, 4
        %v6054 = vshll.u32 %v5689, 16
        %v6056 = vrot.slane %v6054, 5
        %v6057 = vsel %vm422, %v6052, %v6056
        %v6058 = vshrl.u32 %v5689, 16
        %v6060 = vrot.slane %v6058, 4
        %v6061 = vor.u32 %v6060, %v6056
        %v6062 = vrot.slane %v6061, 4
        %v6064 = vshll.u32 %v5706, 16
        %v6066 = vrot.slane %v6064, 5
        %v6067 = vsel %vm422, %v6062, %v6066
        %v6069 = vshrl.u32 %v5690, 16
        %v6071 = vrot.slane %v6069, 4
        %v6072 = vshll.u32 %v5690, 16
        %v6074 = vrot.slane %v6072, 5
        %v6075 = vor.u32 %v6071, %v6074
        %v6076 = vrot.slane %v6075, 4
        %v6078 = vshll.u32 %v5691, 16
        %v6080 = vrot.slane %v6078, 5
        %v6081 = vsel %vm422, %v6076, %v6080
        %v6082 = vshrl.u32 %v5691, 16
        %v6084 = vrot.slane %v6082, 4
        %v6085 = vor.u32 %v6084, %v6080
        %v6086 = vrot.slane %v6085, 4
        %v6088 = vshll.u32 %v5707, 16
        %v6090 = vrot.slane %v6088, 5
        %v6091 = vsel %vm422, %v6086, %v6090
        %v6092 = vld [vmem:[%s5659] sm:$0xe]
        %v6093 = vld [vmem:[%s5659 + $0xc] sm:$0xe]
        %v6094 = vld [vmem:[%s5659 + $0x18] sm:$0xe]
        %v6095 = vld [vmem:[%s5659 + $0x24] sm:$0xe]
        %v6096 = vld [vmem:[%s5659 + $0x30] sm:$0xe]
        %v6097 = vld [vmem:[%s5659 + $0x3c] sm:$0xe]
        %v6098 = vld [vmem:[%s5659 + $0x48] sm:$0xe]
        %v6099 = vld [vmem:[%s5659 + $0x54] sm:$0xe]
        %v6100 = vld [vmem:[%s5659 + $0x60] sm:$0xe]
        %v6101 = vld [vmem:[%s5659 + $0x6c] sm:$0xe]
        %v6102 = vld [vmem:[%s5659 + $0x78] sm:$0xe]
        %v6103 = vld [vmem:[%s5659 + $0x84] sm:$0xe]
        %v6104 = vld [vmem:[%s5659 + $0x90] sm:$0xe]
        %v6105 = vld [vmem:[%s5659 + $0x9c] sm:$0xe]
        %v6106 = vld [vmem:[%s5659 + $0xa8] sm:$0xe]
        %v6107 = vld [vmem:[%s5659 + $0xb4] sm:$0xe]
        %v6156 = vrot.slane %v6092, 5
        %v6157 = vrot.slane %v6156, 4
        %v6158 = vrot.slane %v5661, 5
        %v6159 = vsel %vm873, %v6157, %v6158
        %v6160 = vrot.slane %v6158, 4
        %v6161 = vrot.slane %v5692, 5
        %v6162 = vsel %vm873, %v6160, %v6161
        %v6163 = vrot.slane %v6093, 5
        %v6164 = vrot.slane %v6163, 4
        %v6165 = vrot.slane %v5663, 5
        %v6166 = vsel %vm873, %v6164, %v6165
        %v6167 = vrot.slane %v6165, 4
        %v6168 = vrot.slane %v5693, 5
        %v6169 = vsel %vm873, %v6167, %v6168
        %v6170 = vrot.slane %v6094, 5
        %v6171 = vrot.slane %v6170, 4
        %v6172 = vrot.slane %v5665, 5
        %v6173 = vsel %vm873, %v6171, %v6172
        %v6174 = vrot.slane %v6172, 4
        %v6175 = vrot.slane %v5694, 5
        %v6176 = vsel %vm873, %v6174, %v6175
        %v6177 = vrot.slane %v6095, 5
        %v6178 = vrot.slane %v6177, 4
        %v6179 = vrot.slane %v5667, 5
        %v6180 = vsel %vm873, %v6178, %v6179
        %v6181 = vrot.slane %v6179, 4
        %v6182 = vrot.slane %v5695, 5
        %v6183 = vsel %vm873, %v6181, %v6182
        %v6184 = vrot.slane %v6096, 5
        %v6185 = vrot.slane %v6184, 4
        %v6186 = vrot.slane %v5669, 5
        %v6187 = vsel %vm873, %v6185, %v6186
        %v6188 = vrot.slane %v6186, 4
        %v6189 = vrot.slane %v5696, 5
        %v6190 = vsel %vm873, %v6188, %v6189
        %v6191 = vrot.slane %v6097, 5
        %v6192 = vrot.slane %v6191, 4
        %v6193 = vrot.slane %v5671, 5
        %v6194 = vsel %vm873, %v6192, %v6193
        %v6195 = vrot.slane %v6193, 4
        %v6196 = vrot.slane %v5697, 5
        %v6197 = vsel %vm873, %v6195, %v6196
        %v6198 = vrot.slane %v6098, 5
        %v6199 = vrot.slane %v6198, 4
        %v6200 = vrot.slane %v5673, 5
        %v6201 = vsel %vm873, %v6199, %v6200
        %v6202 = vrot.slane %v6200, 4
        %v6203 = vrot.slane %v5698, 5
        %v6204 = vsel %vm873, %v6202, %v6203
        %v6205 = vrot.slane %v6099, 5
        %v6206 = vrot.slane %v6205, 4
        %v6207 = vrot.slane %v5675, 5
        %v6208 = vsel %vm873, %v6206, %v6207
        %v6209 = vrot.slane %v6207, 4
        %v6210 = vrot.slane %v5699, 5
        %v6211 = vsel %vm873, %v6209, %v6210
        %v6212 = vrot.slane %v6100, 5
        %v6213 = vrot.slane %v6212, 4
        %v6214 = vrot.slane %v5677, 5
        %v6215 = vsel %vm873, %v6213, %v6214
        %v6216 = vrot.slane %v6214, 4
        %v6217 = vrot.slane %v5700, 5
        %v6218 = vsel %vm873, %v6216, %v6217
        %v6219 = vrot.slane %v6101, 5
        %v6220 = vrot.slane %v6219, 4
        %v6221 = vrot.slane %v5679, 5
        %v6222 = vsel %vm873, %v6220, %v6221
        %v6223 = vrot.slane %v6221, 4
        %v6224 = vrot.slane %v5701, 5
        %v6225 = vsel %vm873, %v6223, %v6224
        %v6226 = vrot.slane %v6102, 5
        %v6227 = vrot.slane %v6226, 4
        %v6228 = vrot.slane %v5681, 5
        %v6229 = vsel %vm873, %v6227, %v6228
        %v6230 = vrot.slane %v6228, 4
        %v6231 = vrot.slane %v5702, 5
        %v6232 = vsel %vm873, %v6230, %v6231
        %v6233 = vrot.slane %v6103, 5
        %v6234 = vrot.slane %v6233, 4
        %v6235 = vrot.slane %v5683, 5
        %v6236 = vsel %vm873, %v6234, %v6235
        %v6237 = vrot.slane %v6235, 4
        %v6238 = vrot.slane %v5703, 5
        %v6239 = vsel %vm873, %v6237, %v6238
        %v6240 = vrot.slane %v6104, 5
        %v6241 = vrot.slane %v6240, 4
        %v6242 = vrot.slane %v5685, 5
        %v6243 = vsel %vm873, %v6241, %v6242
        %v6244 = vrot.slane %v6242, 4
        %v6245 = vrot.slane %v5704, 5
        %v6246 = vsel %vm873, %v6244, %v6245
        %v6247 = vrot.slane %v6105, 5
        %v6248 = vrot.slane %v6247, 4
        %v6249 = vrot.slane %v5687, 5
        %v6250 = vsel %vm873, %v6248, %v6249
        %v6251 = vrot.slane %v6249, 4
        %v6252 = vrot.slane %v5705, 5
        %v6253 = vsel %vm873, %v6251, %v6252
        %v6254 = vrot.slane %v6106, 5
        %v6255 = vrot.slane %v6254, 4
        %v6256 = vrot.slane %v5689, 5
        %v6257 = vsel %vm873, %v6255, %v6256
        %v6258 = vrot.slane %v6256, 4
        %v6259 = vrot.slane %v5706, 5
        %v6260 = vsel %vm873, %v6258, %v6259
        %v6261 = vrot.slane %v6107, 5
        %v6262 = vrot.slane %v6261, 4
        %v6263 = vrot.slane %v5691, 5
        %v6264 = vsel %vm873, %v6262, %v6263
        %v6265 = vrot.slane %v6263, 4
        %v6266 = vrot.slane %v5707, 5
        %v6267 = vsel %vm873, %v6265, %v6266
        %v6284 = vunpack.c.l.b16 %v4443
        %v6285 = vunpack.c.l.b16 %v4444
        %v6286 = vunpack.c.l.b16 %v4445
        %v6287 = vunpack.c.l.b16 %v4446
        %v6288 = vunpack.c.l.b16 %v4447
        %v6289 = vunpack.c.l.b16 %v4448
        %v6290 = vunpack.c.l.b16 %v4449
        %v6291 = vunpack.c.l.b16 %v4450
        %v6292 = vunpack.c.l.b16 %v4451
        %v6293 = vunpack.c.l.b16 %v4452
        %v6294 = vunpack.c.l.b16 %v4453
        %v6295 = vunpack.c.l.b16 %v4454
        %v6296 = vunpack.c.l.b16 %v4455
        %v6297 = vunpack.c.l.b16 %v4456
        %v6298 = vunpack.c.l.b16 %v4457
        %v6299 = vunpack.c.l.b16 %v4458
        %v6300 = vunpack.c.l.b16 %v4459
        %v6301 = vunpack.c.l.b16 %v4460
        %v6302 = vunpack.c.l.b16 %v4461
        %v6303 = vunpack.c.l.b16 %v4462
        %v6304 = vunpack.c.l.b16 %v4463
        %v6305 = vunpack.c.l.b16 %v4464
        %v6306 = vunpack.c.l.b16 %v4465
        %v6307 = vunpack.c.l.b16 %v4466
        %v6308 = vunpack.c.l.b16 %v4467
        %v6309 = vunpack.c.l.b16 %v4468
        %v6310 = vunpack.c.l.b16 %v4469
        %v6311 = vunpack.c.l.b16 %v4470
        %v6312 = vunpack.c.l.b16 %v4471
        %v6313 = vunpack.c.l.b16 %v4472
        %v6314 = vunpack.c.l.b16 %v4473
        %v6315 = vunpack.c.l.b16 %v4474
        %v6316 = vpack.c.b16 %v6285, %v6284
        %v6317 = vpack.c.b16 %v6287, %v6286
        %v6318 = vpack.c.b16 %v6289, %v6288
        %v6319 = vpack.c.b16 %v6291, %v6290
        %v6320 = vpack.c.b16 %v6293, %v6292
        %v6321 = vpack.c.b16 %v6295, %v6294
        %v6322 = vpack.c.b16 %v6297, %v6296
        %v6323 = vpack.c.b16 %v6299, %v6298
        %v6324 = vpack.c.b16 %v6301, %v6300
        %v6325 = vpack.c.b16 %v6303, %v6302
        %v6326 = vpack.c.b16 %v6305, %v6304
        %v6327 = vpack.c.b16 %v6307, %v6306
        %v6328 = vpack.c.b16 %v6309, %v6308
        %v6329 = vpack.c.b16 %v6311, %v6310
        %v6330 = vpack.c.b16 %v6313, %v6312
        %v6331 = vpack.c.b16 %v6315, %v6314
        %v6332 = vunpack.c.l.b16 %v4504
        %v6333 = vunpack.c.l.b16 %v4514
        %v6334 = vunpack.c.l.b16 %v4528
        %v6335 = vunpack.c.l.b16 %v4538
        %v6336 = vunpack.c.l.b16 %v4552
        %v6337 = vunpack.c.l.b16 %v4562
        %v6338 = vunpack.c.l.b16 %v4576
        %v6339 = vunpack.c.l.b16 %v4586
        %v6340 = vunpack.c.l.b16 %v4600
        %v6341 = vunpack.c.l.b16 %v4610
        %v6342 = vunpack.c.l.b16 %v4624
        %v6343 = vunpack.c.l.b16 %v4634
        %v6344 = vunpack.c.l.b16 %v4648
        %v6345 = vunpack.c.l.b16 %v4658
        %v6346 = vunpack.c.l.b16 %v4672
        %v6347 = vunpack.c.l.b16 %v4682
        %v6348 = vunpack.c.l.b16 %v4696
        %v6349 = vunpack.c.l.b16 %v4706
        %v6350 = vunpack.c.l.b16 %v4720
        %v6351 = vunpack.c.l.b16 %v4730
        %v6352 = vunpack.c.l.b16 %v4744
        %v6353 = vunpack.c.l.b16 %v4754
        %v6354 = vunpack.c.l.b16 %v4768
        %v6355 = vunpack.c.l.b16 %v4778
        %v6356 = vunpack.c.l.b16 %v4792
        %v6357 = vunpack.c.l.b16 %v4802
        %v6358 = vunpack.c.l.b16 %v4816
        %v6359 = vunpack.c.l.b16 %v4826
        %v6360 = vunpack.c.l.b16 %v4840
        %v6361 = vunpack.c.l.b16 %v4850
        %v6362 = vunpack.c.l.b16 %v4864
        %v6363 = vunpack.c.l.b16 %v4874
        %v6364 = vpack.c.b16 %v6333, %v6332
        %v6365 = vpack.c.b16 %v6335, %v6334
        %v6366 = vpack.c.b16 %v6337, %v6336
        %v6367 = vpack.c.b16 %v6339, %v6338
        %v6368 = vpack.c.b16 %v6341, %v6340
        %v6369 = vpack.c.b16 %v6343, %v6342
        %v6370 = vpack.c.b16 %v6345, %v6344
        %v6371 = vpack.c.b16 %v6347, %v6346
        %v6372 = vpack.c.b16 %v6349, %v6348
        %v6373 = vpack.c.b16 %v6351, %v6350
        %v6374 = vpack.c.b16 %v6353, %v6352
        %v6375 = vpack.c.b16 %v6355, %v6354
        %v6376 = vpack.c.b16 %v6357, %v6356
        %v6377 = vpack.c.b16 %v6359, %v6358
        %v6378 = vpack.c.b16 %v6361, %v6360
        %v6379 = vpack.c.b16 %v6363, %v6362
        %6380 = vrot.lane.b32.xlu0 %v6364, 8
        %v6381 = vpop.permute.xlu0 %6380
        %6382 = vrot.lane.b32.xlu0 %v6365, 8
        %v6383 = vpop.permute.xlu0 %6382
        %6384 = vrot.lane.b32.xlu0 %v6366, 8
        %v6385 = vpop.permute.xlu0 %6384
        %6386 = vrot.lane.b32.xlu0 %v6367, 8
        %v6387 = vpop.permute.xlu0 %6386
        %6388 = vrot.lane.b32.xlu0 %v6368, 8
        %v6389 = vpop.permute.xlu0 %6388
        %6390 = vrot.lane.b32.xlu0 %v6369, 8
        %v6391 = vpop.permute.xlu0 %6390
        %6392 = vrot.lane.b32.xlu0 %v6370, 8
        %v6393 = vpop.permute.xlu0 %6392
        %6394 = vrot.lane.b32.xlu0 %v6371, 8
        %v6395 = vpop.permute.xlu0 %6394
        %6396 = vrot.lane.b32.xlu0 %v6372, 8
        %v6397 = vpop.permute.xlu0 %6396
        %6398 = vrot.lane.b32.xlu0 %v6373, 8
        %v6399 = vpop.permute.xlu0 %6398
        %6400 = vrot.lane.b32.xlu0 %v6374, 8
        %v6401 = vpop.permute.xlu0 %6400
        %6402 = vrot.lane.b32.xlu0 %v6375, 8
        %v6403 = vpop.permute.xlu0 %6402
        %6404 = vrot.lane.b32.xlu0 %v6376, 8
        %v6405 = vpop.permute.xlu0 %6404
        %6406 = vrot.lane.b32.xlu0 %v6377, 8
        %v6407 = vpop.permute.xlu0 %6406
        %6408 = vrot.lane.b32.xlu0 %v6378, 8
        %v6409 = vpop.permute.xlu0 %6408
        %6410 = vrot.lane.b32.xlu0 %v6379, 8
        %v6411 = vpop.permute.xlu0 %6410
        %v6412 = vunpack.c.l.b16 %v4942
        %v6413 = vunpack.c.l.b16 %v4945
        %v6414 = vunpack.c.l.b16 %v4949
        %v6415 = vunpack.c.l.b16 %v4952
        %v6416 = vunpack.c.l.b16 %v4956
        %v6417 = vunpack.c.l.b16 %v4959
        %v6418 = vunpack.c.l.b16 %v4963
        %v6419 = vunpack.c.l.b16 %v4966
        %v6420 = vunpack.c.l.b16 %v4970
        %v6421 = vunpack.c.l.b16 %v4973
        %v6422 = vunpack.c.l.b16 %v4977
        %v6423 = vunpack.c.l.b16 %v4980
        %v6424 = vunpack.c.l.b16 %v4984
        %v6425 = vunpack.c.l.b16 %v4987
        %v6426 = vunpack.c.l.b16 %v4991
        %v6427 = vunpack.c.l.b16 %v4994
        %v6428 = vunpack.c.l.b16 %v4998
        %v6429 = vunpack.c.l.b16 %v5001
        %v6430 = vunpack.c.l.b16 %v5005
        %v6431 = vunpack.c.l.b16 %v5008
        %v6432 = vunpack.c.l.b16 %v5012
        %v6433 = vunpack.c.l.b16 %v5015
        %v6434 = vunpack.c.l.b16 %v5019
        %v6435 = vunpack.c.l.b16 %v5022
        %v6436 = vunpack.c.l.b16 %v5026
        %v6437 = vunpack.c.l.b16 %v5029
        %v6438 = vunpack.c.l.b16 %v5033
        %v6439 = vunpack.c.l.b16 %v5036
        %v6440 = vunpack.c.l.b16 %v5040
        %v6441 = vunpack.c.l.b16 %v5043
        %v6442 = vunpack.c.l.b16 %v5047
        %v6443 = vunpack.c.l.b16 %v5050
        %v6444 = vpack.c.b16 %v6413, %v6412
        %v6445 = vpack.c.b16 %v6415, %v6414
        %v6446 = vpack.c.b16 %v6417, %v6416
        %v6447 = vpack.c.b16 %v6419, %v6418
        %v6448 = vpack.c.b16 %v6421, %v6420
        %v6449 = vpack.c.b16 %v6423, %v6422
        %v6450 = vpack.c.b16 %v6425, %v6424
        %v6451 = vpack.c.b16 %v6427, %v6426
        %v6452 = vpack.c.b16 %v6429, %v6428
        %v6453 = vpack.c.b16 %v6431, %v6430
        %v6454 = vpack.c.b16 %v6433, %v6432
        %v6455 = vpack.c.b16 %v6435, %v6434
        %v6456 = vpack.c.b16 %v6437, %v6436
        %v6457 = vpack.c.b16 %v6439, %v6438
        %v6458 = vpack.c.b16 %v6441, %v6440
        %v6459 = vpack.c.b16 %v6443, %v6442
        %6460 = vrot.lane.b32.xlu0 %v6444, 16
        %v6461 = vpop.permute.xlu0 %6460
        %6462 = vrot.lane.b32.xlu0 %v6445, 16
        %v6463 = vpop.permute.xlu0 %6462
        %6464 = vrot.lane.b32.xlu0 %v6446, 16
        %v6465 = vpop.permute.xlu0 %6464
        %6466 = vrot.lane.b32.xlu0 %v6447, 16
        %v6467 = vpop.permute.xlu0 %6466
        %6468 = vrot.lane.b32.xlu0 %v6448, 16
        %v6469 = vpop.permute.xlu0 %6468
        %6470 = vrot.lane.b32.xlu0 %v6449, 16
        %v6471 = vpop.permute.xlu0 %6470
        %6472 = vrot.lane.b32.xlu0 %v6450, 16
        %v6473 = vpop.permute.xlu0 %6472
        %6474 = vrot.lane.b32.xlu0 %v6451, 16
        %v6475 = vpop.permute.xlu0 %6474
        %6476 = vrot.lane.b32.xlu0 %v6452, 16
        %v6477 = vpop.permute.xlu0 %6476
        %6478 = vrot.lane.b32.xlu0 %v6453, 16
        %v6479 = vpop.permute.xlu0 %6478
        %6480 = vrot.lane.b32.xlu0 %v6454, 16
        %v6481 = vpop.permute.xlu0 %6480
        %6482 = vrot.lane.b32.xlu0 %v6455, 16
        %v6483 = vpop.permute.xlu0 %6482
        %6484 = vrot.lane.b32.xlu0 %v6456, 16
        %v6485 = vpop.permute.xlu0 %6484
        %6486 = vrot.lane.b32.xlu0 %v6457, 16
        %v6487 = vpop.permute.xlu0 %6486
        %6488 = vrot.lane.b32.xlu0 %v6458, 16
        %v6489 = vpop.permute.xlu0 %6488
        %6490 = vrot.lane.b32.xlu0 %v6459, 16
        %v6491 = vpop.permute.xlu0 %6490
        %v6508 = vunpack.c.l.b16 %v5051
        %v6509 = vunpack.c.l.b16 %v5052
        %v6510 = vunpack.c.l.b16 %v5053
        %v6511 = vunpack.c.l.b16 %v5054
        %v6512 = vunpack.c.l.b16 %v5055
        %v6513 = vunpack.c.l.b16 %v5056
        %v6514 = vunpack.c.l.b16 %v5057
        %v6515 = vunpack.c.l.b16 %v5058
        %v6516 = vunpack.c.l.b16 %v5059
        %v6517 = vunpack.c.l.b16 %v5060
        %v6518 = vunpack.c.l.b16 %v5061
        %v6519 = vunpack.c.l.b16 %v5062
        %v6520 = vunpack.c.l.b16 %v5063
        %v6521 = vunpack.c.l.b16 %v5064
        %v6522 = vunpack.c.l.b16 %v5065
        %v6523 = vunpack.c.l.b16 %v5066
        %v6524 = vunpack.c.l.b16 %v5067
        %v6525 = vunpack.c.l.b16 %v5068
        %v6526 = vunpack.c.l.b16 %v5069
        %v6527 = vunpack.c.l.b16 %v5070
        %v6528 = vunpack.c.l.b16 %v5071
        %v6529 = vunpack.c.l.b16 %v5072
        %v6530 = vunpack.c.l.b16 %v5073
        %v6531 = vunpack.c.l.b16 %v5074
        %v6532 = vunpack.c.l.b16 %v5075
        %v6533 = vunpack.c.l.b16 %v5076
        %v6534 = vunpack.c.l.b16 %v5077
        %v6535 = vunpack.c.l.b16 %v5078
        %v6536 = vunpack.c.l.b16 %v5079
        %v6537 = vunpack.c.l.b16 %v5080
        %v6538 = vunpack.c.l.b16 %v5081
        %v6539 = vunpack.c.l.b16 %v5082
        %v6540 = vpack.c.b16 %v6509, %v6508
        %v6541 = vpack.c.b16 %v6511, %v6510
        %v6542 = vpack.c.b16 %v6513, %v6512
        %v6543 = vpack.c.b16 %v6515, %v6514
        %v6544 = vpack.c.b16 %v6517, %v6516
        %v6545 = vpack.c.b16 %v6519, %v6518
        %v6546 = vpack.c.b16 %v6521, %v6520
        %v6547 = vpack.c.b16 %v6523, %v6522
        %v6548 = vpack.c.b16 %v6525, %v6524
        %v6549 = vpack.c.b16 %v6527, %v6526
        %v6550 = vpack.c.b16 %v6529, %v6528
        %v6551 = vpack.c.b16 %v6531, %v6530
        %v6552 = vpack.c.b16 %v6533, %v6532
        %v6553 = vpack.c.b16 %v6535, %v6534
        %v6554 = vpack.c.b16 %v6537, %v6536
        %v6555 = vpack.c.b16 %v6539, %v6538
        %6556 = vrot.lane.b32.xlu0 %v6540, 24
        %v6557 = vpop.permute.xlu0 %6556
        %6558 = vrot.lane.b32.xlu0 %v6541, 24
        %v6559 = vpop.permute.xlu0 %6558
        %6560 = vrot.lane.b32.xlu0 %v6542, 24
        %v6561 = vpop.permute.xlu0 %6560
        %6562 = vrot.lane.b32.xlu0 %v6543, 24
        %v6563 = vpop.permute.xlu0 %6562
        %6564 = vrot.lane.b32.xlu0 %v6544, 24
        %v6565 = vpop.permute.xlu0 %6564
        %6566 = vrot.lane.b32.xlu0 %v6545, 24
        %v6567 = vpop.permute.xlu0 %6566
        %6568 = vrot.lane.b32.xlu0 %v6546, 24
        %v6569 = vpop.permute.xlu0 %6568
        %6570 = vrot.lane.b32.xlu0 %v6547, 24
        %v6571 = vpop.permute.xlu0 %6570
        %6572 = vrot.lane.b32.xlu0 %v6548, 24
        %v6573 = vpop.permute.xlu0 %6572
        %6574 = vrot.lane.b32.xlu0 %v6549, 24
        %v6575 = vpop.permute.xlu0 %6574
        %6576 = vrot.lane.b32.xlu0 %v6550, 24
        %v6577 = vpop.permute.xlu0 %6576
        %6578 = vrot.lane.b32.xlu0 %v6551, 24
        %v6579 = vpop.permute.xlu0 %6578
        %6580 = vrot.lane.b32.xlu0 %v6552, 24
        %v6581 = vpop.permute.xlu0 %6580
        %6582 = vrot.lane.b32.xlu0 %v6553, 24
        %v6583 = vpop.permute.xlu0 %6582
        %6584 = vrot.lane.b32.xlu0 %v6554, 24
        %v6585 = vpop.permute.xlu0 %6584
        %6586 = vrot.lane.b32.xlu0 %v6555, 24
        %v6587 = vpop.permute.xlu0 %6586
        %v6588 = vunpack.c.l.b16 %v5112
        %v6589 = vunpack.c.l.b16 %v5122
        %v6590 = vunpack.c.l.b16 %v5136
        %v6591 = vunpack.c.l.b16 %v5146
        %v6592 = vunpack.c.l.b16 %v5160
        %v6593 = vunpack.c.l.b16 %v5170
        %v6594 = vunpack.c.l.b16 %v5184
        %v6595 = vunpack.c.l.b16 %v5194
        %v6596 = vunpack.c.l.b16 %v5208
        %v6597 = vunpack.c.l.b16 %v5218
        %v6598 = vunpack.c.l.b16 %v5232
        %v6599 = vunpack.c.l.b16 %v5242
        %v6600 = vunpack.c.l.b16 %v5256
        %v6601 = vunpack.c.l.b16 %v5266
        %v6602 = vunpack.c.l.b16 %v5280
        %v6603 = vunpack.c.l.b16 %v5290
        %v6604 = vunpack.c.l.b16 %v5304
        %v6605 = vunpack.c.l.b16 %v5314
        %v6606 = vunpack.c.l.b16 %v5328
        %v6607 = vunpack.c.l.b16 %v5338
        %v6608 = vunpack.c.l.b16 %v5352
        %v6609 = vunpack.c.l.b16 %v5362
        %v6610 = vunpack.c.l.b16 %v5376
        %v6611 = vunpack.c.l.b16 %v5386
        %v6612 = vunpack.c.l.b16 %v5400
        %v6613 = vunpack.c.l.b16 %v5410
        %v6614 = vunpack.c.l.b16 %v5424
        %v6615 = vunpack.c.l.b16 %v5434
        %v6616 = vunpack.c.l.b16 %v5448
        %v6617 = vunpack.c.l.b16 %v5458
        %v6618 = vunpack.c.l.b16 %v5472
        %v6619 = vunpack.c.l.b16 %v5482
        %v6620 = vpack.c.b16 %v6589, %v6588
        %v6621 = vpack.c.b16 %v6591, %v6590
        %v6622 = vpack.c.b16 %v6593, %v6592
        %v6623 = vpack.c.b16 %v6595, %v6594
        %v6624 = vpack.c.b16 %v6597, %v6596
        %v6625 = vpack.c.b16 %v6599, %v6598
        %v6626 = vpack.c.b16 %v6601, %v6600
        %v6627 = vpack.c.b16 %v6603, %v6602
        %v6628 = vpack.c.b16 %v6605, %v6604
        %v6629 = vpack.c.b16 %v6607, %v6606
        %v6630 = vpack.c.b16 %v6609, %v6608
        %v6631 = vpack.c.b16 %v6611, %v6610
        %v6632 = vpack.c.b16 %v6613, %v6612
        %v6633 = vpack.c.b16 %v6615, %v6614
        %v6634 = vpack.c.b16 %v6617, %v6616
        %v6635 = vpack.c.b16 %v6619, %v6618
        %6636 = vrot.lane.b32.xlu0 %v6620, 32
        %v6637 = vpop.permute.xlu0 %6636
        %6638 = vrot.lane.b32.xlu0 %v6621, 32
        %v6639 = vpop.permute.xlu0 %6638
        %6640 = vrot.lane.b32.xlu0 %v6622, 32
        %v6641 = vpop.permute.xlu0 %6640
        %6642 = vrot.lane.b32.xlu0 %v6623, 32
        %v6643 = vpop.permute.xlu0 %6642
        %6644 = vrot.lane.b32.xlu0 %v6624, 32
        %v6645 = vpop.permute.xlu0 %6644
        %6646 = vrot.lane.b32.xlu0 %v6625, 32
        %v6647 = vpop.permute.xlu0 %6646
        %6648 = vrot.lane.b32.xlu0 %v6626, 32
        %v6649 = vpop.permute.xlu0 %6648
        %6650 = vrot.lane.b32.xlu0 %v6627, 32
        %v6651 = vpop.permute.xlu0 %6650
        %6652 = vrot.lane.b32.xlu0 %v6628, 32
        %v6653 = vpop.permute.xlu0 %6652
        %6654 = vrot.lane.b32.xlu0 %v6629, 32
        %v6655 = vpop.permute.xlu0 %6654
        %6656 = vrot.lane.b32.xlu0 %v6630, 32
        %v6657 = vpop.permute.xlu0 %6656
        %6658 = vrot.lane.b32.xlu0 %v6631, 32
        %v6659 = vpop.permute.xlu0 %6658
        %6660 = vrot.lane.b32.xlu0 %v6632, 32
        %v6661 = vpop.permute.xlu0 %6660
        %6662 = vrot.lane.b32.xlu0 %v6633, 32
        %v6663 = vpop.permute.xlu0 %6662
        %6664 = vrot.lane.b32.xlu0 %v6634, 32
        %v6665 = vpop.permute.xlu0 %6664
        %6666 = vrot.lane.b32.xlu0 %v6635, 32
        %v6667 = vpop.permute.xlu0 %6666
        %v6668 = vunpack.c.l.b16 %v5550
        %v6669 = vunpack.c.l.b16 %v5553
        %v6670 = vunpack.c.l.b16 %v5557
        %v6671 = vunpack.c.l.b16 %v5560
        %v6672 = vunpack.c.l.b16 %v5564
        %v6673 = vunpack.c.l.b16 %v5567
        %v6674 = vunpack.c.l.b16 %v5571
        %v6675 = vunpack.c.l.b16 %v5574
        %v6676 = vunpack.c.l.b16 %v5578
        %v6677 = vunpack.c.l.b16 %v5581
        %v6678 = vunpack.c.l.b16 %v5585
        %v6679 = vunpack.c.l.b16 %v5588
        %v6680 = vunpack.c.l.b16 %v5592
        %v6681 = vunpack.c.l.b16 %v5595
        %v6682 = vunpack.c.l.b16 %v5599
        %v6683 = vunpack.c.l.b16 %v5602
        %v6684 = vunpack.c.l.b16 %v5606
        %v6685 = vunpack.c.l.b16 %v5609
        %v6686 = vunpack.c.l.b16 %v5613
        %v6687 = vunpack.c.l.b16 %v5616
        %v6688 = vunpack.c.l.b16 %v5620
        %v6689 = vunpack.c.l.b16 %v5623
        %v6690 = vunpack.c.l.b16 %v5627
        %v6691 = vunpack.c.l.b16 %v5630
        %v6692 = vunpack.c.l.b16 %v5634
        %v6693 = vunpack.c.l.b16 %v5637
        %v6694 = vunpack.c.l.b16 %v5641
        %v6695 = vunpack.c.l.b16 %v5644
        %v6696 = vunpack.c.l.b16 %v5648
        %v6697 = vunpack.c.l.b16 %v5651
        %v6698 = vunpack.c.l.b16 %v5655
        %v6699 = vunpack.c.l.b16 %v5658
        %v6700 = vpack.c.b16 %v6669, %v6668
        %v6701 = vpack.c.b16 %v6671, %v6670
        %v6702 = vpack.c.b16 %v6673, %v6672
        %v6703 = vpack.c.b16 %v6675, %v6674
        %v6704 = vpack.c.b16 %v6677, %v6676
        %v6705 = vpack.c.b16 %v6679, %v6678
        %v6706 = vpack.c.b16 %v6681, %v6680
        %v6707 = vpack.c.b16 %v6683, %v6682
        %v6708 = vpack.c.b16 %v6685, %v6684
        %v6709 = vpack.c.b16 %v6687, %v6686
        %v6710 = vpack.c.b16 %v6689, %v6688
        %v6711 = vpack.c.b16 %v6691, %v6690
        %v6712 = vpack.c.b16 %v6693, %v6692
        %v6713 = vpack.c.b16 %v6695, %v6694
        %v6714 = vpack.c.b16 %v6697, %v6696
        %v6715 = vpack.c.b16 %v6699, %v6698
        %6716 = vrot.lane.b32.xlu0 %v6700, 40
        %v6717 = vpop.permute.xlu0 %6716
        %6718 = vrot.lane.b32.xlu0 %v6701, 40
        %v6719 = vpop.permute.xlu0 %6718
        %6720 = vrot.lane.b32.xlu0 %v6702, 40
        %v6721 = vpop.permute.xlu0 %6720
        %6722 = vrot.lane.b32.xlu0 %v6703, 40
        %v6723 = vpop.permute.xlu0 %6722
        %6724 = vrot.lane.b32.xlu0 %v6704, 40
        %v6725 = vpop.permute.xlu0 %6724
        %6726 = vrot.lane.b32.xlu0 %v6705, 40
        %v6727 = vpop.permute.xlu0 %6726
        %6728 = vrot.lane.b32.xlu0 %v6706, 40
        %v6729 = vpop.permute.xlu0 %6728
        %6730 = vrot.lane.b32.xlu0 %v6707, 40
        %v6731 = vpop.permute.xlu0 %6730
        %6732 = vrot.lane.b32.xlu0 %v6708, 40
        %v6733 = vpop.permute.xlu0 %6732
        %6734 = vrot.lane.b32.xlu0 %v6709, 40
        %v6735 = vpop.permute.xlu0 %6734
        %6736 = vrot.lane.b32.xlu0 %v6710, 40
        %v6737 = vpop.permute.xlu0 %6736
        %6738 = vrot.lane.b32.xlu0 %v6711, 40
        %v6739 = vpop.permute.xlu0 %6738
        %6740 = vrot.lane.b32.xlu0 %v6712, 40
        %v6741 = vpop.permute.xlu0 %6740
        %6742 = vrot.lane.b32.xlu0 %v6713, 40
        %v6743 = vpop.permute.xlu0 %6742
        %6744 = vrot.lane.b32.xlu0 %v6714, 40
        %v6745 = vpop.permute.xlu0 %6744
        %6746 = vrot.lane.b32.xlu0 %v6715, 40
        %v6747 = vpop.permute.xlu0 %6746
        %v6764 = vunpack.c.l.b16 %v5660
        %v6765 = vunpack.c.l.b16 %v5661
        %v6766 = vunpack.c.l.b16 %v5662
        %v6767 = vunpack.c.l.b16 %v5663
        %v6768 = vunpack.c.l.b16 %v5664
        %v6769 = vunpack.c.l.b16 %v5665
        %v6770 = vunpack.c.l.b16 %v5666
        %v6771 = vunpack.c.l.b16 %v5667
        %v6772 = vunpack.c.l.b16 %v5668
        %v6773 = vunpack.c.l.b16 %v5669
        %v6774 = vunpack.c.l.b16 %v5670
        %v6775 = vunpack.c.l.b16 %v5671
        %v6776 = vunpack.c.l.b16 %v5672
        %v6777 = vunpack.c.l.b16 %v5673
        %v6778 = vunpack.c.l.b16 %v5674
        %v6779 = vunpack.c.l.b16 %v5675
        %v6780 = vunpack.c.l.b16 %v5676
        %v6781 = vunpack.c.l.b16 %v5677
        %v6782 = vunpack.c.l.b16 %v5678
        %v6783 = vunpack.c.l.b16 %v5679
        %v6784 = vunpack.c.l.b16 %v5680
        %v6785 = vunpack.c.l.b16 %v5681
        %v6786 = vunpack.c.l.b16 %v5682
        %v6787 = vunpack.c.l.b16 %v5683
        %v6788 = vunpack.c.l.b16 %v5684
        %v6789 = vunpack.c.l.b16 %v5685
        %v6790 = vunpack.c.l.b16 %v5686
        %v6791 = vunpack.c.l.b16 %v5687
        %v6792 = vunpack.c.l.b16 %v5688
        %v6793 = vunpack.c.l.b16 %v5689
        %v6794 = vunpack.c.l.b16 %v5690
        %v6795 = vunpack.c.l.b16 %v5691
        %v6796 = vpack.c.b16 %v6765, %v6764
        %v6797 = vpack.c.b16 %v6767, %v6766
        %v6798 = vpack.c.b16 %v6769, %v6768
        %v6799 = vpack.c.b16 %v6771, %v6770
        %v6800 = vpack.c.b16 %v6773, %v6772
        %v6801 = vpack.c.b16 %v6775, %v6774
        %v6802 = vpack.c.b16 %v6777, %v6776
        %v6803 = vpack.c.b16 %v6779, %v6778
        %v6804 = vpack.c.b16 %v6781, %v6780
        %v6805 = vpack.c.b16 %v6783, %v6782
        %v6806 = vpack.c.b16 %v6785, %v6784
        %v6807 = vpack.c.b16 %v6787, %v6786
        %v6808 = vpack.c.b16 %v6789, %v6788
        %v6809 = vpack.c.b16 %v6791, %v6790
        %v6810 = vpack.c.b16 %v6793, %v6792
        %v6811 = vpack.c.b16 %v6795, %v6794
        %6812 = vrot.lane.b32.xlu0 %v6796, 48
        %v6813 = vpop.permute.xlu0 %6812
        %6814 = vrot.lane.b32.xlu0 %v6797, 48
        %v6815 = vpop.permute.xlu0 %6814
        %6816 = vrot.lane.b32.xlu0 %v6798, 48
        %v6817 = vpop.permute.xlu0 %6816
        %6818 = vrot.lane.b32.xlu0 %v6799, 48
        %v6819 = vpop.permute.xlu0 %6818
        %6820 = vrot.lane.b32.xlu0 %v6800, 48
        %v6821 = vpop.permute.xlu0 %6820
        %6822 = vrot.lane.b32.xlu0 %v6801, 48
        %v6823 = vpop.permute.xlu0 %6822
        %6824 = vrot.lane.b32.xlu0 %v6802, 48
        %v6825 = vpop.permute.xlu0 %6824
        %6826 = vrot.lane.b32.xlu0 %v6803, 48
        %v6827 = vpop.permute.xlu0 %6826
        %6828 = vrot.lane.b32.xlu0 %v6804, 48
        %v6829 = vpop.permute.xlu0 %6828
        %6830 = vrot.lane.b32.xlu0 %v6805, 48
        %v6831 = vpop.permute.xlu0 %6830
        %6832 = vrot.lane.b32.xlu0 %v6806, 48
        %v6833 = vpop.permute.xlu0 %6832
        %6834 = vrot.lane.b32.xlu0 %v6807, 48
        %v6835 = vpop.permute.xlu0 %6834
        %6836 = vrot.lane.b32.xlu0 %v6808, 48
        %v6837 = vpop.permute.xlu0 %6836
        %6838 = vrot.lane.b32.xlu0 %v6809, 48
        %v6839 = vpop.permute.xlu0 %6838
        %6840 = vrot.lane.b32.xlu0 %v6810, 48
        %v6841 = vpop.permute.xlu0 %6840
        %6842 = vrot.lane.b32.xlu0 %v6811, 48
        %v6843 = vpop.permute.xlu0 %6842
        %v6844 = vunpack.c.l.b16 %v5721
        %v6845 = vunpack.c.l.b16 %v5731
        %v6846 = vunpack.c.l.b16 %v5745
        %v6847 = vunpack.c.l.b16 %v5755
        %v6848 = vunpack.c.l.b16 %v5769
        %v6849 = vunpack.c.l.b16 %v5779
        %v6850 = vunpack.c.l.b16 %v5793
        %v6851 = vunpack.c.l.b16 %v5803
        %v6852 = vunpack.c.l.b16 %v5817
        %v6853 = vunpack.c.l.b16 %v5827
        %v6854 = vunpack.c.l.b16 %v5841
        %v6855 = vunpack.c.l.b16 %v5851
        %v6856 = vunpack.c.l.b16 %v5865
        %v6857 = vunpack.c.l.b16 %v5875
        %v6858 = vunpack.c.l.b16 %v5889
        %v6859 = vunpack.c.l.b16 %v5899
        %v6860 = vunpack.c.l.b16 %v5913
        %v6861 = vunpack.c.l.b16 %v5923
        %v6862 = vunpack.c.l.b16 %v5937
        %v6863 = vunpack.c.l.b16 %v5947
        %v6864 = vunpack.c.l.b16 %v5961
        %v6865 = vunpack.c.l.b16 %v5971
        %v6866 = vunpack.c.l.b16 %v5985
        %v6867 = vunpack.c.l.b16 %v5995
        %v6868 = vunpack.c.l.b16 %v6009
        %v6869 = vunpack.c.l.b16 %v6019
        %v6870 = vunpack.c.l.b16 %v6033
        %v6871 = vunpack.c.l.b16 %v6043
        %v6872 = vunpack.c.l.b16 %v6057
        %v6873 = vunpack.c.l.b16 %v6067
        %v6874 = vunpack.c.l.b16 %v6081
        %v6875 = vunpack.c.l.b16 %v6091
        %v6876 = vpack.c.b16 %v6845, %v6844
        %v6877 = vpack.c.b16 %v6847, %v6846
        %v6878 = vpack.c.b16 %v6849, %v6848
        %v6879 = vpack.c.b16 %v6851, %v6850
        %v6880 = vpack.c.b16 %v6853, %v6852
        %v6881 = vpack.c.b16 %v6855, %v6854
        %v6882 = vpack.c.b16 %v6857, %v6856
        %v6883 = vpack.c.b16 %v6859, %v6858
        %v6884 = vpack.c.b16 %v6861, %v6860
        %v6885 = vpack.c.b16 %v6863, %v6862
        %v6886 = vpack.c.b16 %v6865, %v6864
        %v6887 = vpack.c.b16 %v6867, %v6866
        %v6888 = vpack.c.b16 %v6869, %v6868
        %v6889 = vpack.c.b16 %v6871, %v6870
        %v6890 = vpack.c.b16 %v6873, %v6872
        %v6891 = vpack.c.b16 %v6875, %v6874
        %6892 = vrot.lane.b32.xlu0 %v6876, 56
        %v6893 = vpop.permute.xlu0 %6892
        %6894 = vrot.lane.b32.xlu0 %v6877, 56
        %v6895 = vpop.permute.xlu0 %6894
        %6896 = vrot.lane.b32.xlu0 %v6878, 56
        %v6897 = vpop.permute.xlu0 %6896
        %6898 = vrot.lane.b32.xlu0 %v6879, 56
        %v6899 = vpop.permute.xlu0 %6898
        %6900 = vrot.lane.b32.xlu0 %v6880, 56
        %v6901 = vpop.permute.xlu0 %6900
        %6902 = vrot.lane.b32.xlu0 %v6881, 56
        %v6903 = vpop.permute.xlu0 %6902
        %6904 = vrot.lane.b32.xlu0 %v6882, 56
        %v6905 = vpop.permute.xlu0 %6904
        %6906 = vrot.lane.b32.xlu0 %v6883, 56
        %v6907 = vpop.permute.xlu0 %6906
        %6908 = vrot.lane.b32.xlu0 %v6884, 56
        %v6909 = vpop.permute.xlu0 %6908
        %6910 = vrot.lane.b32.xlu0 %v6885, 56
        %v6911 = vpop.permute.xlu0 %6910
        %6912 = vrot.lane.b32.xlu0 %v6886, 56
        %v6913 = vpop.permute.xlu0 %6912
        %6914 = vrot.lane.b32.xlu0 %v6887, 56
        %v6915 = vpop.permute.xlu0 %6914
        %6916 = vrot.lane.b32.xlu0 %v6888, 56
        %v6917 = vpop.permute.xlu0 %6916
        %6918 = vrot.lane.b32.xlu0 %v6889, 56
        %v6919 = vpop.permute.xlu0 %6918
        %6920 = vrot.lane.b32.xlu0 %v6890, 56
        %v6921 = vpop.permute.xlu0 %6920
        %6922 = vrot.lane.b32.xlu0 %v6891, 56
        %v6923 = vpop.permute.xlu0 %6922
        %v6924 = vunpack.c.l.b16 %v6159
        %v6925 = vunpack.c.l.b16 %v6162
        %v6926 = vunpack.c.l.b16 %v6166
        %v6927 = vunpack.c.l.b16 %v6169
        %v6928 = vunpack.c.l.b16 %v6173
        %v6929 = vunpack.c.l.b16 %v6176
        %v6930 = vunpack.c.l.b16 %v6180
        %v6931 = vunpack.c.l.b16 %v6183
        %v6932 = vunpack.c.l.b16 %v6187
        %v6933 = vunpack.c.l.b16 %v6190
        %v6934 = vunpack.c.l.b16 %v6194
        %v6935 = vunpack.c.l.b16 %v6197
        %v6936 = vunpack.c.l.b16 %v6201
        %v6937 = vunpack.c.l.b16 %v6204
        %v6938 = vunpack.c.l.b16 %v6208
        %v6939 = vunpack.c.l.b16 %v6211
        %v6940 = vunpack.c.l.b16 %v6215
        %v6941 = vunpack.c.l.b16 %v6218
        %v6942 = vunpack.c.l.b16 %v6222
        %v6943 = vunpack.c.l.b16 %v6225
        %v6944 = vunpack.c.l.b16 %v6229
        %v6945 = vunpack.c.l.b16 %v6232
        %v6946 = vunpack.c.l.b16 %v6236
        %v6947 = vunpack.c.l.b16 %v6239
        %v6948 = vunpack.c.l.b16 %v6243
        %v6949 = vunpack.c.l.b16 %v6246
        %v6950 = vunpack.c.l.b16 %v6250
        %v6951 = vunpack.c.l.b16 %v6253
        %v6952 = vunpack.c.l.b16 %v6257
        %v6953 = vunpack.c.l.b16 %v6260
        %v6954 = vunpack.c.l.b16 %v6264
        %v6955 = vunpack.c.l.b16 %v6267
        %v6956 = vpack.c.b16 %v6925, %v6924
        %v6957 = vpack.c.b16 %v6927, %v6926
        %v6958 = vpack.c.b16 %v6929, %v6928
        %v6959 = vpack.c.b16 %v6931, %v6930
        %v6960 = vpack.c.b16 %v6933, %v6932
        %v6961 = vpack.c.b16 %v6935, %v6934
        %v6962 = vpack.c.b16 %v6937, %v6936
        %v6963 = vpack.c.b16 %v6939, %v6938
        %v6964 = vpack.c.b16 %v6941, %v6940
        %v6965 = vpack.c.b16 %v6943, %v6942
        %v6966 = vpack.c.b16 %v6945, %v6944
        %v6967 = vpack.c.b16 %v6947, %v6946
        %v6968 = vpack.c.b16 %v6949, %v6948
        %v6969 = vpack.c.b16 %v6951, %v6950
        %v6970 = vpack.c.b16 %v6953, %v6952
        %v6971 = vpack.c.b16 %v6955, %v6954
        %6972 = vrot.lane.b32.xlu0 %v6956, 64
        %v6973 = vpop.permute.xlu0 %6972
        %6974 = vrot.lane.b32.xlu0 %v6957, 64
        %v6975 = vpop.permute.xlu0 %6974
        %6976 = vrot.lane.b32.xlu0 %v6958, 64
        %v6977 = vpop.permute.xlu0 %6976
        %6978 = vrot.lane.b32.xlu0 %v6959, 64
        %v6979 = vpop.permute.xlu0 %6978
        %6980 = vrot.lane.b32.xlu0 %v6960, 64
        %v6981 = vpop.permute.xlu0 %6980
        %6982 = vrot.lane.b32.xlu0 %v6961, 64
        %v6983 = vpop.permute.xlu0 %6982
        %6984 = vrot.lane.b32.xlu0 %v6962, 64
        %v6985 = vpop.permute.xlu0 %6984
        %6986 = vrot.lane.b32.xlu0 %v6963, 64
        %v6987 = vpop.permute.xlu0 %6986
        %6988 = vrot.lane.b32.xlu0 %v6964, 64
        %v6989 = vpop.permute.xlu0 %6988
        %6990 = vrot.lane.b32.xlu0 %v6965, 64
        %v6991 = vpop.permute.xlu0 %6990
        %6992 = vrot.lane.b32.xlu0 %v6966, 64
        %v6993 = vpop.permute.xlu0 %6992
        %6994 = vrot.lane.b32.xlu0 %v6967, 64
        %v6995 = vpop.permute.xlu0 %6994
        %6996 = vrot.lane.b32.xlu0 %v6968, 64
        %v6997 = vpop.permute.xlu0 %6996
        %6998 = vrot.lane.b32.xlu0 %v6969, 64
        %v6999 = vpop.permute.xlu0 %6998
        %7000 = vrot.lane.b32.xlu0 %v6970, 64
        %v7001 = vpop.permute.xlu0 %7000
        %7002 = vrot.lane.b32.xlu0 %v6971, 64
        %v7003 = vpop.permute.xlu0 %7002
        %v7006 = vsel %vm2989, %v6316, %v6381
        %v7009 = vsel %vm2989, %v6317, %v6383
        %v7012 = vsel %vm2989, %v6318, %v6385
        %v7015 = vsel %vm2989, %v6319, %v6387
        %v7018 = vsel %vm2989, %v6320, %v6389
        %v7021 = vsel %vm2989, %v6321, %v6391
        %v7024 = vsel %vm2989, %v6322, %v6393
        %v7027 = vsel %vm2989, %v6323, %v6395
        %v7030 = vsel %vm2989, %v6324, %v6397
        %v7033 = vsel %vm2989, %v6325, %v6399
        %v7036 = vsel %vm2989, %v6326, %v6401
        %v7039 = vsel %vm2989, %v6327, %v6403
        %v7042 = vsel %vm2989, %v6328, %v6405
        %v7045 = vsel %vm2989, %v6329, %v6407
        %v7048 = vsel %vm2989, %v6330, %v6409
        %v7051 = vsel %vm2989, %v6331, %v6411
        %v7053 = vsel %vm3055, %v7006, %v6461
        %v7055 = vsel %vm3055, %v7009, %v6463
        %v7057 = vsel %vm3055, %v7012, %v6465
        %v7059 = vsel %vm3055, %v7015, %v6467
        %v7061 = vsel %vm3055, %v7018, %v6469
        %v7063 = vsel %vm3055, %v7021, %v6471
        %v7065 = vsel %vm3055, %v7024, %v6473
        %v7067 = vsel %vm3055, %v7027, %v6475
        %v7069 = vsel %vm3055, %v7030, %v6477
        %v7071 = vsel %vm3055, %v7033, %v6479
        %v7073 = vsel %vm3055, %v7036, %v6481
        %v7075 = vsel %vm3055, %v7039, %v6483
        %v7077 = vsel %vm3055, %v7042, %v6485
        %v7079 = vsel %vm3055, %v7045, %v6487
        %v7081 = vsel %vm3055, %v7048, %v6489
        %v7083 = vsel %vm3055, %v7051, %v6491
        %v7085 = vsel %vm3121, %v7053, %v6557
        %v7087 = vsel %vm3121, %v7055, %v6559
        %v7089 = vsel %vm3121, %v7057, %v6561
        %v7091 = vsel %vm3121, %v7059, %v6563
        %v7093 = vsel %vm3121, %v7061, %v6565
        %v7095 = vsel %vm3121, %v7063, %v6567
        %v7097 = vsel %vm3121, %v7065, %v6569
        %v7099 = vsel %vm3121, %v7067, %v6571
        %v7101 = vsel %vm3121, %v7069, %v6573
        %v7103 = vsel %vm3121, %v7071, %v6575
        %v7105 = vsel %vm3121, %v7073, %v6577
        %v7107 = vsel %vm3121, %v7075, %v6579
        %v7109 = vsel %vm3121, %v7077, %v6581
        %v7111 = vsel %vm3121, %v7079, %v6583
        %v7113 = vsel %vm3121, %v7081, %v6585
        %v7115 = vsel %vm3121, %v7083, %v6587
        %v7117 = vsel %vm3187, %v7085, %v6637
        %v7119 = vsel %vm3187, %v7087, %v6639
        %v7121 = vsel %vm3187, %v7089, %v6641
        %v7123 = vsel %vm3187, %v7091, %v6643
        %v7125 = vsel %vm3187, %v7093, %v6645
        %v7127 = vsel %vm3187, %v7095, %v6647
        %v7129 = vsel %vm3187, %v7097, %v6649
        %v7131 = vsel %vm3187, %v7099, %v6651
        %v7133 = vsel %vm3187, %v7101, %v6653
        %v7135 = vsel %vm3187, %v7103, %v6655
        %v7137 = vsel %vm3187, %v7105, %v6657
        %v7139 = vsel %vm3187, %v7107, %v6659
        %v7141 = vsel %vm3187, %v7109, %v6661
        %v7143 = vsel %vm3187, %v7111, %v6663
        %v7145 = vsel %vm3187, %v7113, %v6665
        %v7147 = vsel %vm3187, %v7115, %v6667
        %vm7148 = vcmask 326656
        %v7150 = vsel %vm7148, %v7117, %v6717
        %v7152 = vsel %vm7148, %v7119, %v6719
        %v7154 = vsel %vm7148, %v7121, %v6721
        %v7156 = vsel %vm7148, %v7123, %v6723
        %v7158 = vsel %vm7148, %v7125, %v6725
        %v7160 = vsel %vm7148, %v7127, %v6727
        %v7162 = vsel %vm7148, %v7129, %v6729
        %v7164 = vsel %vm7148, %v7131, %v6731
        %v7166 = vsel %vm7148, %v7133, %v6733
        %v7168 = vsel %vm7148, %v7135, %v6735
        %v7170 = vsel %vm7148, %v7137, %v6737
        %v7172 = vsel %vm7148, %v7139, %v6739
        %v7174 = vsel %vm7148, %v7141, %v6741
        %v7176 = vsel %vm7148, %v7143, %v6743
        %v7178 = vsel %vm7148, %v7145, %v6745
        %v7180 = vsel %vm7148, %v7147, %v6747
        %vm7181 = vcmask 392192
        %v7183 = vsel %vm7181, %v7150, %v6813
        %v7185 = vsel %vm7181, %v7152, %v6815
        %v7187 = vsel %vm7181, %v7154, %v6817
        %v7189 = vsel %vm7181, %v7156, %v6819
        %v7191 = vsel %vm7181, %v7158, %v6821
        %v7193 = vsel %vm7181, %v7160, %v6823
        %v7195 = vsel %vm7181, %v7162, %v6825
        %v7197 = vsel %vm7181, %v7164, %v6827
        %v7199 = vsel %vm7181, %v7166, %v6829
        %v7201 = vsel %vm7181, %v7168, %v6831
        %v7203 = vsel %vm7181, %v7170, %v6833
        %v7205 = vsel %vm7181, %v7172, %v6835
        %v7207 = vsel %vm7181, %v7174, %v6837
        %v7209 = vsel %vm7181, %v7176, %v6839
        %v7211 = vsel %vm7181, %v7178, %v6841
        %v7213 = vsel %vm7181, %v7180, %v6843
        %vm7214 = vcmask 457728
        %v7216 = vsel %vm7214, %v7183, %v6893
        %v7218 = vsel %vm7214, %v7185, %v6895
        %v7220 = vsel %vm7214, %v7187, %v6897
        %v7222 = vsel %vm7214, %v7189, %v6899
        %v7224 = vsel %vm7214, %v7191, %v6901
        %v7226 = vsel %vm7214, %v7193, %v6903
        %v7228 = vsel %vm7214, %v7195, %v6905
        %v7230 = vsel %vm7214, %v7197, %v6907
        %v7232 = vsel %vm7214, %v7199, %v6909
        %v7234 = vsel %vm7214, %v7201, %v6911
        %v7236 = vsel %vm7214, %v7203, %v6913
        %v7238 = vsel %vm7214, %v7205, %v6915
        %v7240 = vsel %vm7214, %v7207, %v6917
        %v7242 = vsel %vm7214, %v7209, %v6919
        %v7244 = vsel %vm7214, %v7211, %v6921
        %v7246 = vsel %vm7214, %v7213, %v6923
        %vm7247 = vcmask 523264
        %v7249 = vsel %vm7247, %v7216, %v6973
        %v7251 = vsel %vm7247, %v7218, %v6975
        %v7253 = vsel %vm7247, %v7220, %v6977
        %v7255 = vsel %vm7247, %v7222, %v6979
        %v7257 = vsel %vm7247, %v7224, %v6981
        %v7259 = vsel %vm7247, %v7226, %v6983
        %v7261 = vsel %vm7247, %v7228, %v6985
        %v7263 = vsel %vm7247, %v7230, %v6987
        %v7265 = vsel %vm7247, %v7232, %v6989
        %v7267 = vsel %vm7247, %v7234, %v6991
        %v7269 = vsel %vm7247, %v7236, %v6993
        %v7271 = vsel %vm7247, %v7238, %v6995
        %v7273 = vsel %vm7247, %v7240, %v6997
        %v7275 = vsel %vm7247, %v7242, %v6999
        %v7277 = vsel %vm7247, %v7244, %v7001
        %v7279 = vsel %vm7247, %v7246, %v7003
        %v7280 = vld [vmem:[%s2] sm:$0xf]
        %v7281 = vld [vmem:[%s2 + $0x4] sm:$0xf]
        %v7282 = vld [vmem:[%s2 + $0x8] sm:$0xf]
        %v7283 = vld [vmem:[%s2 + $0xc] sm:$0xf]
        %v7284 = vld [vmem:[%s2 + $0x10] sm:$0xf]
        %v7285 = vld [vmem:[%s2 + $0x14] sm:$0xf]
        %v7286 = vld [vmem:[%s2 + $0x18] sm:$0xf]
        %v7287 = vld [vmem:[%s2 + $0x1c] sm:$0xf]
        %v7288 = vld [vmem:[%s2 + $0x20] sm:$0xf]
        %v7298 = vunpack.c.l.b16 %v7280
        %v7299 = vunpack.c.l.b16 %v7281
        %v7300 = vunpack.c.l.b16 %v7282
        %v7301 = vunpack.c.l.b16 %v7283
        %v7302 = vunpack.c.l.b16 %v7284
        %v7303 = vunpack.c.l.b16 %v7285
        %v7304 = vunpack.c.l.b16 %v7286
        %v7305 = vunpack.c.l.b16 %v7287
        %v7306 = vunpack.c.l.b16 %v7288
        %v7307 = vpack.c.b16 %v7299, %v7298
        %v7308 = vpack.c.b16 %v7301, %v7300
        %v7309 = vpack.c.b16 %v7303, %v7302
        %v7310 = vpack.c.b16 %v7305, %v7304
        %v7311 = vpack.c.b16 %v7306, %v7306
        %vm7316 = vcmask 588800
        %v7317 = vsel %vm7316, %v7249, 0
        %v7319 = vsel %vm7316, %v7251, 0
        %v7321 = vsel %vm7316, %v7253, 0
        %v7323 = vsel %vm7316, %v7255, 0
        %v7325 = vsel %vm7316, %v7257, 0
        %v7327 = vsel %vm7316, %v7259, 0
        %v7329 = vsel %vm7316, %v7261, 0
        %v7331 = vsel %vm7316, %v7263, 0
        %v7333 = vsel %vm7316, %v7265, 0
        %v7335 = vsel %vm7316, %v7267, 0
        %v7337 = vsel %vm7316, %v7269, 0
        %v7339 = vsel %vm7316, %v7271, 0
        %v7341 = vsel %vm7316, %v7273, 0
        %v7343 = vsel %vm7316, %v7275, 0
        %v7345 = vsel %vm7316, %v7277, 0
        %v7347 = vsel %vm7316, %v7279, 0
        %vm7349 = vcmask 1043456
        %v7351 = vsel %vm7349, %v7311, 0
        %7353 = vmatprep.subr.bf16.mxu0 0
        %7354 = vmatpush1.bf16.msra.mxu0 0
        %7355 = vmatprep.subr.bf16.mxu0 0
        %7356 = vmatpush1.bf16.msra.mxu0 0
        %7357 = vmatprep.subr.bf16.mxu0 0
        %7358 = vmatpush1.bf16.msra.mxu0 0
        %7359 = vmatprep.subr.bf16.mxu0 0
        %7360 = vmatpush1.bf16.msra.mxu0 %v7351
        %7361 = vmatprep.subr.bf16.mxu0 0
        %7362 = vmatpush1.bf16.msra.mxu0 %v7310
        %7363 = vmatprep.subr.bf16.mxu0 0
        %7364 = vmatpush1.bf16.msra.mxu0 %v7309
        %7365 = vmatprep.subr.bf16.mxu0 0
        %7366 = vmatpush1.bf16.msra.mxu0 %v7308
        %7367 = vmatprep.subr.bf16.mxu0 0
        %7368 = vmatpush1.bf16.msra.mxu0 %v7307
        %7369 = vmatprep.subr.bf16.mxu0 0
        %7370 = vmatpush2.bf16.msra.mxu0 0
        %7371 = vmatprep.subr.bf16.mxu0 0
        %7372 = vmatpush2.bf16.msra.mxu0 0
        %7373 = vmatprep.subr.bf16.mxu0 0
        %7374 = vmatpush2.bf16.msra.mxu0 0
        %7375 = vmatprep.subr.bf16.mxu0 0
        %7376 = vmatpush2.bf16.msra.mxu0 0
        %7377 = vmatprep.subr.bf16.mxu0 0
        %7378 = vmatpush2.bf16.msra.mxu0 0
        %7379 = vmatprep.subr.bf16.mxu0 0
        %7380 = vmatpush2.bf16.msra.mxu0 0
        %7381 = vmatprep.subr.bf16.mxu0 0
        %7382 = vmatpush2.bf16.msra.mxu0 0
        %7383 = vmatprep.subr.bf16.mxu0 0
        %7384 = vmatpush2.bf16.msra.mxu0 0
        %7385 = vmatprep.mubr.bf16.mxu0 0
        %7386 = vmatmul.mubr.bf16.gmra.mxu0 %v7317
        %v7387 = vpop.f32.mrf.mxu0
        %v7388 = vadd.f32 0.0, %v7387
        %v7389 = vpop.f32.mrf.mxu0
        %v7390 = vpop.f32.mrf.mxu0
        %v7391 = vadd.f32 0.0, %v7390
        %v7392 = vpop.f32.mrf.mxu0
        %7393 = vmatprep.mubr.bf16.mxu0 0
        %7394 = vmatmul.mubr.bf16.gmra.mxu0 %v7319
        %v7395 = vpop.f32.mrf.mxu0
        %v7396 = vadd.f32 0.0, %v7395
        %v7397 = vpop.f32.mrf.mxu0
        %v7398 = vpop.f32.mrf.mxu0
        %v7399 = vadd.f32 0.0, %v7398
        %v7400 = vpop.f32.mrf.mxu0
        %7401 = vmatprep.mubr.bf16.mxu0 0
        %7402 = vmatmul.mubr.bf16.gmra.mxu0 %v7321
        %v7403 = vpop.f32.mrf.mxu0
        %v7404 = vadd.f32 0.0, %v7403
        %v7405 = vpop.f32.mrf.mxu0
        %v7406 = vpop.f32.mrf.mxu0
        %v7407 = vadd.f32 0.0, %v7406
        %v7408 = vpop.f32.mrf.mxu0
        %7409 = vmatprep.mubr.bf16.mxu0 0
        %7410 = vmatmul.mubr.bf16.gmra.mxu0 %v7323
        %v7411 = vpop.f32.mrf.mxu0
        %v7412 = vadd.f32 0.0, %v7411
        %v7413 = vpop.f32.mrf.mxu0
        %v7414 = vpop.f32.mrf.mxu0
        %v7415 = vadd.f32 0.0, %v7414
        %v7416 = vpop.f32.mrf.mxu0
        %7417 = vmatprep.mubr.bf16.mxu0 0
        %7418 = vmatmul.mubr.bf16.gmra.mxu0 %v7325
        %v7419 = vpop.f32.mrf.mxu0
        %v7420 = vadd.f32 0.0, %v7419
        %v7421 = vpop.f32.mrf.mxu0
        %v7422 = vpop.f32.mrf.mxu0
        %v7423 = vadd.f32 0.0, %v7422
        %v7424 = vpop.f32.mrf.mxu0
        %7425 = vmatprep.mubr.bf16.mxu0 0
        %7426 = vmatmul.mubr.bf16.gmra.mxu0 %v7327
        %v7427 = vpop.f32.mrf.mxu0
        %v7428 = vadd.f32 0.0, %v7427
        %v7429 = vpop.f32.mrf.mxu0
        %v7430 = vpop.f32.mrf.mxu0
        %v7431 = vadd.f32 0.0, %v7430
        %v7432 = vpop.f32.mrf.mxu0
        %7433 = vmatprep.mubr.bf16.mxu0 0
        %7434 = vmatmul.mubr.bf16.gmra.mxu0 %v7329
        %v7435 = vpop.f32.mrf.mxu0
        %v7436 = vadd.f32 0.0, %v7435
        %v7437 = vpop.f32.mrf.mxu0
        %v7438 = vpop.f32.mrf.mxu0
        %v7439 = vadd.f32 0.0, %v7438
        %v7440 = vpop.f32.mrf.mxu0
        %7441 = vmatprep.mubr.bf16.mxu0 0
        %7442 = vmatmul.mubr.bf16.gmra.mxu0 %v7331
        %v7443 = vpop.f32.mrf.mxu0
        %v7444 = vadd.f32 0.0, %v7443
        %v7445 = vpop.f32.mrf.mxu0
        %v7446 = vpop.f32.mrf.mxu0
        %v7447 = vadd.f32 0.0, %v7446
        %v7448 = vpop.f32.mrf.mxu0
        %7449 = vmatprep.mubr.bf16.mxu0 0
        %7450 = vmatmul.mubr.bf16.gmra.mxu0 %v7333
        %v7451 = vpop.f32.mrf.mxu0
        %v7452 = vadd.f32 0.0, %v7451
        %v7453 = vpop.f32.mrf.mxu0
        %v7454 = vpop.f32.mrf.mxu0
        %v7455 = vadd.f32 0.0, %v7454
        %v7456 = vpop.f32.mrf.mxu0
        %7457 = vmatprep.mubr.bf16.mxu0 0
        %7458 = vmatmul.mubr.bf16.gmra.mxu0 %v7335
        %v7459 = vpop.f32.mrf.mxu0
        %v7460 = vadd.f32 0.0, %v7459
        %v7461 = vpop.f32.mrf.mxu0
        %v7462 = vpop.f32.mrf.mxu0
        %v7463 = vadd.f32 0.0, %v7462
        %v7464 = vpop.f32.mrf.mxu0
        %7465 = vmatprep.mubr.bf16.mxu0 0
        %7466 = vmatmul.mubr.bf16.gmra.mxu0 %v7337
        %v7467 = vpop.f32.mrf.mxu0
        %v7468 = vadd.f32 0.0, %v7467
        %v7469 = vpop.f32.mrf.mxu0
        %v7470 = vpop.f32.mrf.mxu0
        %v7471 = vadd.f32 0.0, %v7470
        %v7472 = vpop.f32.mrf.mxu0
        %7473 = vmatprep.mubr.bf16.mxu0 0
        %7474 = vmatmul.mubr.bf16.gmra.mxu0 %v7339
        %v7475 = vpop.f32.mrf.mxu0
        %v7476 = vadd.f32 0.0, %v7475
        %v7477 = vpop.f32.mrf.mxu0
        %v7478 = vpop.f32.mrf.mxu0
        %v7479 = vadd.f32 0.0, %v7478
        %v7480 = vpop.f32.mrf.mxu0
        %7481 = vmatprep.mubr.bf16.mxu0 0
        %7482 = vmatmul.mubr.bf16.gmra.mxu0 %v7341
        %v7483 = vpop.f32.mrf.mxu0
        %v7484 = vadd.f32 0.0, %v7483
        %v7485 = vpop.f32.mrf.mxu0
        %v7486 = vpop.f32.mrf.mxu0
        %v7487 = vadd.f32 0.0, %v7486
        %v7488 = vpop.f32.mrf.mxu0
        %7489 = vmatprep.mubr.bf16.mxu0 0
        %7490 = vmatmul.mubr.bf16.gmra.mxu0 %v7343
        %v7491 = vpop.f32.mrf.mxu0
        %v7492 = vadd.f32 0.0, %v7491
        %v7493 = vpop.f32.mrf.mxu0
        %v7494 = vpop.f32.mrf.mxu0
        %v7495 = vadd.f32 0.0, %v7494
        %v7496 = vpop.f32.mrf.mxu0
        %7497 = vmatprep.mubr.bf16.mxu0 0
        %7498 = vmatmul.mubr.bf16.gmra.mxu0 %v7345
        %v7499 = vpop.f32.mrf.mxu0
        %v7500 = vadd.f32 0.0, %v7499
        %v7501 = vpop.f32.mrf.mxu0
        %v7502 = vpop.f32.mrf.mxu0
        %v7503 = vadd.f32 0.0, %v7502
        %v7504 = vpop.f32.mrf.mxu0
        %7505 = vmatprep.mubr.bf16.mxu0 0
        %7506 = vmatmul.mubr.bf16.gmra.mxu0 %v7347
        %v7507 = vpop.f32.mrf.mxu0
        %v7508 = vadd.f32 0.0, %v7507
        %v7509 = vpop.f32.mrf.mxu0
        %v7510 = vpop.f32.mrf.mxu0
        %v7511 = vadd.f32 0.0, %v7510
        %v7512 = vpop.f32.mrf.mxu0
        %7513 = vdwg.mxu0
        %v7514 = vunpack.c.l.b16 %v4071
        %v7515 = vunpack.c.l.b16 %v4081
        %v7516 = vunpack.c.l.b16 %v4095
        %v7517 = vunpack.c.l.b16 %v4105
        %v7518 = vunpack.c.l.b16 %v4119
        %v7519 = vunpack.c.l.b16 %v4129
        %v7520 = vunpack.c.l.b16 %v4143
        %v7521 = vunpack.c.l.b16 %v4153
        %v7522 = vunpack.c.l.b16 %v4167
        %v7523 = vunpack.c.l.b16 %v4177
        %v7524 = vunpack.c.l.b16 %v4191
        %v7525 = vunpack.c.l.b16 %v4201
        %v7526 = vunpack.c.l.b16 %v4215
        %v7527 = vunpack.c.l.b16 %v4225
        %v7528 = vunpack.c.l.b16 %v4239
        %v7529 = vunpack.c.l.b16 %v4249
        %v7530 = vunpack.c.l.b16 %v4263
        %v7531 = vunpack.c.l.b16 %v4273
        %v7532 = vunpack.c.l.b16 %v4287
        %v7533 = vunpack.c.l.b16 %v4297
        %v7534 = vunpack.c.l.b16 %v4311
        %v7535 = vunpack.c.l.b16 %v4321
        %v7536 = vunpack.c.l.b16 %v4335
        %v7537 = vunpack.c.l.b16 %v4345
        %v7538 = vunpack.c.l.b16 %v4359
        %v7539 = vunpack.c.l.b16 %v4369
        %v7540 = vunpack.c.l.b16 %v4383
        %v7541 = vunpack.c.l.b16 %v4393
        %v7542 = vunpack.c.l.b16 %v4407
        %v7543 = vunpack.c.l.b16 %v4417
        %v7544 = vunpack.c.l.b16 %v4431
        %v7545 = vunpack.c.l.b16 %v4441
        %v7546 = vpack.c.b16 %v7515, %v7514
        %v7547 = vpack.c.b16 %v7517, %v7516
        %v7548 = vpack.c.b16 %v7519, %v7518
        %v7549 = vpack.c.b16 %v7521, %v7520
        %v7550 = vpack.c.b16 %v7523, %v7522
        %v7551 = vpack.c.b16 %v7525, %v7524
        %v7552 = vpack.c.b16 %v7527, %v7526
        %v7553 = vpack.c.b16 %v7529, %v7528
        %v7554 = vpack.c.b16 %v7531, %v7530
        %v7555 = vpack.c.b16 %v7533, %v7532
        %v7556 = vpack.c.b16 %v7535, %v7534
        %v7557 = vpack.c.b16 %v7537, %v7536
        %v7558 = vpack.c.b16 %v7539, %v7538
        %v7559 = vpack.c.b16 %v7541, %v7540
        %v7560 = vpack.c.b16 %v7543, %v7542
        %v7561 = vpack.c.b16 %v7545, %v7544
        %v7563 = vsel %vm2940, %v7546, 0
        %v7566 = vsel %vm2940, %v7547, 0
        %v7569 = vsel %vm2940, %v7548, 0
        %v7572 = vsel %vm2940, %v7549, 0
        %v7575 = vsel %vm2940, %v7550, 0
        %v7578 = vsel %vm2940, %v7551, 0
        %v7581 = vsel %vm2940, %v7552, 0
        %v7584 = vsel %vm2940, %v7553, 0
        %v7587 = vsel %vm2940, %v7554, 0
        %v7590 = vsel %vm2940, %v7555, 0
        %v7593 = vsel %vm2940, %v7556, 0
        %v7596 = vsel %vm2940, %v7557, 0
        %v7599 = vsel %vm2940, %v7558, 0
        %v7602 = vsel %vm2940, %v7559, 0
        %v7605 = vsel %vm2940, %v7560, 0
        %v7608 = vsel %vm2940, %v7561, 0
        %v7611 = vsel %vm3280, %v4442, 0
        %7613 = vmatprep.subr.bf16.mxu0 0
        %7614 = vmatpush1.bf16.msra.mxu0 0
        %7615 = vmatprep.subr.bf16.mxu0 0
        %7616 = vmatpush1.bf16.msra.mxu0 0
        %7617 = vmatprep.subr.bf16.mxu0 0
        %7618 = vmatpush1.bf16.msra.mxu0 0
        %7619 = vmatprep.subr.bf16.mxu0 0
        %7620 = vmatpush1.bf16.msra.mxu0 0
        %7621 = vmatprep.subr.bf16.mxu0 0
        %7622 = vmatpush1.bf16.msra.mxu0 0
        %7623 = vmatprep.subr.bf16.mxu0 0
        %7624 = vmatpush1.bf16.msra.mxu0 0
        %7625 = vmatprep.subr.bf16.mxu0 0
        %7626 = vmatpush1.bf16.msra.mxu0 0
        %7627 = vmatprep.subr.bf16.mxu0 0
        %7628 = vmatpush1.bf16.msra.mxu0 %v7611
        %7629 = vmatprep.subr.bf16.mxu0 0
        %7630 = vmatpush2.bf16.msra.mxu0 0
        %7631 = vmatprep.subr.bf16.mxu0 0
        %7632 = vmatpush2.bf16.msra.mxu0 0
        %7633 = vmatprep.subr.bf16.mxu0 0
        %7634 = vmatpush2.bf16.msra.mxu0 0
        %7635 = vmatprep.subr.bf16.mxu0 0
        %7636 = vmatpush2.bf16.msra.mxu0 0
        %7637 = vmatprep.subr.bf16.mxu0 0
        %7638 = vmatpush2.bf16.msra.mxu0 0
        %7639 = vmatprep.subr.bf16.mxu0 0
        %7640 = vmatpush2.bf16.msra.mxu0 0
        %7641 = vmatprep.subr.bf16.mxu0 0
        %7642 = vmatpush2.bf16.msra.mxu0 0
        %7643 = vmatprep.subr.bf16.mxu0 0
        %7644 = vmatpush2.bf16.msra.mxu0 0
        %7645 = vmatprep.mubr.bf16.mxu0 0
        %7646 = vmatmul.mubr.bf16.gmra.mxu0 %v7563
        %v7647 = vpop.f32.mrf.mxu0
        %v7648 = vadd.f32 %v7388, %v7647
        %v7649 = vpop.f32.mrf.mxu0
        %v7650 = vpop.f32.mrf.mxu0
        %v7651 = vadd.f32 %v7391, %v7650
        %v7652 = vpop.f32.mrf.mxu0
        %7653 = vmatprep.mubr.bf16.mxu0 0
        %7654 = vmatmul.mubr.bf16.gmra.mxu0 %v7566
        %v7655 = vpop.f32.mrf.mxu0
        %v7656 = vadd.f32 %v7396, %v7655
        %v7657 = vpop.f32.mrf.mxu0
        %v7658 = vpop.f32.mrf.mxu0
        %v7659 = vadd.f32 %v7399, %v7658
        %v7660 = vpop.f32.mrf.mxu0
        %7661 = vmatprep.mubr.bf16.mxu0 0
        %7662 = vmatmul.mubr.bf16.gmra.mxu0 %v7569
        %v7663 = vpop.f32.mrf.mxu0
        %v7664 = vadd.f32 %v7404, %v7663
        %v7665 = vpop.f32.mrf.mxu0
        %v7666 = vpop.f32.mrf.mxu0
        %v7667 = vadd.f32 %v7407, %v7666
        %v7668 = vpop.f32.mrf.mxu0
        %7669 = vmatprep.mubr.bf16.mxu0 0
        %7670 = vmatmul.mubr.bf16.gmra.mxu0 %v7572
        %v7671 = vpop.f32.mrf.mxu0
        %v7672 = vadd.f32 %v7412, %v7671
        %v7673 = vpop.f32.mrf.mxu0
        %v7674 = vpop.f32.mrf.mxu0
        %v7675 = vadd.f32 %v7415, %v7674
        %v7676 = vpop.f32.mrf.mxu0
        %7677 = vmatprep.mubr.bf16.mxu0 0
        %7678 = vmatmul.mubr.bf16.gmra.mxu0 %v7575
        %v7679 = vpop.f32.mrf.mxu0
        %v7680 = vadd.f32 %v7420, %v7679
        %v7681 = vpop.f32.mrf.mxu0
        %v7682 = vpop.f32.mrf.mxu0
        %v7683 = vadd.f32 %v7423, %v7682
        %v7684 = vpop.f32.mrf.mxu0
        %7685 = vmatprep.mubr.bf16.mxu0 0
        %7686 = vmatmul.mubr.bf16.gmra.mxu0 %v7578
        %v7687 = vpop.f32.mrf.mxu0
        %v7688 = vadd.f32 %v7428, %v7687
        %v7689 = vpop.f32.mrf.mxu0
        %v7690 = vpop.f32.mrf.mxu0
        %v7691 = vadd.f32 %v7431, %v7690
        %v7692 = vpop.f32.mrf.mxu0
        %7693 = vmatprep.mubr.bf16.mxu0 0
        %7694 = vmatmul.mubr.bf16.gmra.mxu0 %v7581
        %v7695 = vpop.f32.mrf.mxu0
        %v7696 = vadd.f32 %v7436, %v7695
        %v7697 = vpop.f32.mrf.mxu0
        %v7698 = vpop.f32.mrf.mxu0
        %v7699 = vadd.f32 %v7439, %v7698
        %v7700 = vpop.f32.mrf.mxu0
        %7701 = vmatprep.mubr.bf16.mxu0 0
        %7702 = vmatmul.mubr.bf16.gmra.mxu0 %v7584
        %v7703 = vpop.f32.mrf.mxu0
        %v7704 = vadd.f32 %v7444, %v7703
        %v7705 = vpop.f32.mrf.mxu0
        %v7706 = vpop.f32.mrf.mxu0
        %v7707 = vadd.f32 %v7447, %v7706
        %v7708 = vpop.f32.mrf.mxu0
        %7709 = vmatprep.mubr.bf16.mxu0 0
        %7710 = vmatmul.mubr.bf16.gmra.mxu0 %v7587
        %v7711 = vpop.f32.mrf.mxu0
        %v7712 = vadd.f32 %v7452, %v7711
        %v7713 = vpop.f32.mrf.mxu0
        %v7714 = vpop.f32.mrf.mxu0
        %v7715 = vadd.f32 %v7455, %v7714
        %v7716 = vpop.f32.mrf.mxu0
        %7717 = vmatprep.mubr.bf16.mxu0 0
        %7718 = vmatmul.mubr.bf16.gmra.mxu0 %v7590
        %v7719 = vpop.f32.mrf.mxu0
        %v7720 = vadd.f32 %v7460, %v7719
        %v7721 = vpop.f32.mrf.mxu0
        %v7722 = vpop.f32.mrf.mxu0
        %v7723 = vadd.f32 %v7463, %v7722
        %v7724 = vpop.f32.mrf.mxu0
        %7725 = vmatprep.mubr.bf16.mxu0 0
        %7726 = vmatmul.mubr.bf16.gmra.mxu0 %v7593
        %v7727 = vpop.f32.mrf.mxu0
        %v7728 = vadd.f32 %v7468, %v7727
        %v7729 = vpop.f32.mrf.mxu0
        %v7730 = vpop.f32.mrf.mxu0
        %v7731 = vadd.f32 %v7471, %v7730
        %v7732 = vpop.f32.mrf.mxu0
        %7733 = vmatprep.mubr.bf16.mxu0 0
        %7734 = vmatmul.mubr.bf16.gmra.mxu0 %v7596
        %v7735 = vpop.f32.mrf.mxu0
        %v7736 = vadd.f32 %v7476, %v7735
        %v7737 = vpop.f32.mrf.mxu0
        %v7738 = vpop.f32.mrf.mxu0
        %v7739 = vadd.f32 %v7479, %v7738
        %v7740 = vpop.f32.mrf.mxu0
        %7741 = vmatprep.mubr.bf16.mxu0 0
        %7742 = vmatmul.mubr.bf16.gmra.mxu0 %v7599
        %v7743 = vpop.f32.mrf.mxu0
        %v7744 = vadd.f32 %v7484, %v7743
        %v7745 = vpop.f32.mrf.mxu0
        %v7746 = vpop.f32.mrf.mxu0
        %v7747 = vadd.f32 %v7487, %v7746
        %v7748 = vpop.f32.mrf.mxu0
        %7749 = vmatprep.mubr.bf16.mxu0 0
        %7750 = vmatmul.mubr.bf16.gmra.mxu0 %v7602
        %v7751 = vpop.f32.mrf.mxu0
        %v7752 = vadd.f32 %v7492, %v7751
        %v7753 = vpop.f32.mrf.mxu0
        %v7754 = vpop.f32.mrf.mxu0
        %v7755 = vadd.f32 %v7495, %v7754
        %v7756 = vpop.f32.mrf.mxu0
        %7757 = vmatprep.mubr.bf16.mxu0 0
        %7758 = vmatmul.mubr.bf16.gmra.mxu0 %v7605
        %v7759 = vpop.f32.mrf.mxu0
        %v7760 = vadd.f32 %v7500, %v7759
        %v7761 = vpop.f32.mrf.mxu0
        %v7762 = vpop.f32.mrf.mxu0
        %v7763 = vadd.f32 %v7503, %v7762
        %v7764 = vpop.f32.mrf.mxu0
        %7765 = vmatprep.mubr.bf16.mxu0 0
        %7766 = vmatmul.mubr.bf16.gmra.mxu0 %v7608
        %v7767 = vpop.f32.mrf.mxu0
        %v7768 = vadd.f32 %v7508, %v7767
        %v7769 = vpop.f32.mrf.mxu0
        %v7770 = vpop.f32.mrf.mxu0
        %v7771 = vadd.f32 %v7511, %v7770
        %v7772 = vpop.f32.mrf.mxu0
        %7773 = vdwg.mxu0
        %v7774 = vadd.f32 %v7648, %v7656
        %v7775 = vadd.f32 %v7651, %v7659
        %v7776 = vadd.f32 %v7664, %v7672
        %v7777 = vadd.f32 %v7667, %v7675
        %v7778 = vadd.f32 %v7680, %v7688
        %v7779 = vadd.f32 %v7683, %v7691
        %v7780 = vadd.f32 %v7696, %v7704
        %v7781 = vadd.f32 %v7699, %v7707
        %v7782 = vadd.f32 %v7712, %v7720
        %v7783 = vadd.f32 %v7715, %v7723
        %v7784 = vadd.f32 %v7728, %v7736
        %v7785 = vadd.f32 %v7731, %v7739
        %v7786 = vadd.f32 %v7744, %v7752
        %v7787 = vadd.f32 %v7747, %v7755
        %v7788 = vadd.f32 %v7760, %v7768
        %v7789 = vadd.f32 %v7763, %v7771
        %7790 = vst.msk [vmem:[#allocation3] sm:$0xff] %vm2989, %v7774
        %7791 = vst.msk [vmem:[#allocation3 + $0x8] sm:$0xff] %vm2989, %v7775
        %7792 = vst.msk [vmem:[#allocation3 + $0x10] sm:$0xff] %vm2989, %v7776
        %7793 = vst.msk [vmem:[#allocation3 + $0x18] sm:$0xff] %vm2989, %v7777
        %7794 = vst.msk [vmem:[#allocation3 + $0x20] sm:$0xff] %vm2989, %v7778
        %7795 = vst.msk [vmem:[#allocation3 + $0x28] sm:$0xff] %vm2989, %v7779
        %7796 = vst.msk [vmem:[#allocation3 + $0x30] sm:$0xff] %vm2989, %v7780
        %7797 = vst.msk [vmem:[#allocation3 + $0x38] sm:$0xff] %vm2989, %v7781
        %7798 = vst.msk [vmem:[#allocation3 + $0x40] sm:$0xff] %vm2989, %v7782
        %7799 = vst.msk [vmem:[#allocation3 + $0x48] sm:$0xff] %vm2989, %v7783
        %7800 = vst.msk [vmem:[#allocation3 + $0x50] sm:$0xff] %vm2989, %v7784
        %7801 = vst.msk [vmem:[#allocation3 + $0x58] sm:$0xff] %vm2989, %v7785
        %7802 = vst.msk [vmem:[#allocation3 + $0x60] sm:$0xff] %vm2989, %v7786
        %7803 = vst.msk [vmem:[#allocation3 + $0x68] sm:$0xff] %vm2989, %v7787
        %7804 = vst.msk [vmem:[#allocation3 + $0x70] sm:$0xff] %vm2989, %v7788
        %7805 = vst.msk [vmem:[#allocation3 + $0x78] sm:$0xff] %vm2989, %v7789
        %v7806 = vld [vmem:[#allocation3] ss:$2 sm:$0xff]
        %s7807 = scalar_lea.vmem [#allocation3], 16
        %v7808 = vld [vmem:[%s7807] ss:$2 sm:$0xff]
        %s7809 = scalar_lea.vmem [#allocation3], 32
        %v7810 = vld [vmem:[%s7809] ss:$2 sm:$0xff]
        %s7811 = scalar_lea.vmem [#allocation3], 48
        %v7812 = vld [vmem:[%s7811] ss:$2 sm:$0xff]
        %s7813 = scalar_lea.vmem [#allocation3], 64
        %v7814 = vld [vmem:[%s7813] ss:$2 sm:$0xff]
        %s7815 = scalar_lea.vmem [#allocation3], 80
        %v7816 = vld [vmem:[%s7815] ss:$2 sm:$0xff]
        %s7817 = scalar_lea.vmem [#allocation3], 96
        %v7818 = vld [vmem:[%s7817] ss:$2 sm:$0xff]
        %s7819 = scalar_lea.vmem [#allocation3], 112
        %v7820 = vld [vmem:[%s7819] ss:$2 sm:$0xff]
        %s7821 = scalar_lea.vmem [#allocation3], 1
        %v7822 = vld [vmem:[%s7821] ss:$2 sm:$0xff]
        %s7823 = scalar_lea.vmem [#allocation3], 17
        %v7824 = vld [vmem:[%s7823] ss:$2 sm:$0xff]
        %s7825 = scalar_lea.vmem [#allocation3], 33
        %v7826 = vld [vmem:[%s7825] ss:$2 sm:$0xff]
        %s7827 = scalar_lea.vmem [#allocation3], 49
        %v7828 = vld [vmem:[%s7827] ss:$2 sm:$0xff]
        %s7829 = scalar_lea.vmem [#allocation3], 65
        %v7830 = vld [vmem:[%s7829] ss:$2 sm:$0xff]
        %s7831 = scalar_lea.vmem [#allocation3], 81
        %v7832 = vld [vmem:[%s7831] ss:$2 sm:$0xff]
        %s7833 = scalar_lea.vmem [#allocation3], 97
        %v7834 = vld [vmem:[%s7833] ss:$2 sm:$0xff]
        %s7835 = scalar_lea.vmem [#allocation3], 113
        %v7836 = vld [vmem:[%s7835] ss:$2 sm:$0xff]
        %v7837 = vadd.f32 %v7806, %v7822
        %v7838 = vadd.f32 %v7808, %v7824
        %v7839 = vadd.f32 %v7810, %v7826
        %v7840 = vadd.f32 %v7812, %v7828
        %v7841 = vadd.f32 %v7814, %v7830
        %v7842 = vadd.f32 %v7816, %v7832
        %v7843 = vadd.f32 %v7818, %v7834
        %v7844 = vadd.f32 %v7820, %v7836
        %v7845 = vmul.f32 %v7837, 0.25
        %v7846 = vmul.f32 %v7838, 0.25
        %v7847 = vmul.f32 %v7839, 0.25
        %v7848 = vmul.f32 %v7840, 0.25
        %v7849 = vmul.f32 %v7841, 0.25
        %v7850 = vmul.f32 %v7842, 0.25
        %v7851 = vmul.f32 %v7843, 0.25
        %v7852 = vmul.f32 %v7844, 0.25
        %v7853 = vld [vmem:[%s5] sm:$0x1]
        %v7855 = vlaneseq
        %v7856 = vshrl.u32 %v7855, 7
        %v7857 = vsub.s32 0, %v7856
        %v7858 = vrot.slane %v7853, %v7857
        %v7860 = vadd.f32 %v7845, %v7858
        %v7861 = vadd.f32 %v7846, %v7858
        %v7862 = vadd.f32 %v7847, %v7858
        %v7863 = vadd.f32 %v7848, %v7858
        %v7864 = vadd.f32 %v7849, %v7858
        %v7865 = vadd.f32 %v7850, %v7858
        %v7866 = vadd.f32 %v7851, %v7858
        %v7867 = vadd.f32 %v7852, %v7858
        %7868 = vst.msk [vmem:[%s244] sm:$0xff] %vm2989, %v7860
        %7869 = vst.msk [vmem:[%s244 + $0x8] sm:$0xff] %vm2989, %v7861
        %7870 = vst.msk [vmem:[%s244 + $0x10] sm:$0xff] %vm2989, %v7862
        %7871 = vst.msk [vmem:[%s244 + $0x18] sm:$0xff] %vm2989, %v7863
        %7872 = vst.msk [vmem:[%s244 + $0x20] sm:$0xff] %vm2989, %v7864
        %7873 = vst.msk [vmem:[%s244 + $0x28] sm:$0xff] %vm2989, %v7865
        %7874 = vst.msk [vmem:[%s244 + $0x30] sm:$0xff] %vm2989, %v7866
        %7875 = vst.msk [vmem:[%s244 + $0x38] sm:$0xff] %vm2989, %v7867
        %s7876 = sand.u32 %s159, 1
        %s7877 = scalar_lea.sflag [#allocation5], %s7876
        %s7878 = sand.u32 %s159, 1
        %s7879 = smul.addr %s7878, 64
        %s7880 = scalar_lea.vmem [#allocation4], %s7879
        // Predicated region
        $region45: #{tpu_custom_call.1} parent=43 // pred_check
          %p7881 = pneg %p169
        $region46: #{tpu_custom_call.1} parent=43 // pred_check_branch
          %7883 = sbr.rel (%p7881) target = $region48
        $region47: #{tpu_custom_call.1} parent=43 // pred_region
          %s7885 = ssub.s32 1024, 1024
          %7886 = vsyncadd %s7877, %s7885
          %s7887 = smul.addr %s20, 8
          %s7888 = smul.addr %s7887, 128
          %s7889 = scalar_lea.hbm %s6, %s7888
          %s7890 = sshll.u32 %s7880, 4
          %s7891 = int_to_ptr.vmem [resolvable:$true] %s7890
          %7896 = dma.vmem_to_hbm [thread:$0]  %s7891, 1024, %s7889, %s7877, 128, 128, 8
        $region48: #{tpu_custom_call.1} parent=43 // pred_fallthru
          _
      $region44: #{tpu_custom_call.1} parent=5 // pred_fallthru
        _
      %p7897 = scmp.le.s32.totalorder 2, %s15
      // Predicated region
      $region49: #{tpu_custom_call.1} parent=5 // pred_check
        %p7898 = pneg %p7897
      $region50: #{tpu_custom_call.1} parent=5 // pred_check_branch
        %7900 = sbr.rel (%p7898) target = $region52
      $region51: #{tpu_custom_call.1} parent=5 // pred_region
        %s7901 = ssub.s32 %s15, 2
        // Predicated region
        $region53: #{tpu_custom_call.1} parent=51 // pred_check
          %p7902 = pneg %p175
        $region54: #{tpu_custom_call.1} parent=51 // pred_check_branch
          %7904 = sbr.rel (%p7902) target = $region56
        $region55: #{tpu_custom_call.1} parent=51 // pred_region
          %s7905 = sand.u32 %s160, 1
          %s7906 = scalar_lea.sflag [#allocation5], %s7905
          %s7907 = sand.u32 %s160, 1
          %s7908 = smul.addr %s7907, 64
          %s7909 = scalar_lea.vmem [#allocation4], %s7908
          %7910 = dma.done %s7906, 1024
        $region56: #{tpu_custom_call.1} parent=51 // pred_fallthru
          _
      $region52: #{tpu_custom_call.1} parent=5 // pred_fallthru
        _
    $region6: #{tpu_custom_call.1} parent=1 // loop_footer
      %s19 = sadd.s32 1, %s15
    $region7: #{tpu_custom_call.1} parent=1 // loop_footer_branch
      %14 = sbr.rel target = $region3
    $region8: #{tpu_custom_call.1} parent=1 // loop_exit
      _
    %7911 = vsyncpa [#allocation5], 1
    %s7912 = scalar_lea.sflag [#allocation5], 1
    %7913 = vsyncpa %s7912, 1

</llo_original>
